<compile_context>
chip_gen: v6e
topology: v6e:2x2x1
jax: 0.10.0
libtpu: 0.0.40
codegen_flags: <defaults>
</compile_context>

<pallas_src>
import functools

import jax
import jax.numpy as jnp
from jax import lax
from jax.experimental import pallas as pl
from jax.experimental.pallas import tpu as pltpu


# ---------------------------------------------------------------------------
# Host-side helpers: tiny constant matrices folding upsample + pad + conv taps.
# ---------------------------------------------------------------------------
def _bilinear_x2_matrix(size_in: int) -> jax.Array:
    """(2*size_in, size_in) matrix for bilinear x2 upsample, align_corners=False."""
    size_out = 2 * size_in
    src = (jnp.arange(size_out, dtype=jnp.float32) + 0.5) / 2.0 - 0.5
    i0 = jnp.floor(src)
    frac = src - i0
    lo = jnp.clip(i0, 0, size_in - 1).astype(jnp.int32)
    hi = jnp.clip(i0 + 1, 0, size_in - 1).astype(jnp.int32)
    cols = jnp.arange(size_in, dtype=jnp.int32)
    m_lo = (cols[None, :] == lo[:, None]).astype(jnp.float32) * (1.0 - frac)[:, None]
    m_hi = (cols[None, :] == hi[:, None]).astype(jnp.float32) * frac[:, None]
    return m_lo + m_hi


def _tap_matrices(u: jax.Array, k: int, pd: int):
    """Fold zero-padding + conv-tap shift into the upsample matrix.

    u: (So, S).  Returns k matrices of shape (Out, S), Out = So + 2*pd - k + 1,
    where matrix t has row `o` equal to u_padded[o + t].
    """
    so, s = u.shape
    out = so + 2 * pd - k + 1
    upad = jnp.pad(u, ((pd, pd), (0, 0)))
    return [upad[t:t + out, :] for t in range(k)]


# ---------------------------------------------------------------------------
# Pallas kernel: single grid step processes the whole batch.
# ---------------------------------------------------------------------------
def _fused_kernel(x_ref, bbig_ref, abd_ref, bd_ref, g_ref, b_ref, o_ref, *,
                  N, H, K, Cout, Ho, Wo, eps, slope):
    """
    x_ref:    (N*H, Cin*W)          VMEM  input, rows = n*H + h, cols = ci*W + w
    bbig_ref: (Cin*W, K*Cout*Wo)    VMEM  weight-folded W-upsample/pad/kw taps
    abd_ref:  (N*Ho, N*K*H)         VMEM  block-diag H-upsample/pad/kh taps
    bd_ref:   (Cout*Wo, Cout*Wo)    VMEM  block-diag ones (per-channel lane sums)
    g_ref:    (1, Cout*Wo)          VMEM  gamma broadcast per channel
    b_ref:    (1, Cout*Wo)          VMEM  beta broadcast per channel
    o_ref:    (N, Ho, Cout*Wo)      VMEM  lane-dense output slab
    """
    hp = lax.Precision.HIGHEST
    CW = Cout * Wo

    # (1) W-upsample + pad + kw shift + full (ci, kw) contraction: one MXU matmul,
    #     lane width 768.  m_all[n*H+h, (kh*Cout+co)*Wo+ow].
    m_all = jnp.dot(x_ref[...], bbig_ref[...], precision=hp,
                    preferred_element_type=jnp.float32)        # (N*H, K*CW)

    # (2) Move kh into the contraction (row) dim.  All slices are whole-vreg
    #     aligned (row offsets multiples of 8, lane offsets multiples of 256).
    m2 = jnp.concatenate(
        [m_all[n * H:(n + 1) * H, kh * CW:(kh + 1) * CW]
         for n in range(N) for kh in range(K)], axis=0)        # (N*K*H, CW)

    # (3) H-upsample + pad + kh shift + sum over kh, all samples & channels in
    #     one MXU push.  slab[n*Ho+oh, co*Wo+ow] = conv output.
    slab = jnp.dot(abd_ref[...], m2, precision=hp,
                   preferred_element_type=jnp.float32)         # (N*Ho, CW)

    # (4) InstanceNorm stats: sublane reduce per sample, then one block-diag-ones
    #     matmul returns per-channel sums already broadcast across each channel's
    #     32-lane block (everything stays lane-dense).
    stat_rows = []
    for n in range(N):
        y = slab[n * Ho:(n + 1) * Ho, :]
        stat_rows.append(jnp.sum(y, axis=0, keepdims=True))          # sum
        stat_rows.append(jnp.sum(y * y, axis=0, keepdims=True))      # sum of squares
    stats = jnp.concatenate(stat_rows, axis=0)                 # (2N, CW)
    tot = jnp.dot(stats, bd_ref[...], precision=hp,
                  preferred_element_type=jnp.float32)          # (2N, CW)

    inv_n = 1.0 / float(Ho * Wo)
    g_row = g_ref[...]                                         # (1, CW)
    b_row = b_ref[...]                                         # (1, CW)

    # (5) Normalize + affine + LeakyReLU, lane-dense store of full 256-lane rows.
    for n in range(N):
        y = slab[n * Ho:(n + 1) * Ho, :]
        mean = tot[2 * n:2 * n + 1, :] * inv_n                 # (1, CW)
        ex2 = tot[2 * n + 1:2 * n + 2, :] * inv_n
        var = ex2 - mean * mean
        scale = g_row * lax.rsqrt(var + eps)
        shift = b_row - mean * scale
        z = y * scale + shift
        z = jnp.where(z > 0, z, slope * z)
        o_ref[n] = z


# ---------------------------------------------------------------------------
# Wrapper (NCHW in / NCHW out, like the PyTorch module).
# ---------------------------------------------------------------------------
def generator_upscale_block(x_nchw, weight_oihw, gamma, beta, *, padding):
    n, cin, h, w = x_nchw.shape
    cout, cin_w, k, k2 = weight_oihw.shape
    assert cin == cin_w and k == k2
    ho = 2 * h + 2 * padding - k + 1
    wo = 2 * w + 2 * padding - k + 1
    cw = cout * wo

    x_f = x_nchw.astype(jnp.float32)
    # (N, Cin, H, W) -> (N*H, Cin*W): tiny host/XLA-side transpose (8 KiB).
    x_hw = jnp.transpose(x_f, (0, 2, 1, 3)).reshape(n * h, cin * w)

    uh = _bilinear_x2_matrix(h)                                # (2h, h)
    uw = _bilinear_x2_matrix(w)                                # (2w, w)
    a_taps = _tap_matrices(uh, k, padding)                     # K x (ho, h)
    bt_taps = [m.T for m in _tap_matrices(uw, k, padding)]     # K x (w, wo)

    # Weight-folded W-side matrix: B_big[ci*W + w, (kh*Cout + co)*Wo + ow]
    #   = sum_kw weight[co, ci, kh, kw] * BT_kw[w, ow]
    bt_stack = jnp.stack(bt_taps, axis=0)                      # (K, w, wo)
    w_f = weight_oihw.astype(jnp.float32)
    b_big = jnp.einsum('oiyx,xwv->iwyov', w_f, bt_stack).reshape(cin * w, k * cw)

    # Block-diagonal (over batch) H-side matrix: (N*ho, N*K*h)
    a_cat = jnp.concatenate(a_taps, axis=1)                    # (ho, K*h)
    a_bd = jnp.kron(jnp.eye(n, dtype=jnp.float32), a_cat)

    # Block-diag ones: per-channel lane-block summation + broadcast.
    bd = jnp.kron(jnp.eye(cout, dtype=jnp.float32),
                  jnp.ones((wo, wo), jnp.float32))             # (cw, cw)

    gamma_row = jnp.repeat(gamma.astype(jnp.float32).reshape(cout), wo)[None, :]
    beta_row = jnp.repeat(beta.astype(jnp.float32).reshape(cout), wo)[None, :]

    kernel = functools.partial(
        _fused_kernel, N=n, H=h, K=k, Cout=cout, Ho=ho, Wo=wo,
        eps=1e-5, slope=0.2)

    out = pl.pallas_call(
        kernel,
        out_shape=jax.ShapeDtypeStruct((n, ho, cw), jnp.float32),
        grid_spec=pltpu.PrefetchScalarGridSpec(
            num_scalar_prefetch=0,
            grid=(1,),
            in_specs=[
                pl.BlockSpec((n * h, cin * w), lambda i: (0, 0)),
                pl.BlockSpec((cin * w, k * cw), lambda i: (0, 0)),
                pl.BlockSpec((n * ho, n * k * h), lambda i: (0, 0)),
                pl.BlockSpec((cw, cw), lambda i: (0, 0)),
                pl.BlockSpec((1, cw), lambda i: (0, 0)),
                pl.BlockSpec((1, cw), lambda i: (0, 0)),
            ],
            out_specs=pl.BlockSpec((n, ho, cw), lambda i: (0, 0, 0)),
        ),
        compiler_params=pltpu.CompilerParams(
            dimension_semantics=("arbitrary",)),
    )(x_hw, b_big, a_bd, bd, gamma_row, beta_row)

    # Lane-dense slab -> NCHW: free reorder in the wrapper (64 KiB total).
    return out.reshape(n, ho, cout, wo).transpose(0, 2, 1, 3)


# ---------------------------------------------------------------------------
# Pure-JAX reference for the self-check.
# ---------------------------------------------------------------------------
def _upsample_bilinear_x2_ref(x_nhwc):
    _, h, w, _ = x_nhwc.shape

    def idx_weights(size_in):
        size_out = 2 * size_in
        src = (jnp.arange(size_out, dtype=jnp.float32) + 0.5) / 2.0 - 0.5
        i0 = jnp.floor(src)
        frac = src - i0
        lo = jnp.clip(i0, 0, size_in - 1).astype(jnp.int32)
        hi = jnp.clip(i0 + 1, 0, size_in - 1).astype(jnp.int32)
        return lo, hi, frac

    h_lo, h_hi, h_f = idx_weights(h)
    w_lo, w_hi, w_f = idx_weights(w)
    top = x_nhwc[:, h_lo, :, :]
    bot = x_nhwc[:, h_hi, :, :]
    xh = top + (bot - top) * h_f[None, :, None, None]
    left = xh[:, :, w_lo, :]
    right = xh[:, :, w_hi, :]
    return left + (right - left) * w_f[None, None, :, None]


def _reference(x_nchw, weight_oihw, gamma, beta, *, padding):
    x = _upsample_bilinear_x2_ref(
        jnp.transpose(x_nchw, (0, 2, 3, 1)).astype(jnp.float32))
    y = lax.conv_general_dilated(
        x, jnp.transpose(weight_oihw, (2, 3, 1, 0)).astype(jnp.float32),
        window_strides=(1, 1), padding=[(padding, padding)] * 2,
        dimension_numbers=('NHWC', 'HWIO', 'NHWC'),
        precision=lax.Precision.HIGHEST)
    mean = jnp.mean(y, axis=(1, 2), keepdims=True)
    var = jnp.mean((y - mean) ** 2, axis=(1, 2), keepdims=True)
    y = (y - mean) * lax.rsqrt(var + 1e-5)
    y = y * gamma[None, None, None, :] + beta[None, None, None, :]
    y = jnp.where(y > 0, y, 0.2 * y)
    return jnp.transpose(y, (0, 3, 1, 2))


if __name__ == "__main__":
    # Module config: n_inp=4, n_otpt=8, k=3, pd=1; input x: (N=2, C=4, H=16, W=16)
    N, C_IN, C_OUT, H, W, K, PD = 2, 4, 8, 16, 16, 3, 1

    key = jax.random.PRNGKey(0)
    kx, kw_, kg, kb = jax.random.split(key, 4)

    x = jax.random.normal(kx, (N, C_IN, H, W), dtype=jnp.float32)
    weight = 0.1 * jax.random.normal(kw_, (C_OUT, C_IN, K, K), dtype=jnp.float32)
    gamma = 1.0 + 0.1 * jax.random.normal(kg, (C_OUT,), dtype=jnp.float32)
    beta = 0.1 * jax.random.normal(kb, (C_OUT,), dtype=jnp.float32)

    out = jax.block_until_ready(
        generator_upscale_block(x, weight, gamma, beta, padding=PD))
    ref = jax.block_until_ready(
        _reference(x, weight, gamma, beta, padding=PD))

    assert out.shape == (N, C_OUT, 2 * H, 2 * W)
    err = float(jnp.max(jnp.abs(out - ref)))
    assert err < 5e-3, f"mismatch vs pure-JAX reference: {err}"

    print("KERNEL_OK")
</pallas_src>

<mosaic_0001>
module attributes {stable_mosaic.version = 11 : i64} {
  func.func @_fused_kernel(%arg0: i32, %arg1: memref<32x64xf32, #tpu.memory_space<vmem>>, %arg2: memref<64x768xf32, #tpu.memory_space<vmem>>, %arg3: memref<64x96xf32, #tpu.memory_space<vmem>>, %arg4: memref<256x256xf32, #tpu.memory_space<vmem>>, %arg5: memref<1x256xf32, #tpu.memory_space<vmem>>, %arg6: memref<1x256xf32, #tpu.memory_space<vmem>>, %arg7: memref<2x32x256xf32, #tpu.memory_space<vmem>>) attributes {dimension_semantics = [#tpu.dimension_semantics<arbitrary>], iteration_bounds = array<i64: 1>, scalar_prefetch = 0 : i64, scratch_operands = 0 : i64, tpu.core_type = #tpu.core_type<tc>, window_params = [{pipeline_mode = #tpu.pipeline_mode<synchronous>, transform_indices = @transform_0, window_bounds = array<i64: 32, 64>}, {pipeline_mode = #tpu.pipeline_mode<synchronous>, transform_indices = @transform_1, window_bounds = array<i64: 64, 768>}, {pipeline_mode = #tpu.pipeline_mode<synchronous>, transform_indices = @transform_2, window_bounds = array<i64: 64, 96>}, {pipeline_mode = #tpu.pipeline_mode<synchronous>, transform_indices = @transform_3, window_bounds = array<i64: 256, 256>}, {pipeline_mode = #tpu.pipeline_mode<synchronous>, transform_indices = @transform_4, window_bounds = array<i64: 1, 256>}, {pipeline_mode = #tpu.pipeline_mode<synchronous>, transform_indices = @transform_5, window_bounds = array<i64: 1, 256>}, {pipeline_mode = #tpu.pipeline_mode<synchronous>, transform_indices = @transform_6, window_bounds = array<i64: 2, 32, 256>}]} {
    %c0 = arith.constant 0 : index
    %c0_0 = arith.constant 0 : index
    %0 = vector.load %arg1[%c0, %c0_0] : memref<32x64xf32, #tpu.memory_space<vmem>>, vector<32x64xf32>
    %c0_1 = arith.constant 0 : index
    %c0_2 = arith.constant 0 : index
    %1 = vector.load %arg2[%c0_1, %c0_2] : memref<64x768xf32, #tpu.memory_space<vmem>>, vector<64x768xf32>
    %cst = arith.constant dense<0.000000e+00> : vector<32x768xf32>
    %2 = tpu.matmul %0, %1, %cst {dimension_numbers = #tpu.dot_dimension_numbers<[1], [0], [0], [1], [0, 0, 1, 1], [], []>, precision = #tpu.contract_precision<fp32>} : vector<32x64xf32>, vector<64x768xf32>, vector<32x768xf32> -> vector<32x768xf32>
    %3 = vector.extract_strided_slice %2 {offsets = [0, 0], sizes = [16, 256], strides = [1, 1]} : vector<32x768xf32> to vector<16x256xf32>
    %4 = vector.extract_strided_slice %2 {offsets = [0, 256], sizes = [16, 256], strides = [1, 1]} : vector<32x768xf32> to vector<16x256xf32>
    %5 = vector.extract_strided_slice %2 {offsets = [0, 512], sizes = [16, 256], strides = [1, 1]} : vector<32x768xf32> to vector<16x256xf32>
    %6 = vector.extract_strided_slice %2 {offsets = [16, 0], sizes = [16, 256], strides = [1, 1]} : vector<32x768xf32> to vector<16x256xf32>
    %7 = vector.extract_strided_slice %2 {offsets = [16, 256], sizes = [16, 256], strides = [1, 1]} : vector<32x768xf32> to vector<16x256xf32>
    %8 = vector.extract_strided_slice %2 {offsets = [16, 512], sizes = [16, 256], strides = [1, 1]} : vector<32x768xf32> to vector<16x256xf32>
    %9 = tpu.concatenate %3, %4, %5, %6, %7, %8 in 0 : vector<16x256xf32>, vector<16x256xf32>, vector<16x256xf32>, vector<16x256xf32>, vector<16x256xf32>, vector<16x256xf32> -> vector<96x256xf32>
    %c0_3 = arith.constant 0 : index
    %c0_4 = arith.constant 0 : index
    %10 = vector.load %arg3[%c0_3, %c0_4] : memref<64x96xf32, #tpu.memory_space<vmem>>, vector<64x96xf32>
    %cst_5 = arith.constant dense<0.000000e+00> : vector<64x256xf32>
    %11 = tpu.matmul %10, %9, %cst_5 {dimension_numbers = #tpu.dot_dimension_numbers<[1], [0], [0], [1], [0, 0, 1, 1], [], []>, precision = #tpu.contract_precision<fp32>} : vector<64x96xf32>, vector<96x256xf32>, vector<64x256xf32> -> vector<64x256xf32>
    %12 = vector.extract_strided_slice %11 {offsets = [0, 0], sizes = [32, 256], strides = [1, 1]} : vector<64x256xf32> to vector<32x256xf32>
    %cst_6 = arith.constant dense<0.000000e+00> : vector<256xf32>
    %13 = vector.multi_reduction <add>, %12, %cst_6 [0] : vector<32x256xf32> to vector<256xf32>
    %14 = vector.shape_cast %13 : vector<256xf32> to vector<1x256xf32>
    %15 = arith.mulf %12, %12 : vector<32x256xf32>
    %cst_7 = arith.constant dense<0.000000e+00> : vector<256xf32>
    %16 = vector.multi_reduction <add>, %15, %cst_7 [0] : vector<32x256xf32> to vector<256xf32>
    %17 = vector.shape_cast %16 : vector<256xf32> to vector<1x256xf32>
    %18 = vector.extract_strided_slice %11 {offsets = [32, 0], sizes = [32, 256], strides = [1, 1]} : vector<64x256xf32> to vector<32x256xf32>
    %cst_8 = arith.constant dense<0.000000e+00> : vector<256xf32>
    %19 = vector.multi_reduction <add>, %18, %cst_8 [0] : vector<32x256xf32> to vector<256xf32>
    %20 = vector.shape_cast %19 : vector<256xf32> to vector<1x256xf32>
    %21 = arith.mulf %18, %18 : vector<32x256xf32>
    %cst_9 = arith.constant dense<0.000000e+00> : vector<256xf32>
    %22 = vector.multi_reduction <add>, %21, %cst_9 [0] : vector<32x256xf32> to vector<256xf32>
    %23 = vector.shape_cast %22 : vector<256xf32> to vector<1x256xf32>
    %24 = tpu.concatenate %14, %17, %20, %23 in 0 : vector<1x256xf32>, vector<1x256xf32>, vector<1x256xf32>, vector<1x256xf32> -> vector<4x256xf32>
    %c0_10 = arith.constant 0 : index
    %c0_11 = arith.constant 0 : index
    %25 = vector.load %arg4[%c0_10, %c0_11] : memref<256x256xf32, #tpu.memory_space<vmem>>, vector<256x256xf32>
    %cst_12 = arith.constant dense<0.000000e+00> : vector<4x256xf32>
    %26 = tpu.matmul %24, %25, %cst_12 {dimension_numbers = #tpu.dot_dimension_numbers<[1], [0], [0], [1], [0, 0, 1, 1], [], []>, precision = #tpu.contract_precision<fp32>} : vector<4x256xf32>, vector<256x256xf32>, vector<4x256xf32> -> vector<4x256xf32>
    %c0_13 = arith.constant 0 : index
    %c0_14 = arith.constant 0 : index
    %27 = vector.load %arg5[%c0_13, %c0_14] : memref<1x256xf32, #tpu.memory_space<vmem>>, vector<1x256xf32>
    %c0_15 = arith.constant 0 : index
    %c0_16 = arith.constant 0 : index
    %28 = vector.load %arg6[%c0_15, %c0_16] : memref<1x256xf32, #tpu.memory_space<vmem>>, vector<1x256xf32>
    %29 = vector.extract_strided_slice %11 {offsets = [0, 0], sizes = [32, 256], strides = [1, 1]} : vector<64x256xf32> to vector<32x256xf32>
    %30 = vector.extract_strided_slice %26 {offsets = [0, 0], sizes = [1, 256], strides = [1, 1]} : vector<4x256xf32> to vector<1x256xf32>
    %cst_17 = arith.constant 9.765625E-4 : f32
    %31 = vector.broadcast %cst_17 : f32 to vector<1x256xf32>
    %32 = arith.mulf %30, %31 : vector<1x256xf32>
    %33 = vector.extract_strided_slice %26 {offsets = [1, 0], sizes = [1, 256], strides = [1, 1]} : vector<4x256xf32> to vector<1x256xf32>
    %cst_18 = arith.constant 9.765625E-4 : f32
    %34 = vector.broadcast %cst_18 : f32 to vector<1x256xf32>
    %35 = arith.mulf %33, %34 : vector<1x256xf32>
    %36 = arith.mulf %32, %32 : vector<1x256xf32>
    %37 = arith.subf %35, %36 : vector<1x256xf32>
    %cst_19 = arith.constant 9.99999974E-6 : f32
    %38 = vector.broadcast %cst_19 : f32 to vector<1x256xf32>
    %39 = arith.addf %37, %38 : vector<1x256xf32>
    %40 = math.rsqrt %39 : vector<1x256xf32>
    %41 = arith.mulf %27, %40 : vector<1x256xf32>
    %42 = arith.mulf %32, %41 : vector<1x256xf32>
    %43 = arith.subf %28, %42 : vector<1x256xf32>
    %44 = vector.broadcast %41 : vector<1x256xf32> to vector<32x256xf32>
    %45 = arith.mulf %29, %44 : vector<32x256xf32>
    %46 = vector.broadcast %43 : vector<1x256xf32> to vector<32x256xf32>
    %47 = arith.addf %45, %46 : vector<32x256xf32>
    %cst_20 = arith.constant 0.000000e+00 : f32
    %48 = vector.broadcast %cst_20 : f32 to vector<32x256xf32>
    %49 = arith.cmpf ogt, %47, %48 : vector<32x256xf32>
    %cst_21 = arith.constant 2.000000e-01 : f32
    %50 = vector.broadcast %cst_21 : f32 to vector<32x256xf32>
    %51 = arith.mulf %50, %47 : vector<32x256xf32>
    %52 = arith.select %49, %47, %51 : vector<32x256xi1>, vector<32x256xf32>
    %c0_22 = arith.constant 0 : index
    %c0_23 = arith.constant 0 : index
    %c0_24 = arith.constant 0 : index
    %53 = vector.load %arg7[%c0_22, %c0_23, %c0_24] : memref<2x32x256xf32, #tpu.memory_space<vmem>>, vector<1x32x256xf32>
    %54 = vector.shape_cast %53 : vector<1x32x256xf32> to vector<32x256xf32>
    %55 = vector.shape_cast %52 : vector<32x256xf32> to vector<1x32x256xf32>
    tpu.vector_store %arg7[%c0_22, %c0_23, %c0_24], %55 {strides = array<i32>} : memref<2x32x256xf32, #tpu.memory_space<vmem>>, vector<1x32x256xf32>,
    %56 = vector.extract_strided_slice %11 {offsets = [32, 0], sizes = [32, 256], strides = [1, 1]} : vector<64x256xf32> to vector<32x256xf32>
    %57 = vector.extract_strided_slice %26 {offsets = [2, 0], sizes = [1, 256], strides = [1, 1]} : vector<4x256xf32> to vector<1x256xf32>
    %cst_25 = arith.constant 9.765625E-4 : f32
    %58 = vector.broadcast %cst_25 : f32 to vector<1x256xf32>
    %59 = arith.mulf %57, %58 : vector<1x256xf32>
    %60 = vector.extract_strided_slice %26 {offsets = [3, 0], sizes = [1, 256], strides = [1, 1]} : vector<4x256xf32> to vector<1x256xf32>
    %cst_26 = arith.constant 9.765625E-4 : f32
    %61 = vector.broadcast %cst_26 : f32 to vector<1x256xf32>
    %62 = arith.mulf %60, %61 : vector<1x256xf32>
    %63 = arith.mulf %59, %59 : vector<1x256xf32>
    %64 = arith.subf %62, %63 : vector<1x256xf32>
    %cst_27 = arith.constant 9.99999974E-6 : f32
    %65 = vector.broadcast %cst_27 : f32 to vector<1x256xf32>
    %66 = arith.addf %64, %65 : vector<1x256xf32>
    %67 = math.rsqrt %66 : vector<1x256xf32>
    %68 = arith.mulf %27, %67 : vector<1x256xf32>
    %69 = arith.mulf %59, %68 : vector<1x256xf32>
    %70 = arith.subf %28, %69 : vector<1x256xf32>
    %71 = vector.broadcast %68 : vector<1x256xf32> to vector<32x256xf32>
    %72 = arith.mulf %56, %71 : vector<32x256xf32>
    %73 = vector.broadcast %70 : vector<1x256xf32> to vector<32x256xf32>
    %74 = arith.addf %72, %73 : vector<32x256xf32>
    %cst_28 = arith.constant 0.000000e+00 : f32
    %75 = vector.broadcast %cst_28 : f32 to vector<32x256xf32>
    %76 = arith.cmpf ogt, %74, %75 : vector<32x256xf32>
    %cst_29 = arith.constant 2.000000e-01 : f32
    %77 = vector.broadcast %cst_29 : f32 to vector<32x256xf32>
    %78 = arith.mulf %77, %74 : vector<32x256xf32>
    %79 = arith.select %76, %74, %78 : vector<32x256xi1>, vector<32x256xf32>
    %c1 = arith.constant 1 : index
    %c0_30 = arith.constant 0 : index
    %c0_31 = arith.constant 0 : index
    %80 = vector.load %arg7[%c1, %c0_30, %c0_31] : memref<2x32x256xf32, #tpu.memory_space<vmem>>, vector<1x32x256xf32>
    %81 = vector.shape_cast %80 : vector<1x32x256xf32> to vector<32x256xf32>
    %82 = vector.shape_cast %79 : vector<32x256xf32> to vector<1x32x256xf32>
    tpu.vector_store %arg7[%c1, %c0_30, %c0_31], %82 {strides = array<i32>} : memref<2x32x256xf32, #tpu.memory_space<vmem>>, vector<1x32x256xf32>,
    return
  }
  func.func @transform_0(%arg0: i32) -> (i32, i32) {
    %c0_i32 = arith.constant 0 : i32
    %c0_i32_0 = arith.constant 0 : i32
    %c0_i32_1 = arith.constant 0 : i32
    return %c0_i32, %c0_i32_0 : i32, i32
  }
  func.func @transform_1(%arg0: i32) -> (i32, i32) {
    %c0_i32 = arith.constant 0 : i32
    %c0_i32_0 = arith.constant 0 : i32
    %c0_i32_1 = arith.constant 0 : i32
    return %c0_i32, %c0_i32_0 : i32, i32
  }
  func.func @transform_2(%arg0: i32) -> (i32, i32) {
    %c0_i32 = arith.constant 0 : i32
    %c0_i32_0 = arith.constant 0 : i32
    %c0_i32_1 = arith.constant 0 : i32
    return %c0_i32, %c0_i32_0 : i32, i32
  }
  func.func @transform_3(%arg0: i32) -> (i32, i32) {
    %c0_i32 = arith.constant 0 : i32
    %c0_i32_0 = arith.constant 0 : i32
    %c0_i32_1 = arith.constant 0 : i32
    return %c0_i32, %c0_i32_0 : i32, i32
  }
  func.func @transform_4(%arg0: i32) -> (i32, i32) {
    %c0_i32 = arith.constant 0 : i32
    %c0_i32_0 = arith.constant 0 : i32
    %c0_i32_1 = arith.constant 0 : i32
    return %c0_i32, %c0_i32_0 : i32, i32
  }
  func.func @transform_5(%arg0: i32) -> (i32, i32) {
    %c0_i32 = arith.constant 0 : i32
    %c0_i32_0 = arith.constant 0 : i32
    %c0_i32_1 = arith.constant 0 : i32
    return %c0_i32, %c0_i32_0 : i32, i32
  }
  func.func @transform_6(%arg0: i32) -> (i32, i32, i32) {
    %c0_i32 = arith.constant 0 : i32
    %c0_i32_0 = arith.constant 0 : i32
    %c0_i32_1 = arith.constant 0 : i32
    %c0_i32_2 = arith.constant 0 : i32
    return %c0_i32, %c0_i32_0, %c0_i32_1 : i32, i32, i32
  }
}

</mosaic_0001>

<llo_original>
// kernel: tpu_custom_call.1
$region0: #{tpu_custom_call.1}
  #allocation0 [shape = 'u32[]', space=smem, size = 0x4, offset = 0x4, fixed_abs, tag = 'smem constant byte address 0x4 - core index']
  #allocation1 [shape = 'u32[144,128]{1,0:T(1,128)}', space=vmem, size = 0x12000, scoped, tag = 'internal scratch']
  %s0 = inlined_call_operand.hbm [shape: f32[32,64], index: 0, kind: input, shape index: {}]
  %s1 = inlined_call_operand.hbm [shape: f32[64,768], index: 1, kind: input, shape index: {}]
  %s2 = inlined_call_operand.hbm [shape: f32[64,96], index: 2, kind: input, shape index: {}]
  %s3 = inlined_call_operand.hbm [shape: f32[256,256], index: 3, kind: input, shape index: {}]
  %s4 = inlined_call_operand.vmem [shape: f32[1,256], index: 4, kind: input, shape index: {}]
  %s5 = inlined_call_operand.vmem [shape: f32[1,256], index: 5, kind: input, shape index: {}]
  %s6 = inlined_call_operand.hbm [shape: f32[2,32,256], index: 6, kind: output, shape index: {}]
  %s7 = sld [smem:[#allocation0]]
  $region50: #{tpu_custom_call.1} parent=0
    _
  %s9 = ssub.s32 1, %s7
  %s10 = scalar_select 0, %s9, %s7
  $region1: #{tpu_custom_call.1} parent=0
    #allocation2 [shape = 'u8[16384]{0}', space=vmem, size = 0x4000, scoped, tag = 'input window, operand 0, single buffered']
    #allocation3 [shape = 's32[1]{0}', space=sflag, size = 0x4, scoped, tag = 'scoped memory for tpu_custom_call.1']
    #allocation4 [shape = 's32[1]{0}', space=sflag, size = 0x4, scoped, tag = 'scoped memory for tpu_custom_call.1']
    #allocation5 [shape = 'u8[196608]{0}', space=vmem, size = 0x30000, scoped, tag = 'input window, operand 1, single buffered']
    #allocation6 [shape = 's32[1]{0}', space=sflag, size = 0x4, scoped, tag = 'scoped memory for tpu_custom_call.1']
    #allocation7 [shape = 'u8[32768]{0}', space=vmem, size = 0x8000, scoped, tag = 'input window, operand 2, single buffered']
    #allocation8 [shape = 'u8[262144]{0}', space=vmem, size = 0x40000, scoped, tag = 'input window, operand 3, single buffered']
    #allocation9 [shape = 's32[1]{0}', space=sflag, size = 0x4, scoped, tag = 'scoped memory for tpu_custom_call.1']
    #allocation10 [shape = 'u8[65536]{0}', space=vmem, size = 0x10000, scoped, tag = 'output window, operand 0, single buffered']
    %11 = vsyncpa [#allocation3], 0
    %12 = vsyncpa [#allocation6], 0
    %13 = vsyncpa [#allocation9], 0
    %14 = vsyncpa [#allocation4], 0
    // Predicated region
    $region2: #{tpu_custom_call.1} parent=1 // pred_check
      _
    $region3: #{tpu_custom_call.1} parent=1 // pred_check_branch
      %16 = sbr.rel (0) target = $region5
    $region4: #{tpu_custom_call.1} parent=1 // pred_region
      %s18 = ssub.s32 512, 512
      %19 = vsyncadd [#allocation3], %s18
      %s20 = sshll.u32 [#allocation2], 4
      %s21 = int_to_ptr.vmem [resolvable:$true] %s20
      %26 = dma.hbm_to_vmem [thread:$0]  %s0, 512, %s21, [#allocation3], 128, 128, 8
    $region5: #{tpu_custom_call.1} parent=1 // pred_fallthru
      _
    // Predicated region
    $region6: #{tpu_custom_call.1} parent=1 // pred_check
      _
    $region7: #{tpu_custom_call.1} parent=1 // pred_check_branch
      %28 = sbr.rel (0) target = $region9
    $region8: #{tpu_custom_call.1} parent=1 // pred_region
      %s30 = ssub.s32 6144, 6144
      %31 = vsyncadd [#allocation6], %s30
      %s32 = sshll.u32 [#allocation5], 4
      %s33 = int_to_ptr.vmem [resolvable:$true] %s32
      %38 = dma.hbm_to_vmem [thread:$0]  %s1, 6144, %s33, [#allocation6], 768, 768, 48
    $region9: #{tpu_custom_call.1} parent=1 // pred_fallthru
      _
    // Predicated region
    $region10: #{tpu_custom_call.1} parent=1 // pred_check
      _
    $region11: #{tpu_custom_call.1} parent=1 // pred_check_branch
      %40 = sbr.rel (0) target = $region13
    $region12: #{tpu_custom_call.1} parent=1 // pred_region
      %s42 = ssub.s32 1024, 1024
      %43 = vsyncadd [#allocation6], %s42
      %s44 = sshll.u32 [#allocation7], 4
      %s45 = int_to_ptr.vmem [resolvable:$true] %s44
      %50 = dma.hbm_to_vmem [thread:$0]  %s2, 1024, %s45, [#allocation6], 128, 128, 8
    $region13: #{tpu_custom_call.1} parent=1 // pred_fallthru
      _
    // Predicated region
    $region14: #{tpu_custom_call.1} parent=1 // pred_check
      _
    $region15: #{tpu_custom_call.1} parent=1 // pred_check_branch
      %52 = sbr.rel (0) target = $region17
    $region16: #{tpu_custom_call.1} parent=1 // pred_region
      %s54 = ssub.s32 8192, 8192
      %55 = vsyncadd [#allocation9], %s54
      %s56 = sshll.u32 [#allocation8], 4
      %s57 = int_to_ptr.vmem [resolvable:$true] %s56
      %62 = dma.hbm_to_vmem [thread:$0]  %s3, 8192, %s57, [#allocation9], 256, 256, 16
    $region17: #{tpu_custom_call.1} parent=1 // pred_fallthru
      _
    // Predicated region
    $region18: #{tpu_custom_call.1} parent=1 // pred_check
      _
    $region19: #{tpu_custom_call.1} parent=1 // pred_check_branch
      %64 = sbr.rel (0) target = $region21
    $region20: #{tpu_custom_call.1} parent=1 // pred_region
      _
    $region21: #{tpu_custom_call.1} parent=1 // pred_fallthru
      _
    // Predicated region
    $region22: #{tpu_custom_call.1} parent=1 // pred_check
      _
    $region23: #{tpu_custom_call.1} parent=1 // pred_check_branch
      %66 = sbr.rel (0) target = $region25
    $region24: #{tpu_custom_call.1} parent=1 // pred_region
      _
    $region25: #{tpu_custom_call.1} parent=1 // pred_fallthru
      _
    // Predicated region
    $region26: #{tpu_custom_call.1} parent=1 // pred_check
      _
    $region27: #{tpu_custom_call.1} parent=1 // pred_check_branch
      %68 = sbr.rel (0) target = $region29
    $region28: #{tpu_custom_call.1} parent=1 // pred_region
      %69 = dma.done [#allocation3], 512
    $region29: #{tpu_custom_call.1} parent=1 // pred_fallthru
      _
    // Predicated region
    $region30: #{tpu_custom_call.1} parent=1 // pred_check
      _
    $region31: #{tpu_custom_call.1} parent=1 // pred_check_branch
      %71 = sbr.rel (0) target = $region33
    $region32: #{tpu_custom_call.1} parent=1 // pred_region
      %72 = dma.done [#allocation6], 6144
    $region33: #{tpu_custom_call.1} parent=1 // pred_fallthru
      _
    // Predicated region
    $region34: #{tpu_custom_call.1} parent=1 // pred_check
      _
    $region35: #{tpu_custom_call.1} parent=1 // pred_check_branch
      %74 = sbr.rel (0) target = $region37
    $region36: #{tpu_custom_call.1} parent=1 // pred_region
      %75 = dma.done [#allocation6], 1024
    $region37: #{tpu_custom_call.1} parent=1 // pred_fallthru
      _
    // Predicated region
    $region38: #{tpu_custom_call.1} parent=1 // pred_check
      _
    $region39: #{tpu_custom_call.1} parent=1 // pred_check_branch
      %77 = sbr.rel (0) target = $region41
    $region40: #{tpu_custom_call.1} parent=1 // pred_region
      %78 = dma.done [#allocation9], 8192
    $region41: #{tpu_custom_call.1} parent=1 // pred_fallthru
      _
    %v79 = vld [vmem:[#allocation2] sm:$0xff]
    %v80 = vld [vmem:[#allocation2 + $0x8] sm:$0xff]
    %v81 = vld [vmem:[#allocation2 + $0x10] sm:$0xff]
    %v82 = vld [vmem:[#allocation2 + $0x18] sm:$0xff]
    %v83 = vld [vmem:[#allocation5] sm:$0xff]
    %v84 = vld [vmem:[#allocation5 + $0x8] sm:$0xff]
    %v85 = vld [vmem:[#allocation5 + $0x10] sm:$0xff]
    %v86 = vld [vmem:[#allocation5 + $0x18] sm:$0xff]
    %v87 = vld [vmem:[#allocation5 + $0x20] sm:$0xff]
    %v88 = vld [vmem:[#allocation5 + $0x28] sm:$0xff]
    %v89 = vld [vmem:[#allocation5 + $0x30] sm:$0xff]
    %v90 = vld [vmem:[#allocation5 + $0x38] sm:$0xff]
    %v91 = vld [vmem:[#allocation5 + $0x40] sm:$0xff]
    %v92 = vld [vmem:[#allocation5 + $0x48] sm:$0xff]
    %v93 = vld [vmem:[#allocation5 + $0x50] sm:$0xff]
    %v94 = vld [vmem:[#allocation5 + $0x58] sm:$0xff]
    %v95 = vld [vmem:[#allocation5 + $0x60] sm:$0xff]
    %v96 = vld [vmem:[#allocation5 + $0x68] sm:$0xff]
    %v97 = vld [vmem:[#allocation5 + $0x70] sm:$0xff]
    %v98 = vld [vmem:[#allocation5 + $0x78] sm:$0xff]
    %v99 = vld [vmem:[#allocation5 + $0x80] sm:$0xff]
    %v100 = vld [vmem:[#allocation5 + $0x88] sm:$0xff]
    %v101 = vld [vmem:[#allocation5 + $0x90] sm:$0xff]
    %v102 = vld [vmem:[#allocation5 + $0x98] sm:$0xff]
    %v103 = vld [vmem:[#allocation5 + $0xa0] sm:$0xff]
    %v104 = vld [vmem:[#allocation5 + $0xa8] sm:$0xff]
    %v105 = vld [vmem:[#allocation5 + $0xb0] sm:$0xff]
    %v106 = vld [vmem:[#allocation5 + $0xb8] sm:$0xff]
    %v107 = vld [vmem:[#allocation5 + $0xc0] sm:$0xff]
    %v108 = vld [vmem:[#allocation5 + $0xc8] sm:$0xff]
    %v109 = vld [vmem:[#allocation5 + $0xd0] sm:$0xff]
    %v110 = vld [vmem:[#allocation5 + $0xd8] sm:$0xff]
    %v111 = vld [vmem:[#allocation5 + $0xe0] sm:$0xff]
    %v112 = vld [vmem:[#allocation5 + $0xe8] sm:$0xff]
    %v113 = vld [vmem:[#allocation5 + $0xf0] sm:$0xff]
    %v114 = vld [vmem:[#allocation5 + $0xf8] sm:$0xff]
    %v115 = vld [vmem:[#allocation5 + $0x100] sm:$0xff]
    %v116 = vld [vmem:[#allocation5 + $0x108] sm:$0xff]
    %v117 = vld [vmem:[#allocation5 + $0x110] sm:$0xff]
    %v118 = vld [vmem:[#allocation5 + $0x118] sm:$0xff]
    %v119 = vld [vmem:[#allocation5 + $0x120] sm:$0xff]
    %v120 = vld [vmem:[#allocation5 + $0x128] sm:$0xff]
    %v121 = vld [vmem:[#allocation5 + $0x130] sm:$0xff]
    %v122 = vld [vmem:[#allocation5 + $0x138] sm:$0xff]
    %v123 = vld [vmem:[#allocation5 + $0x140] sm:$0xff]
    %v124 = vld [vmem:[#allocation5 + $0x148] sm:$0xff]
    %v125 = vld [vmem:[#allocation5 + $0x150] sm:$0xff]
    %v126 = vld [vmem:[#allocation5 + $0x158] sm:$0xff]
    %v127 = vld [vmem:[#allocation5 + $0x160] sm:$0xff]
    %v128 = vld [vmem:[#allocation5 + $0x168] sm:$0xff]
    %v129 = vld [vmem:[#allocation5 + $0x170] sm:$0xff]
    %v130 = vld [vmem:[#allocation5 + $0x178] sm:$0xff]
    %vm131 = vcmask 523264
    %v133 = vsel %vm131, %v79, 0
    %v136 = vsel %vm131, %v80, 0
    %v139 = vsel %vm131, %v81, 0
    %v142 = vsel %vm131, %v82, 0
    %144 = vmatprep.subr.mxu0 0.0
    %145 = vmatpush1.msra.mxu0 0.0
    %146 = vmatprep.subr.mxu0 0.0
    %147 = vmatpush1.msra.mxu0 0.0
    %148 = vmatprep.subr.mxu0 0.0
    %149 = vmatpush1.msra.mxu0 0.0
    %150 = vmatprep.subr.mxu0 0.0
    %151 = vmatpush1.msra.mxu0 0.0
    %152 = vmatprep.subr.mxu0 0.0
    %153 = vmatpush1.msra.mxu0 0.0
    %154 = vmatprep.subr.mxu0 0.0
    %155 = vmatpush1.msra.mxu0 0.0
    %156 = vmatprep.subr.mxu0 0.0
    %157 = vmatpush1.msra.mxu0 0.0
    %158 = vmatprep.subr.mxu0 0.0
    %159 = vmatpush1.msra.mxu0 0.0
    %v160 = vand.u32 %v126, 4294901760
    %161 = vmatprep.subr.mxu0 %v160
    %v162 = vand.u32 %v125, 4294901760
    %163 = vmatpush1.msra.mxu0 %v162
    %v164 = vand.u32 %v120, 4294901760
    %165 = vmatprep.subr.mxu0 %v164
    %v166 = vand.u32 %v119, 4294901760
    %167 = vmatpush1.msra.mxu0 %v166
    %v168 = vand.u32 %v114, 4294901760
    %169 = vmatprep.subr.mxu0 %v168
    %v170 = vand.u32 %v113, 4294901760
    %171 = vmatpush1.msra.mxu0 %v170
    %v172 = vand.u32 %v108, 4294901760
    %173 = vmatprep.subr.mxu0 %v172
    %v174 = vand.u32 %v107, 4294901760
    %175 = vmatpush1.msra.mxu0 %v174
    %v176 = vand.u32 %v102, 4294901760
    %177 = vmatprep.subr.mxu0 %v176
    %v178 = vand.u32 %v101, 4294901760
    %179 = vmatpush1.msra.mxu0 %v178
    %v180 = vand.u32 %v96, 4294901760
    %181 = vmatprep.subr.mxu0 %v180
    %v182 = vand.u32 %v95, 4294901760
    %183 = vmatpush1.msra.mxu0 %v182
    %v184 = vand.u32 %v90, 4294901760
    %185 = vmatprep.subr.mxu0 %v184
    %v186 = vand.u32 %v89, 4294901760
    %187 = vmatpush1.msra.mxu0 %v186
    %v188 = vand.u32 %v84, 4294901760
    %189 = vmatprep.subr.mxu0 %v188
    %v190 = vand.u32 %v83, 4294901760
    %191 = vmatpush1.msra.mxu0 %v190
    %192 = vmatprep.subr.mxu0 0.0
    %193 = vmatpush2.msra.mxu0 0.0
    %194 = vmatprep.subr.mxu0 0.0
    %195 = vmatpush2.msra.mxu0 0.0
    %196 = vmatprep.subr.mxu0 0.0
    %197 = vmatpush2.msra.mxu0 0.0
    %198 = vmatprep.subr.mxu0 0.0
    %199 = vmatpush2.msra.mxu0 0.0
    %200 = vmatprep.subr.mxu0 0.0
    %201 = vmatpush2.msra.mxu0 0.0
    %202 = vmatprep.subr.mxu0 0.0
    %203 = vmatpush2.msra.mxu0 0.0
    %204 = vmatprep.subr.mxu0 0.0
    %205 = vmatpush2.msra.mxu0 0.0
    %206 = vmatprep.subr.mxu0 0.0
    %207 = vmatpush2.msra.mxu0 0.0
    %208 = vmatprep.subr.mxu0 0.0
    %209 = vmatpush2.msra.mxu0 0.0
    %210 = vmatprep.subr.mxu0 0.0
    %211 = vmatpush2.msra.mxu0 0.0
    %212 = vmatprep.subr.mxu0 0.0
    %213 = vmatpush2.msra.mxu0 0.0
    %214 = vmatprep.subr.mxu0 0.0
    %215 = vmatpush2.msra.mxu0 0.0
    %216 = vmatprep.subr.mxu0 0.0
    %217 = vmatpush2.msra.mxu0 0.0
    %218 = vmatprep.subr.mxu0 0.0
    %219 = vmatpush2.msra.mxu0 0.0
    %220 = vmatprep.subr.mxu0 0.0
    %221 = vmatpush2.msra.mxu0 0.0
    %222 = vmatprep.subr.mxu0 0.0
    %223 = vmatpush2.msra.mxu0 0.0
    %224 = vmatprep.mubr.f32.mxu0 0.0
    %v225 = vand.u32 %v133, 4294901760
    %v226 = vsub.f32 %v133, %v225
    %v227 = vand.u32 %v226, 4294901760
    %v228 = vsub.f32 %v226, %v227
    %v229 = vand.u32 %v228, 4294901760
    %230 = vmatmul.mubr.f32.gmra.mxu0 %v229
    %v231 = vpop.f32.mrf.mxu0
    %v232 = vadd.f32 0.0, %v231
    %v233 = vpop.f32.mrf.mxu0
    %v234 = vadd.f32 0.0, %v233
    %235 = vmatprep.mubr.f32.mxu0 0.0
    %v236 = vand.u32 %v136, 4294901760
    %v237 = vsub.f32 %v136, %v236
    %v238 = vand.u32 %v237, 4294901760
    %v239 = vsub.f32 %v237, %v238
    %v240 = vand.u32 %v239, 4294901760
    %241 = vmatmul.mubr.f32.gmra.mxu0 %v240
    %v242 = vpop.f32.mrf.mxu0
    %v243 = vadd.f32 0.0, %v242
    %v244 = vpop.f32.mrf.mxu0
    %v245 = vadd.f32 0.0, %v244
    %246 = vmatprep.mubr.f32.mxu0 0.0
    %v247 = vand.u32 %v139, 4294901760
    %v248 = vsub.f32 %v139, %v247
    %v249 = vand.u32 %v248, 4294901760
    %v250 = vsub.f32 %v248, %v249
    %v251 = vand.u32 %v250, 4294901760
    %252 = vmatmul.mubr.f32.gmra.mxu0 %v251
    %v253 = vpop.f32.mrf.mxu0
    %v254 = vadd.f32 0.0, %v253
    %v255 = vpop.f32.mrf.mxu0
    %v256 = vadd.f32 0.0, %v255
    %257 = vmatprep.mubr.f32.mxu0 0.0
    %v258 = vand.u32 %v142, 4294901760
    %v259 = vsub.f32 %v142, %v258
    %v260 = vand.u32 %v259, 4294901760
    %v261 = vsub.f32 %v259, %v260
    %v262 = vand.u32 %v261, 4294901760
    %263 = vmatmul.mubr.f32.gmra.mxu0 %v262
    %v264 = vpop.f32.mrf.mxu0
    %v265 = vadd.f32 0.0, %v264
    %v266 = vpop.f32.mrf.mxu0
    %v267 = vadd.f32 0.0, %v266
    %268 = vdwg.mxu0
    %269 = vmatprep.subr.mxu0 0.0
    %270 = vmatpush1.msra.mxu0 0.0
    %271 = vmatprep.subr.mxu0 0.0
    %272 = vmatpush1.msra.mxu0 0.0
    %273 = vmatprep.subr.mxu0 0.0
    %274 = vmatpush1.msra.mxu0 0.0
    %275 = vmatprep.subr.mxu0 0.0
    %276 = vmatpush1.msra.mxu0 0.0
    %277 = vmatprep.subr.mxu0 0.0
    %278 = vmatpush1.msra.mxu0 0.0
    %279 = vmatprep.subr.mxu0 0.0
    %280 = vmatpush1.msra.mxu0 0.0
    %281 = vmatprep.subr.mxu0 0.0
    %282 = vmatpush1.msra.mxu0 0.0
    %283 = vmatprep.subr.mxu0 0.0
    %284 = vmatpush1.msra.mxu0 0.0
    %v285 = vand.u32 %v126, 4294901760
    %v286 = vsub.f32 %v126, %v285
    %v287 = vand.u32 %v286, 4294901760
    %v288 = vsub.f32 %v286, %v287
    %v289 = vand.u32 %v288, 4294901760
    %290 = vmatprep.subr.mxu0 %v289
    %v291 = vand.u32 %v125, 4294901760
    %v292 = vsub.f32 %v125, %v291
    %v293 = vand.u32 %v292, 4294901760
    %v294 = vsub.f32 %v292, %v293
    %v295 = vand.u32 %v294, 4294901760
    %296 = vmatpush1.msra.mxu0 %v295
    %v297 = vand.u32 %v120, 4294901760
    %v298 = vsub.f32 %v120, %v297
    %v299 = vand.u32 %v298, 4294901760
    %v300 = vsub.f32 %v298, %v299
    %v301 = vand.u32 %v300, 4294901760
    %302 = vmatprep.subr.mxu0 %v301
    %v303 = vand.u32 %v119, 4294901760
    %v304 = vsub.f32 %v119, %v303
    %v305 = vand.u32 %v304, 4294901760
    %v306 = vsub.f32 %v304, %v305
    %v307 = vand.u32 %v306, 4294901760
    %308 = vmatpush1.msra.mxu0 %v307
    %v309 = vand.u32 %v114, 4294901760
    %v310 = vsub.f32 %v114, %v309
    %v311 = vand.u32 %v310, 4294901760
    %v312 = vsub.f32 %v310, %v311
    %v313 = vand.u32 %v312, 4294901760
    %314 = vmatprep.subr.mxu0 %v313
    %v315 = vand.u32 %v113, 4294901760
    %v316 = vsub.f32 %v113, %v315
    %v317 = vand.u32 %v316, 4294901760
    %v318 = vsub.f32 %v316, %v317
    %v319 = vand.u32 %v318, 4294901760
    %320 = vmatpush1.msra.mxu0 %v319
    %v321 = vand.u32 %v108, 4294901760
    %v322 = vsub.f32 %v108, %v321
    %v323 = vand.u32 %v322, 4294901760
    %v324 = vsub.f32 %v322, %v323
    %v325 = vand.u32 %v324, 4294901760
    %326 = vmatprep.subr.mxu0 %v325
    %v327 = vand.u32 %v107, 4294901760
    %v328 = vsub.f32 %v107, %v327
    %v329 = vand.u32 %v328, 4294901760
    %v330 = vsub.f32 %v328, %v329
    %v331 = vand.u32 %v330, 4294901760
    %332 = vmatpush1.msra.mxu0 %v331
    %v333 = vand.u32 %v102, 4294901760
    %v334 = vsub.f32 %v102, %v333
    %v335 = vand.u32 %v334, 4294901760
    %v336 = vsub.f32 %v334, %v335
    %v337 = vand.u32 %v336, 4294901760
    %338 = vmatprep.subr.mxu0 %v337
    %v339 = vand.u32 %v101, 4294901760
    %v340 = vsub.f32 %v101, %v339
    %v341 = vand.u32 %v340, 4294901760
    %v342 = vsub.f32 %v340, %v341
    %v343 = vand.u32 %v342, 4294901760
    %344 = vmatpush1.msra.mxu0 %v343
    %v345 = vand.u32 %v96, 4294901760
    %v346 = vsub.f32 %v96, %v345
    %v347 = vand.u32 %v346, 4294901760
    %v348 = vsub.f32 %v346, %v347
    %v349 = vand.u32 %v348, 4294901760
    %350 = vmatprep.subr.mxu0 %v349
    %v351 = vand.u32 %v95, 4294901760
    %v352 = vsub.f32 %v95, %v351
    %v353 = vand.u32 %v352, 4294901760
    %v354 = vsub.f32 %v352, %v353
    %v355 = vand.u32 %v354, 4294901760
    %356 = vmatpush1.msra.mxu0 %v355
    %v357 = vand.u32 %v90, 4294901760
    %v358 = vsub.f32 %v90, %v357
    %v359 = vand.u32 %v358, 4294901760
    %v360 = vsub.f32 %v358, %v359
    %v361 = vand.u32 %v360, 4294901760
    %362 = vmatprep.subr.mxu0 %v361
    %v363 = vand.u32 %v89, 4294901760
    %v364 = vsub.f32 %v89, %v363
    %v365 = vand.u32 %v364, 4294901760
    %v366 = vsub.f32 %v364, %v365
    %v367 = vand.u32 %v366, 4294901760
    %368 = vmatpush1.msra.mxu0 %v367
    %v369 = vand.u32 %v84, 4294901760
    %v370 = vsub.f32 %v84, %v369
    %v371 = vand.u32 %v370, 4294901760
    %v372 = vsub.f32 %v370, %v371
    %v373 = vand.u32 %v372, 4294901760
    %374 = vmatprep.subr.mxu0 %v373
    %v375 = vand.u32 %v83, 4294901760
    %v376 = vsub.f32 %v83, %v375
    %v377 = vand.u32 %v376, 4294901760
    %v378 = vsub.f32 %v376, %v377
    %v379 = vand.u32 %v378, 4294901760
    %380 = vmatpush1.msra.mxu0 %v379
    %381 = vmatprep.subr.mxu0 0.0
    %382 = vmatpush2.msra.mxu0 0.0
    %383 = vmatprep.subr.mxu0 0.0
    %384 = vmatpush2.msra.mxu0 0.0
    %385 = vmatprep.subr.mxu0 0.0
    %386 = vmatpush2.msra.mxu0 0.0
    %387 = vmatprep.subr.mxu0 0.0
    %388 = vmatpush2.msra.mxu0 0.0
    %389 = vmatprep.subr.mxu0 0.0
    %390 = vmatpush2.msra.mxu0 0.0
    %391 = vmatprep.subr.mxu0 0.0
    %392 = vmatpush2.msra.mxu0 0.0
    %393 = vmatprep.subr.mxu0 0.0
    %394 = vmatpush2.msra.mxu0 0.0
    %395 = vmatprep.subr.mxu0 0.0
    %396 = vmatpush2.msra.mxu0 0.0
    %397 = vmatprep.subr.mxu0 0.0
    %398 = vmatpush2.msra.mxu0 0.0
    %399 = vmatprep.subr.mxu0 0.0
    %400 = vmatpush2.msra.mxu0 0.0
    %401 = vmatprep.subr.mxu0 0.0
    %402 = vmatpush2.msra.mxu0 0.0
    %403 = vmatprep.subr.mxu0 0.0
    %404 = vmatpush2.msra.mxu0 0.0
    %405 = vmatprep.subr.mxu0 0.0
    %406 = vmatpush2.msra.mxu0 0.0
    %407 = vmatprep.subr.mxu0 0.0
    %408 = vmatpush2.msra.mxu0 0.0
    %409 = vmatprep.subr.mxu0 0.0
    %410 = vmatpush2.msra.mxu0 0.0
    %411 = vmatprep.subr.mxu0 0.0
    %412 = vmatpush2.msra.mxu0 0.0
    %413 = vmatprep.mubr.f32.mxu0 0.0
    %v414 = vand.u32 %v133, 4294901760
    %415 = vmatmul.mubr.f32.gmra.mxu0 %v414
    %v416 = vpop.f32.mrf.mxu0
    %v417 = vadd.f32 %v232, %v416
    %v418 = vpop.f32.mrf.mxu0
    %v419 = vadd.f32 %v234, %v418
    %420 = vmatprep.mubr.f32.mxu0 0.0
    %v421 = vand.u32 %v136, 4294901760
    %422 = vmatmul.mubr.f32.gmra.mxu0 %v421
    %v423 = vpop.f32.mrf.mxu0
    %v424 = vadd.f32 %v243, %v423
    %v425 = vpop.f32.mrf.mxu0
    %v426 = vadd.f32 %v245, %v425
    %427 = vmatprep.mubr.f32.mxu0 0.0
    %v428 = vand.u32 %v139, 4294901760
    %429 = vmatmul.mubr.f32.gmra.mxu0 %v428
    %v430 = vpop.f32.mrf.mxu0
    %v431 = vadd.f32 %v254, %v430
    %v432 = vpop.f32.mrf.mxu0
    %v433 = vadd.f32 %v256, %v432
    %434 = vmatprep.mubr.f32.mxu0 0.0
    %v435 = vand.u32 %v142, 4294901760
    %436 = vmatmul.mubr.f32.gmra.mxu0 %v435
    %v437 = vpop.f32.mrf.mxu0
    %v438 = vadd.f32 %v265, %v437
    %v439 = vpop.f32.mrf.mxu0
    %v440 = vadd.f32 %v267, %v439
    %441 = vdwg.mxu0
    %442 = vmatprep.subr.mxu0 0.0
    %443 = vmatpush1.msra.mxu0 0.0
    %444 = vmatprep.subr.mxu0 0.0
    %445 = vmatpush1.msra.mxu0 0.0
    %446 = vmatprep.subr.mxu0 0.0
    %447 = vmatpush1.msra.mxu0 0.0
    %448 = vmatprep.subr.mxu0 0.0
    %449 = vmatpush1.msra.mxu0 0.0
    %450 = vmatprep.subr.mxu0 0.0
    %451 = vmatpush1.msra.mxu0 0.0
    %452 = vmatprep.subr.mxu0 0.0
    %453 = vmatpush1.msra.mxu0 0.0
    %454 = vmatprep.subr.mxu0 0.0
    %455 = vmatpush1.msra.mxu0 0.0
    %456 = vmatprep.subr.mxu0 0.0
    %457 = vmatpush1.msra.mxu0 0.0
    %v458 = vand.u32 %v126, 4294901760
    %v459 = vsub.f32 %v126, %v458
    %460 = vmatprep.subr.mxu0 %v459
    %v461 = vand.u32 %v125, 4294901760
    %v462 = vsub.f32 %v125, %v461
    %463 = vmatpush1.msra.mxu0 %v462
    %v464 = vand.u32 %v120, 4294901760
    %v465 = vsub.f32 %v120, %v464
    %466 = vmatprep.subr.mxu0 %v465
    %v467 = vand.u32 %v119, 4294901760
    %v468 = vsub.f32 %v119, %v467
    %469 = vmatpush1.msra.mxu0 %v468
    %v470 = vand.u32 %v114, 4294901760
    %v471 = vsub.f32 %v114, %v470
    %472 = vmatprep.subr.mxu0 %v471
    %v473 = vand.u32 %v113, 4294901760
    %v474 = vsub.f32 %v113, %v473
    %475 = vmatpush1.msra.mxu0 %v474
    %v476 = vand.u32 %v108, 4294901760
    %v477 = vsub.f32 %v108, %v476
    %478 = vmatprep.subr.mxu0 %v477
    %v479 = vand.u32 %v107, 4294901760
    %v480 = vsub.f32 %v107, %v479
    %481 = vmatpush1.msra.mxu0 %v480
    %v482 = vand.u32 %v102, 4294901760
    %v483 = vsub.f32 %v102, %v482
    %484 = vmatprep.subr.mxu0 %v483
    %v485 = vand.u32 %v101, 4294901760
    %v486 = vsub.f32 %v101, %v485
    %487 = vmatpush1.msra.mxu0 %v486
    %v488 = vand.u32 %v96, 4294901760
    %v489 = vsub.f32 %v96, %v488
    %490 = vmatprep.subr.mxu0 %v489
    %v491 = vand.u32 %v95, 4294901760
    %v492 = vsub.f32 %v95, %v491
    %493 = vmatpush1.msra.mxu0 %v492
    %v494 = vand.u32 %v90, 4294901760
    %v495 = vsub.f32 %v90, %v494
    %496 = vmatprep.subr.mxu0 %v495
    %v497 = vand.u32 %v89, 4294901760
    %v498 = vsub.f32 %v89, %v497
    %499 = vmatpush1.msra.mxu0 %v498
    %v500 = vand.u32 %v84, 4294901760
    %v501 = vsub.f32 %v84, %v500
    %502 = vmatprep.subr.mxu0 %v501
    %v503 = vand.u32 %v83, 4294901760
    %v504 = vsub.f32 %v83, %v503
    %505 = vmatpush1.msra.mxu0 %v504
    %506 = vmatprep.subr.mxu0 0.0
    %507 = vmatpush2.msra.mxu0 0.0
    %508 = vmatprep.subr.mxu0 0.0
    %509 = vmatpush2.msra.mxu0 0.0
    %510 = vmatprep.subr.mxu0 0.0
    %511 = vmatpush2.msra.mxu0 0.0
    %512 = vmatprep.subr.mxu0 0.0
    %513 = vmatpush2.msra.mxu0 0.0
    %514 = vmatprep.subr.mxu0 0.0
    %515 = vmatpush2.msra.mxu0 0.0
    %516 = vmatprep.subr.mxu0 0.0
    %517 = vmatpush2.msra.mxu0 0.0
    %518 = vmatprep.subr.mxu0 0.0
    %519 = vmatpush2.msra.mxu0 0.0
    %520 = vmatprep.subr.mxu0 0.0
    %521 = vmatpush2.msra.mxu0 0.0
    %522 = vmatprep.subr.mxu0 0.0
    %523 = vmatpush2.msra.mxu0 0.0
    %524 = vmatprep.subr.mxu0 0.0
    %525 = vmatpush2.msra.mxu0 0.0
    %526 = vmatprep.subr.mxu0 0.0
    %527 = vmatpush2.msra.mxu0 0.0
    %528 = vmatprep.subr.mxu0 0.0
    %529 = vmatpush2.msra.mxu0 0.0
    %530 = vmatprep.subr.mxu0 0.0
    %531 = vmatpush2.msra.mxu0 0.0
    %532 = vmatprep.subr.mxu0 0.0
    %533 = vmatpush2.msra.mxu0 0.0
    %534 = vmatprep.subr.mxu0 0.0
    %535 = vmatpush2.msra.mxu0 0.0
    %536 = vmatprep.subr.mxu0 0.0
    %537 = vmatpush2.msra.mxu0 0.0
    %538 = vmatprep.mubr.f32.mxu0 0.0
    %v539 = vand.u32 %v133, 4294901760
    %v540 = vsub.f32 %v133, %v539
    %541 = vmatmul.mubr.f32.gmra.mxu0 %v540
    %v542 = vpop.f32.mrf.mxu0
    %v543 = vadd.f32 %v417, %v542
    %v544 = vpop.f32.mrf.mxu0
    %v545 = vadd.f32 %v419, %v544
    %546 = vmatprep.mubr.f32.mxu0 0.0
    %v547 = vand.u32 %v136, 4294901760
    %v548 = vsub.f32 %v136, %v547
    %549 = vmatmul.mubr.f32.gmra.mxu0 %v548
    %v550 = vpop.f32.mrf.mxu0
    %v551 = vadd.f32 %v424, %v550
    %v552 = vpop.f32.mrf.mxu0
    %v553 = vadd.f32 %v426, %v552
    %554 = vmatprep.mubr.f32.mxu0 0.0
    %v555 = vand.u32 %v139, 4294901760
    %v556 = vsub.f32 %v139, %v555
    %557 = vmatmul.mubr.f32.gmra.mxu0 %v556
    %v558 = vpop.f32.mrf.mxu0
    %v559 = vadd.f32 %v431, %v558
    %v560 = vpop.f32.mrf.mxu0
    %v561 = vadd.f32 %v433, %v560
    %562 = vmatprep.mubr.f32.mxu0 0.0
    %v563 = vand.u32 %v142, 4294901760
    %v564 = vsub.f32 %v142, %v563
    %565 = vmatmul.mubr.f32.gmra.mxu0 %v564
    %v566 = vpop.f32.mrf.mxu0
    %v567 = vadd.f32 %v438, %v566
    %v568 = vpop.f32.mrf.mxu0
    %v569 = vadd.f32 %v440, %v568
    %570 = vdwg.mxu0
    %571 = vmatprep.subr.mxu0 0.0
    %572 = vmatpush1.msra.mxu0 0.0
    %573 = vmatprep.subr.mxu0 0.0
    %574 = vmatpush1.msra.mxu0 0.0
    %575 = vmatprep.subr.mxu0 0.0
    %576 = vmatpush1.msra.mxu0 0.0
    %577 = vmatprep.subr.mxu0 0.0
    %578 = vmatpush1.msra.mxu0 0.0
    %579 = vmatprep.subr.mxu0 0.0
    %580 = vmatpush1.msra.mxu0 0.0
    %581 = vmatprep.subr.mxu0 0.0
    %582 = vmatpush1.msra.mxu0 0.0
    %583 = vmatprep.subr.mxu0 0.0
    %584 = vmatpush1.msra.mxu0 0.0
    %585 = vmatprep.subr.mxu0 0.0
    %586 = vmatpush1.msra.mxu0 0.0
    %v587 = vand.u32 %v126, 4294901760
    %588 = vmatprep.subr.mxu0 %v587
    %v589 = vand.u32 %v125, 4294901760
    %590 = vmatpush1.msra.mxu0 %v589
    %v591 = vand.u32 %v120, 4294901760
    %592 = vmatprep.subr.mxu0 %v591
    %v593 = vand.u32 %v119, 4294901760
    %594 = vmatpush1.msra.mxu0 %v593
    %v595 = vand.u32 %v114, 4294901760
    %596 = vmatprep.subr.mxu0 %v595
    %v597 = vand.u32 %v113, 4294901760
    %598 = vmatpush1.msra.mxu0 %v597
    %v599 = vand.u32 %v108, 4294901760
    %600 = vmatprep.subr.mxu0 %v599
    %v601 = vand.u32 %v107, 4294901760
    %602 = vmatpush1.msra.mxu0 %v601
    %v603 = vand.u32 %v102, 4294901760
    %604 = vmatprep.subr.mxu0 %v603
    %v605 = vand.u32 %v101, 4294901760
    %606 = vmatpush1.msra.mxu0 %v605
    %v607 = vand.u32 %v96, 4294901760
    %608 = vmatprep.subr.mxu0 %v607
    %v609 = vand.u32 %v95, 4294901760
    %610 = vmatpush1.msra.mxu0 %v609
    %v611 = vand.u32 %v90, 4294901760
    %612 = vmatprep.subr.mxu0 %v611
    %v613 = vand.u32 %v89, 4294901760
    %614 = vmatpush1.msra.mxu0 %v613
    %v615 = vand.u32 %v84, 4294901760
    %616 = vmatprep.subr.mxu0 %v615
    %v617 = vand.u32 %v83, 4294901760
    %618 = vmatpush1.msra.mxu0 %v617
    %619 = vmatprep.subr.mxu0 0.0
    %620 = vmatpush2.msra.mxu0 0.0
    %621 = vmatprep.subr.mxu0 0.0
    %622 = vmatpush2.msra.mxu0 0.0
    %623 = vmatprep.subr.mxu0 0.0
    %624 = vmatpush2.msra.mxu0 0.0
    %625 = vmatprep.subr.mxu0 0.0
    %626 = vmatpush2.msra.mxu0 0.0
    %627 = vmatprep.subr.mxu0 0.0
    %628 = vmatpush2.msra.mxu0 0.0
    %629 = vmatprep.subr.mxu0 0.0
    %630 = vmatpush2.msra.mxu0 0.0
    %631 = vmatprep.subr.mxu0 0.0
    %632 = vmatpush2.msra.mxu0 0.0
    %633 = vmatprep.subr.mxu0 0.0
    %634 = vmatpush2.msra.mxu0 0.0
    %635 = vmatprep.subr.mxu0 0.0
    %636 = vmatpush2.msra.mxu0 0.0
    %637 = vmatprep.subr.mxu0 0.0
    %638 = vmatpush2.msra.mxu0 0.0
    %639 = vmatprep.subr.mxu0 0.0
    %640 = vmatpush2.msra.mxu0 0.0
    %641 = vmatprep.subr.mxu0 0.0
    %642 = vmatpush2.msra.mxu0 0.0
    %643 = vmatprep.subr.mxu0 0.0
    %644 = vmatpush2.msra.mxu0 0.0
    %645 = vmatprep.subr.mxu0 0.0
    %646 = vmatpush2.msra.mxu0 0.0
    %647 = vmatprep.subr.mxu0 0.0
    %648 = vmatpush2.msra.mxu0 0.0
    %649 = vmatprep.subr.mxu0 0.0
    %650 = vmatpush2.msra.mxu0 0.0
    %651 = vmatprep.mubr.f32.mxu0 0.0
    %v652 = vand.u32 %v133, 4294901760
    %v653 = vsub.f32 %v133, %v652
    %v654 = vand.u32 %v653, 4294901760
    %655 = vmatmul.mubr.f32.gmra.mxu0 %v654
    %v656 = vpop.f32.mrf.mxu0
    %v657 = vadd.f32 %v543, %v656
    %v658 = vpop.f32.mrf.mxu0
    %v659 = vadd.f32 %v545, %v658
    %660 = vmatprep.mubr.f32.mxu0 0.0
    %v661 = vand.u32 %v136, 4294901760
    %v662 = vsub.f32 %v136, %v661
    %v663 = vand.u32 %v662, 4294901760
    %664 = vmatmul.mubr.f32.gmra.mxu0 %v663
    %v665 = vpop.f32.mrf.mxu0
    %v666 = vadd.f32 %v551, %v665
    %v667 = vpop.f32.mrf.mxu0
    %v668 = vadd.f32 %v553, %v667
    %669 = vmatprep.mubr.f32.mxu0 0.0
    %v670 = vand.u32 %v139, 4294901760
    %v671 = vsub.f32 %v139, %v670
    %v672 = vand.u32 %v671, 4294901760
    %673 = vmatmul.mubr.f32.gmra.mxu0 %v672
    %v674 = vpop.f32.mrf.mxu0
    %v675 = vadd.f32 %v559, %v674
    %v676 = vpop.f32.mrf.mxu0
    %v677 = vadd.f32 %v561, %v676
    %678 = vmatprep.mubr.f32.mxu0 0.0
    %v679 = vand.u32 %v142, 4294901760
    %v680 = vsub.f32 %v142, %v679
    %v681 = vand.u32 %v680, 4294901760
    %682 = vmatmul.mubr.f32.gmra.mxu0 %v681
    %v683 = vpop.f32.mrf.mxu0
    %v684 = vadd.f32 %v567, %v683
    %v685 = vpop.f32.mrf.mxu0
    %v686 = vadd.f32 %v569, %v685
    %687 = vdwg.mxu0
    %688 = vmatprep.subr.mxu0 0.0
    %689 = vmatpush1.msra.mxu0 0.0
    %690 = vmatprep.subr.mxu0 0.0
    %691 = vmatpush1.msra.mxu0 0.0
    %692 = vmatprep.subr.mxu0 0.0
    %693 = vmatpush1.msra.mxu0 0.0
    %694 = vmatprep.subr.mxu0 0.0
    %695 = vmatpush1.msra.mxu0 0.0
    %696 = vmatprep.subr.mxu0 0.0
    %697 = vmatpush1.msra.mxu0 0.0
    %698 = vmatprep.subr.mxu0 0.0
    %699 = vmatpush1.msra.mxu0 0.0
    %700 = vmatprep.subr.mxu0 0.0
    %701 = vmatpush1.msra.mxu0 0.0
    %702 = vmatprep.subr.mxu0 0.0
    %703 = vmatpush1.msra.mxu0 0.0
    %v704 = vand.u32 %v126, 4294901760
    %v705 = vsub.f32 %v126, %v704
    %v706 = vand.u32 %v705, 4294901760
    %707 = vmatprep.subr.mxu0 %v706
    %v708 = vand.u32 %v125, 4294901760
    %v709 = vsub.f32 %v125, %v708
    %v710 = vand.u32 %v709, 4294901760
    %711 = vmatpush1.msra.mxu0 %v710
    %v712 = vand.u32 %v120, 4294901760
    %v713 = vsub.f32 %v120, %v712
    %v714 = vand.u32 %v713, 4294901760
    %715 = vmatprep.subr.mxu0 %v714
    %v716 = vand.u32 %v119, 4294901760
    %v717 = vsub.f32 %v119, %v716
    %v718 = vand.u32 %v717, 4294901760
    %719 = vmatpush1.msra.mxu0 %v718
    %v720 = vand.u32 %v114, 4294901760
    %v721 = vsub.f32 %v114, %v720
    %v722 = vand.u32 %v721, 4294901760
    %723 = vmatprep.subr.mxu0 %v722
    %v724 = vand.u32 %v113, 4294901760
    %v725 = vsub.f32 %v113, %v724
    %v726 = vand.u32 %v725, 4294901760
    %727 = vmatpush1.msra.mxu0 %v726
    %v728 = vand.u32 %v108, 4294901760
    %v729 = vsub.f32 %v108, %v728
    %v730 = vand.u32 %v729, 4294901760
    %731 = vmatprep.subr.mxu0 %v730
    %v732 = vand.u32 %v107, 4294901760
    %v733 = vsub.f32 %v107, %v732
    %v734 = vand.u32 %v733, 4294901760
    %735 = vmatpush1.msra.mxu0 %v734
    %v736 = vand.u32 %v102, 4294901760
    %v737 = vsub.f32 %v102, %v736
    %v738 = vand.u32 %v737, 4294901760
    %739 = vmatprep.subr.mxu0 %v738
    %v740 = vand.u32 %v101, 4294901760
    %v741 = vsub.f32 %v101, %v740
    %v742 = vand.u32 %v741, 4294901760
    %743 = vmatpush1.msra.mxu0 %v742
    %v744 = vand.u32 %v96, 4294901760
    %v745 = vsub.f32 %v96, %v744
    %v746 = vand.u32 %v745, 4294901760
    %747 = vmatprep.subr.mxu0 %v746
    %v748 = vand.u32 %v95, 4294901760
    %v749 = vsub.f32 %v95, %v748
    %v750 = vand.u32 %v749, 4294901760
    %751 = vmatpush1.msra.mxu0 %v750
    %v752 = vand.u32 %v90, 4294901760
    %v753 = vsub.f32 %v90, %v752
    %v754 = vand.u32 %v753, 4294901760
    %755 = vmatprep.subr.mxu0 %v754
    %v756 = vand.u32 %v89, 4294901760
    %v757 = vsub.f32 %v89, %v756
    %v758 = vand.u32 %v757, 4294901760
    %759 = vmatpush1.msra.mxu0 %v758
    %v760 = vand.u32 %v84, 4294901760
    %v761 = vsub.f32 %v84, %v760
    %v762 = vand.u32 %v761, 4294901760
    %763 = vmatprep.subr.mxu0 %v762
    %v764 = vand.u32 %v83, 4294901760
    %v765 = vsub.f32 %v83, %v764
    %v766 = vand.u32 %v765, 4294901760
    %767 = vmatpush1.msra.mxu0 %v766
    %768 = vmatprep.subr.mxu0 0.0
    %769 = vmatpush2.msra.mxu0 0.0
    %770 = vmatprep.subr.mxu0 0.0
    %771 = vmatpush2.msra.mxu0 0.0
    %772 = vmatprep.subr.mxu0 0.0
    %773 = vmatpush2.msra.mxu0 0.0
    %774 = vmatprep.subr.mxu0 0.0
    %775 = vmatpush2.msra.mxu0 0.0
    %776 = vmatprep.subr.mxu0 0.0
    %777 = vmatpush2.msra.mxu0 0.0
    %778 = vmatprep.subr.mxu0 0.0
    %779 = vmatpush2.msra.mxu0 0.0
    %780 = vmatprep.subr.mxu0 0.0
    %781 = vmatpush2.msra.mxu0 0.0
    %782 = vmatprep.subr.mxu0 0.0
    %783 = vmatpush2.msra.mxu0 0.0
    %784 = vmatprep.subr.mxu0 0.0
    %785 = vmatpush2.msra.mxu0 0.0
    %786 = vmatprep.subr.mxu0 0.0
    %787 = vmatpush2.msra.mxu0 0.0
    %788 = vmatprep.subr.mxu0 0.0
    %789 = vmatpush2.msra.mxu0 0.0
    %790 = vmatprep.subr.mxu0 0.0
    %791 = vmatpush2.msra.mxu0 0.0
    %792 = vmatprep.subr.mxu0 0.0
    %793 = vmatpush2.msra.mxu0 0.0
    %794 = vmatprep.subr.mxu0 0.0
    %795 = vmatpush2.msra.mxu0 0.0
    %796 = vmatprep.subr.mxu0 0.0
    %797 = vmatpush2.msra.mxu0 0.0
    %798 = vmatprep.subr.mxu0 0.0
    %799 = vmatpush2.msra.mxu0 0.0
    %800 = vmatprep.mubr.f32.mxu0 0.0
    %v801 = vand.u32 %v133, 4294901760
    %802 = vmatmul.mubr.f32.gmra.mxu0 %v801
    %v803 = vpop.f32.mrf.mxu0
    %v804 = vadd.f32 %v657, %v803
    %v805 = vpop.f32.mrf.mxu0
    %v806 = vadd.f32 %v659, %v805
    %807 = vmatprep.mubr.f32.mxu0 0.0
    %v808 = vand.u32 %v136, 4294901760
    %809 = vmatmul.mubr.f32.gmra.mxu0 %v808
    %v810 = vpop.f32.mrf.mxu0
    %v811 = vadd.f32 %v666, %v810
    %v812 = vpop.f32.mrf.mxu0
    %v813 = vadd.f32 %v668, %v812
    %814 = vmatprep.mubr.f32.mxu0 0.0
    %v815 = vand.u32 %v139, 4294901760
    %816 = vmatmul.mubr.f32.gmra.mxu0 %v815
    %v817 = vpop.f32.mrf.mxu0
    %v818 = vadd.f32 %v675, %v817
    %v819 = vpop.f32.mrf.mxu0
    %v820 = vadd.f32 %v677, %v819
    %821 = vmatprep.mubr.f32.mxu0 0.0
    %v822 = vand.u32 %v142, 4294901760
    %823 = vmatmul.mubr.f32.gmra.mxu0 %v822
    %v824 = vpop.f32.mrf.mxu0
    %v825 = vadd.f32 %v684, %v824
    %v826 = vpop.f32.mrf.mxu0
    %v827 = vadd.f32 %v686, %v826
    %828 = vdwg.mxu0
    %829 = vmatprep.subr.mxu0 0.0
    %830 = vmatpush1.msra.mxu0 0.0
    %831 = vmatprep.subr.mxu0 0.0
    %832 = vmatpush1.msra.mxu0 0.0
    %833 = vmatprep.subr.mxu0 0.0
    %834 = vmatpush1.msra.mxu0 0.0
    %835 = vmatprep.subr.mxu0 0.0
    %836 = vmatpush1.msra.mxu0 0.0
    %837 = vmatprep.subr.mxu0 0.0
    %838 = vmatpush1.msra.mxu0 0.0
    %839 = vmatprep.subr.mxu0 0.0
    %840 = vmatpush1.msra.mxu0 0.0
    %841 = vmatprep.subr.mxu0 0.0
    %842 = vmatpush1.msra.mxu0 0.0
    %843 = vmatprep.subr.mxu0 0.0
    %844 = vmatpush1.msra.mxu0 0.0
    %v845 = vand.u32 %v126, 4294901760
    %846 = vmatprep.subr.mxu0 %v845
    %v847 = vand.u32 %v125, 4294901760
    %848 = vmatpush1.msra.mxu0 %v847
    %v849 = vand.u32 %v120, 4294901760
    %850 = vmatprep.subr.mxu0 %v849
    %v851 = vand.u32 %v119, 4294901760
    %852 = vmatpush1.msra.mxu0 %v851
    %v853 = vand.u32 %v114, 4294901760
    %854 = vmatprep.subr.mxu0 %v853
    %v855 = vand.u32 %v113, 4294901760
    %856 = vmatpush1.msra.mxu0 %v855
    %v857 = vand.u32 %v108, 4294901760
    %858 = vmatprep.subr.mxu0 %v857
    %v859 = vand.u32 %v107, 4294901760
    %860 = vmatpush1.msra.mxu0 %v859
    %v861 = vand.u32 %v102, 4294901760
    %862 = vmatprep.subr.mxu0 %v861
    %v863 = vand.u32 %v101, 4294901760
    %864 = vmatpush1.msra.mxu0 %v863
    %v865 = vand.u32 %v96, 4294901760
    %866 = vmatprep.subr.mxu0 %v865
    %v867 = vand.u32 %v95, 4294901760
    %868 = vmatpush1.msra.mxu0 %v867
    %v869 = vand.u32 %v90, 4294901760
    %870 = vmatprep.subr.mxu0 %v869
    %v871 = vand.u32 %v89, 4294901760
    %872 = vmatpush1.msra.mxu0 %v871
    %v873 = vand.u32 %v84, 4294901760
    %874 = vmatprep.subr.mxu0 %v873
    %v875 = vand.u32 %v83, 4294901760
    %876 = vmatpush1.msra.mxu0 %v875
    %877 = vmatprep.subr.mxu0 0.0
    %878 = vmatpush2.msra.mxu0 0.0
    %879 = vmatprep.subr.mxu0 0.0
    %880 = vmatpush2.msra.mxu0 0.0
    %881 = vmatprep.subr.mxu0 0.0
    %882 = vmatpush2.msra.mxu0 0.0
    %883 = vmatprep.subr.mxu0 0.0
    %884 = vmatpush2.msra.mxu0 0.0
    %885 = vmatprep.subr.mxu0 0.0
    %886 = vmatpush2.msra.mxu0 0.0
    %887 = vmatprep.subr.mxu0 0.0
    %888 = vmatpush2.msra.mxu0 0.0
    %889 = vmatprep.subr.mxu0 0.0
    %890 = vmatpush2.msra.mxu0 0.0
    %891 = vmatprep.subr.mxu0 0.0
    %892 = vmatpush2.msra.mxu0 0.0
    %893 = vmatprep.subr.mxu0 0.0
    %894 = vmatpush2.msra.mxu0 0.0
    %895 = vmatprep.subr.mxu0 0.0
    %896 = vmatpush2.msra.mxu0 0.0
    %897 = vmatprep.subr.mxu0 0.0
    %898 = vmatpush2.msra.mxu0 0.0
    %899 = vmatprep.subr.mxu0 0.0
    %900 = vmatpush2.msra.mxu0 0.0
    %901 = vmatprep.subr.mxu0 0.0
    %902 = vmatpush2.msra.mxu0 0.0
    %903 = vmatprep.subr.mxu0 0.0
    %904 = vmatpush2.msra.mxu0 0.0
    %905 = vmatprep.subr.mxu0 0.0
    %906 = vmatpush2.msra.mxu0 0.0
    %907 = vmatprep.subr.mxu0 0.0
    %908 = vmatpush2.msra.mxu0 0.0
    %909 = vmatprep.mubr.f32.mxu0 0.0
    %v910 = vand.u32 %v133, 4294901760
    %911 = vmatmul.mubr.f32.gmra.mxu0 %v910
    %v912 = vpop.f32.mrf.mxu0
    %v913 = vadd.f32 %v804, %v912
    %v914 = vpop.f32.mrf.mxu0
    %v915 = vadd.f32 %v806, %v914
    %916 = vmatprep.mubr.f32.mxu0 0.0
    %v917 = vand.u32 %v136, 4294901760
    %918 = vmatmul.mubr.f32.gmra.mxu0 %v917
    %v919 = vpop.f32.mrf.mxu0
    %v920 = vadd.f32 %v811, %v919
    %v921 = vpop.f32.mrf.mxu0
    %v922 = vadd.f32 %v813, %v921
    %923 = vmatprep.mubr.f32.mxu0 0.0
    %v924 = vand.u32 %v139, 4294901760
    %925 = vmatmul.mubr.f32.gmra.mxu0 %v924
    %v926 = vpop.f32.mrf.mxu0
    %v927 = vadd.f32 %v818, %v926
    %v928 = vpop.f32.mrf.mxu0
    %v929 = vadd.f32 %v820, %v928
    %930 = vmatprep.mubr.f32.mxu0 0.0
    %v931 = vand.u32 %v142, 4294901760
    %932 = vmatmul.mubr.f32.gmra.mxu0 %v931
    %v933 = vpop.f32.mrf.mxu0
    %v934 = vadd.f32 %v825, %v933
    %v935 = vpop.f32.mrf.mxu0
    %v936 = vadd.f32 %v827, %v935
    %937 = vdwg.mxu0
    %938 = vmatprep.subr.mxu0 0.0
    %939 = vmatpush1.msra.mxu0 0.0
    %940 = vmatprep.subr.mxu0 0.0
    %941 = vmatpush1.msra.mxu0 0.0
    %942 = vmatprep.subr.mxu0 0.0
    %943 = vmatpush1.msra.mxu0 0.0
    %944 = vmatprep.subr.mxu0 0.0
    %945 = vmatpush1.msra.mxu0 0.0
    %946 = vmatprep.subr.mxu0 0.0
    %947 = vmatpush1.msra.mxu0 0.0
    %948 = vmatprep.subr.mxu0 0.0
    %949 = vmatpush1.msra.mxu0 0.0
    %950 = vmatprep.subr.mxu0 0.0
    %951 = vmatpush1.msra.mxu0 0.0
    %952 = vmatprep.subr.mxu0 0.0
    %953 = vmatpush1.msra.mxu0 0.0
    %v954 = vand.u32 %v128, 4294901760
    %955 = vmatprep.subr.mxu0 %v954
    %v956 = vand.u32 %v127, 4294901760
    %957 = vmatpush1.msra.mxu0 %v956
    %v958 = vand.u32 %v122, 4294901760
    %959 = vmatprep.subr.mxu0 %v958
    %v960 = vand.u32 %v121, 4294901760
    %961 = vmatpush1.msra.mxu0 %v960
    %v962 = vand.u32 %v116, 4294901760
    %963 = vmatprep.subr.mxu0 %v962
    %v964 = vand.u32 %v115, 4294901760
    %965 = vmatpush1.msra.mxu0 %v964
    %v966 = vand.u32 %v110, 4294901760
    %967 = vmatprep.subr.mxu0 %v966
    %v968 = vand.u32 %v109, 4294901760
    %969 = vmatpush1.msra.mxu0 %v968
    %v970 = vand.u32 %v104, 4294901760
    %971 = vmatprep.subr.mxu0 %v970
    %v972 = vand.u32 %v103, 4294901760
    %973 = vmatpush1.msra.mxu0 %v972
    %v974 = vand.u32 %v98, 4294901760
    %975 = vmatprep.subr.mxu0 %v974
    %v976 = vand.u32 %v97, 4294901760
    %977 = vmatpush1.msra.mxu0 %v976
    %v978 = vand.u32 %v92, 4294901760
    %979 = vmatprep.subr.mxu0 %v978
    %v980 = vand.u32 %v91, 4294901760
    %981 = vmatpush1.msra.mxu0 %v980
    %v982 = vand.u32 %v86, 4294901760
    %983 = vmatprep.subr.mxu0 %v982
    %v984 = vand.u32 %v85, 4294901760
    %985 = vmatpush1.msra.mxu0 %v984
    %986 = vmatprep.subr.mxu0 0.0
    %987 = vmatpush2.msra.mxu0 0.0
    %988 = vmatprep.subr.mxu0 0.0
    %989 = vmatpush2.msra.mxu0 0.0
    %990 = vmatprep.subr.mxu0 0.0
    %991 = vmatpush2.msra.mxu0 0.0
    %992 = vmatprep.subr.mxu0 0.0
    %993 = vmatpush2.msra.mxu0 0.0
    %994 = vmatprep.subr.mxu0 0.0
    %995 = vmatpush2.msra.mxu0 0.0
    %996 = vmatprep.subr.mxu0 0.0
    %997 = vmatpush2.msra.mxu0 0.0
    %998 = vmatprep.subr.mxu0 0.0
    %999 = vmatpush2.msra.mxu0 0.0
    %1000 = vmatprep.subr.mxu0 0.0
    %1001 = vmatpush2.msra.mxu0 0.0
    %1002 = vmatprep.subr.mxu0 0.0
    %1003 = vmatpush2.msra.mxu0 0.0
    %1004 = vmatprep.subr.mxu0 0.0
    %1005 = vmatpush2.msra.mxu0 0.0
    %1006 = vmatprep.subr.mxu0 0.0
    %1007 = vmatpush2.msra.mxu0 0.0
    %1008 = vmatprep.subr.mxu0 0.0
    %1009 = vmatpush2.msra.mxu0 0.0
    %1010 = vmatprep.subr.mxu0 0.0
    %1011 = vmatpush2.msra.mxu0 0.0
    %1012 = vmatprep.subr.mxu0 0.0
    %1013 = vmatpush2.msra.mxu0 0.0
    %1014 = vmatprep.subr.mxu0 0.0
    %1015 = vmatpush2.msra.mxu0 0.0
    %1016 = vmatprep.subr.mxu0 0.0
    %1017 = vmatpush2.msra.mxu0 0.0
    %1018 = vmatprep.mubr.f32.mxu0 0.0
    %v1019 = vand.u32 %v133, 4294901760
    %v1020 = vsub.f32 %v133, %v1019
    %v1021 = vand.u32 %v1020, 4294901760
    %v1022 = vsub.f32 %v1020, %v1021
    %v1023 = vand.u32 %v1022, 4294901760
    %1024 = vmatmul.mubr.f32.gmra.mxu0 %v1023
    %v1025 = vpop.f32.mrf.mxu0
    %v1026 = vadd.f32 0.0, %v1025
    %v1027 = vpop.f32.mrf.mxu0
    %v1028 = vadd.f32 0.0, %v1027
    %1029 = vmatprep.mubr.f32.mxu0 0.0
    %v1030 = vand.u32 %v136, 4294901760
    %v1031 = vsub.f32 %v136, %v1030
    %v1032 = vand.u32 %v1031, 4294901760
    %v1033 = vsub.f32 %v1031, %v1032
    %v1034 = vand.u32 %v1033, 4294901760
    %1035 = vmatmul.mubr.f32.gmra.mxu0 %v1034
    %v1036 = vpop.f32.mrf.mxu0
    %v1037 = vadd.f32 0.0, %v1036
    %v1038 = vpop.f32.mrf.mxu0
    %v1039 = vadd.f32 0.0, %v1038
    %1040 = vmatprep.mubr.f32.mxu0 0.0
    %v1041 = vand.u32 %v139, 4294901760
    %v1042 = vsub.f32 %v139, %v1041
    %v1043 = vand.u32 %v1042, 4294901760
    %v1044 = vsub.f32 %v1042, %v1043
    %v1045 = vand.u32 %v1044, 4294901760
    %1046 = vmatmul.mubr.f32.gmra.mxu0 %v1045
    %v1047 = vpop.f32.mrf.mxu0
    %v1048 = vadd.f32 0.0, %v1047
    %v1049 = vpop.f32.mrf.mxu0
    %v1050 = vadd.f32 0.0, %v1049
    %1051 = vmatprep.mubr.f32.mxu0 0.0
    %v1052 = vand.u32 %v142, 4294901760
    %v1053 = vsub.f32 %v142, %v1052
    %v1054 = vand.u32 %v1053, 4294901760
    %v1055 = vsub.f32 %v1053, %v1054
    %v1056 = vand.u32 %v1055, 4294901760
    %1057 = vmatmul.mubr.f32.gmra.mxu0 %v1056
    %v1058 = vpop.f32.mrf.mxu0
    %v1059 = vadd.f32 0.0, %v1058
    %v1060 = vpop.f32.mrf.mxu0
    %v1061 = vadd.f32 0.0, %v1060
    %1062 = vdwg.mxu0
    %1063 = vmatprep.subr.mxu0 0.0
    %1064 = vmatpush1.msra.mxu0 0.0
    %1065 = vmatprep.subr.mxu0 0.0
    %1066 = vmatpush1.msra.mxu0 0.0
    %1067 = vmatprep.subr.mxu0 0.0
    %1068 = vmatpush1.msra.mxu0 0.0
    %1069 = vmatprep.subr.mxu0 0.0
    %1070 = vmatpush1.msra.mxu0 0.0
    %1071 = vmatprep.subr.mxu0 0.0
    %1072 = vmatpush1.msra.mxu0 0.0
    %1073 = vmatprep.subr.mxu0 0.0
    %1074 = vmatpush1.msra.mxu0 0.0
    %1075 = vmatprep.subr.mxu0 0.0
    %1076 = vmatpush1.msra.mxu0 0.0
    %1077 = vmatprep.subr.mxu0 0.0
    %1078 = vmatpush1.msra.mxu0 0.0
    %v1079 = vand.u32 %v128, 4294901760
    %v1080 = vsub.f32 %v128, %v1079
    %v1081 = vand.u32 %v1080, 4294901760
    %v1082 = vsub.f32 %v1080, %v1081
    %v1083 = vand.u32 %v1082, 4294901760
    %1084 = vmatprep.subr.mxu0 %v1083
    %v1085 = vand.u32 %v127, 4294901760
    %v1086 = vsub.f32 %v127, %v1085
    %v1087 = vand.u32 %v1086, 4294901760
    %v1088 = vsub.f32 %v1086, %v1087
    %v1089 = vand.u32 %v1088, 4294901760
    %1090 = vmatpush1.msra.mxu0 %v1089
    %v1091 = vand.u32 %v122, 4294901760
    %v1092 = vsub.f32 %v122, %v1091
    %v1093 = vand.u32 %v1092, 4294901760
    %v1094 = vsub.f32 %v1092, %v1093
    %v1095 = vand.u32 %v1094, 4294901760
    %1096 = vmatprep.subr.mxu0 %v1095
    %v1097 = vand.u32 %v121, 4294901760
    %v1098 = vsub.f32 %v121, %v1097
    %v1099 = vand.u32 %v1098, 4294901760
    %v1100 = vsub.f32 %v1098, %v1099
    %v1101 = vand.u32 %v1100, 4294901760
    %1102 = vmatpush1.msra.mxu0 %v1101
    %v1103 = vand.u32 %v116, 4294901760
    %v1104 = vsub.f32 %v116, %v1103
    %v1105 = vand.u32 %v1104, 4294901760
    %v1106 = vsub.f32 %v1104, %v1105
    %v1107 = vand.u32 %v1106, 4294901760
    %1108 = vmatprep.subr.mxu0 %v1107
    %v1109 = vand.u32 %v115, 4294901760
    %v1110 = vsub.f32 %v115, %v1109
    %v1111 = vand.u32 %v1110, 4294901760
    %v1112 = vsub.f32 %v1110, %v1111
    %v1113 = vand.u32 %v1112, 4294901760
    %1114 = vmatpush1.msra.mxu0 %v1113
    %v1115 = vand.u32 %v110, 4294901760
    %v1116 = vsub.f32 %v110, %v1115
    %v1117 = vand.u32 %v1116, 4294901760
    %v1118 = vsub.f32 %v1116, %v1117
    %v1119 = vand.u32 %v1118, 4294901760
    %1120 = vmatprep.subr.mxu0 %v1119
    %v1121 = vand.u32 %v109, 4294901760
    %v1122 = vsub.f32 %v109, %v1121
    %v1123 = vand.u32 %v1122, 4294901760
    %v1124 = vsub.f32 %v1122, %v1123
    %v1125 = vand.u32 %v1124, 4294901760
    %1126 = vmatpush1.msra.mxu0 %v1125
    %v1127 = vand.u32 %v104, 4294901760
    %v1128 = vsub.f32 %v104, %v1127
    %v1129 = vand.u32 %v1128, 4294901760
    %v1130 = vsub.f32 %v1128, %v1129
    %v1131 = vand.u32 %v1130, 4294901760
    %1132 = vmatprep.subr.mxu0 %v1131
    %v1133 = vand.u32 %v103, 4294901760
    %v1134 = vsub.f32 %v103, %v1133
    %v1135 = vand.u32 %v1134, 4294901760
    %v1136 = vsub.f32 %v1134, %v1135
    %v1137 = vand.u32 %v1136, 4294901760
    %1138 = vmatpush1.msra.mxu0 %v1137
    %v1139 = vand.u32 %v98, 4294901760
    %v1140 = vsub.f32 %v98, %v1139
    %v1141 = vand.u32 %v1140, 4294901760
    %v1142 = vsub.f32 %v1140, %v1141
    %v1143 = vand.u32 %v1142, 4294901760
    %1144 = vmatprep.subr.mxu0 %v1143
    %v1145 = vand.u32 %v97, 4294901760
    %v1146 = vsub.f32 %v97, %v1145
    %v1147 = vand.u32 %v1146, 4294901760
    %v1148 = vsub.f32 %v1146, %v1147
    %v1149 = vand.u32 %v1148, 4294901760
    %1150 = vmatpush1.msra.mxu0 %v1149
    %v1151 = vand.u32 %v92, 4294901760
    %v1152 = vsub.f32 %v92, %v1151
    %v1153 = vand.u32 %v1152, 4294901760
    %v1154 = vsub.f32 %v1152, %v1153
    %v1155 = vand.u32 %v1154, 4294901760
    %1156 = vmatprep.subr.mxu0 %v1155
    %v1157 = vand.u32 %v91, 4294901760
    %v1158 = vsub.f32 %v91, %v1157
    %v1159 = vand.u32 %v1158, 4294901760
    %v1160 = vsub.f32 %v1158, %v1159
    %v1161 = vand.u32 %v1160, 4294901760
    %1162 = vmatpush1.msra.mxu0 %v1161
    %v1163 = vand.u32 %v86, 4294901760
    %v1164 = vsub.f32 %v86, %v1163
    %v1165 = vand.u32 %v1164, 4294901760
    %v1166 = vsub.f32 %v1164, %v1165
    %v1167 = vand.u32 %v1166, 4294901760
    %1168 = vmatprep.subr.mxu0 %v1167
    %v1169 = vand.u32 %v85, 4294901760
    %v1170 = vsub.f32 %v85, %v1169
    %v1171 = vand.u32 %v1170, 4294901760
    %v1172 = vsub.f32 %v1170, %v1171
    %v1173 = vand.u32 %v1172, 4294901760
    %1174 = vmatpush1.msra.mxu0 %v1173
    %1175 = vmatprep.subr.mxu0 0.0
    %1176 = vmatpush2.msra.mxu0 0.0
    %1177 = vmatprep.subr.mxu0 0.0
    %1178 = vmatpush2.msra.mxu0 0.0
    %1179 = vmatprep.subr.mxu0 0.0
    %1180 = vmatpush2.msra.mxu0 0.0
    %1181 = vmatprep.subr.mxu0 0.0
    %1182 = vmatpush2.msra.mxu0 0.0
    %1183 = vmatprep.subr.mxu0 0.0
    %1184 = vmatpush2.msra.mxu0 0.0
    %1185 = vmatprep.subr.mxu0 0.0
    %1186 = vmatpush2.msra.mxu0 0.0
    %1187 = vmatprep.subr.mxu0 0.0
    %1188 = vmatpush2.msra.mxu0 0.0
    %1189 = vmatprep.subr.mxu0 0.0
    %1190 = vmatpush2.msra.mxu0 0.0
    %1191 = vmatprep.subr.mxu0 0.0
    %1192 = vmatpush2.msra.mxu0 0.0
    %1193 = vmatprep.subr.mxu0 0.0
    %1194 = vmatpush2.msra.mxu0 0.0
    %1195 = vmatprep.subr.mxu0 0.0
    %1196 = vmatpush2.msra.mxu0 0.0
    %1197 = vmatprep.subr.mxu0 0.0
    %1198 = vmatpush2.msra.mxu0 0.0
    %1199 = vmatprep.subr.mxu0 0.0
    %1200 = vmatpush2.msra.mxu0 0.0
    %1201 = vmatprep.subr.mxu0 0.0
    %1202 = vmatpush2.msra.mxu0 0.0
    %1203 = vmatprep.subr.mxu0 0.0
    %1204 = vmatpush2.msra.mxu0 0.0
    %1205 = vmatprep.subr.mxu0 0.0
    %1206 = vmatpush2.msra.mxu0 0.0
    %1207 = vmatprep.mubr.f32.mxu0 0.0
    %v1208 = vand.u32 %v133, 4294901760
    %1209 = vmatmul.mubr.f32.gmra.mxu0 %v1208
    %v1210 = vpop.f32.mrf.mxu0
    %v1211 = vadd.f32 %v1026, %v1210
    %v1212 = vpop.f32.mrf.mxu0
    %v1213 = vadd.f32 %v1028, %v1212
    %1214 = vmatprep.mubr.f32.mxu0 0.0
    %v1215 = vand.u32 %v136, 4294901760
    %1216 = vmatmul.mubr.f32.gmra.mxu0 %v1215
    %v1217 = vpop.f32.mrf.mxu0
    %v1218 = vadd.f32 %v1037, %v1217
    %v1219 = vpop.f32.mrf.mxu0
    %v1220 = vadd.f32 %v1039, %v1219
    %1221 = vmatprep.mubr.f32.mxu0 0.0
    %v1222 = vand.u32 %v139, 4294901760
    %1223 = vmatmul.mubr.f32.gmra.mxu0 %v1222
    %v1224 = vpop.f32.mrf.mxu0
    %v1225 = vadd.f32 %v1048, %v1224
    %v1226 = vpop.f32.mrf.mxu0
    %v1227 = vadd.f32 %v1050, %v1226
    %1228 = vmatprep.mubr.f32.mxu0 0.0
    %v1229 = vand.u32 %v142, 4294901760
    %1230 = vmatmul.mubr.f32.gmra.mxu0 %v1229
    %v1231 = vpop.f32.mrf.mxu0
    %v1232 = vadd.f32 %v1059, %v1231
    %v1233 = vpop.f32.mrf.mxu0
    %v1234 = vadd.f32 %v1061, %v1233
    %1235 = vdwg.mxu0
    %1236 = vmatprep.subr.mxu0 0.0
    %1237 = vmatpush1.msra.mxu0 0.0
    %1238 = vmatprep.subr.mxu0 0.0
    %1239 = vmatpush1.msra.mxu0 0.0
    %1240 = vmatprep.subr.mxu0 0.0
    %1241 = vmatpush1.msra.mxu0 0.0
    %1242 = vmatprep.subr.mxu0 0.0
    %1243 = vmatpush1.msra.mxu0 0.0
    %1244 = vmatprep.subr.mxu0 0.0
    %1245 = vmatpush1.msra.mxu0 0.0
    %1246 = vmatprep.subr.mxu0 0.0
    %1247 = vmatpush1.msra.mxu0 0.0
    %1248 = vmatprep.subr.mxu0 0.0
    %1249 = vmatpush1.msra.mxu0 0.0
    %1250 = vmatprep.subr.mxu0 0.0
    %1251 = vmatpush1.msra.mxu0 0.0
    %v1252 = vand.u32 %v128, 4294901760
    %v1253 = vsub.f32 %v128, %v1252
    %1254 = vmatprep.subr.mxu0 %v1253
    %v1255 = vand.u32 %v127, 4294901760
    %v1256 = vsub.f32 %v127, %v1255
    %1257 = vmatpush1.msra.mxu0 %v1256
    %v1258 = vand.u32 %v122, 4294901760
    %v1259 = vsub.f32 %v122, %v1258
    %1260 = vmatprep.subr.mxu0 %v1259
    %v1261 = vand.u32 %v121, 4294901760
    %v1262 = vsub.f32 %v121, %v1261
    %1263 = vmatpush1.msra.mxu0 %v1262
    %v1264 = vand.u32 %v116, 4294901760
    %v1265 = vsub.f32 %v116, %v1264
    %1266 = vmatprep.subr.mxu0 %v1265
    %v1267 = vand.u32 %v115, 4294901760
    %v1268 = vsub.f32 %v115, %v1267
    %1269 = vmatpush1.msra.mxu0 %v1268
    %v1270 = vand.u32 %v110, 4294901760
    %v1271 = vsub.f32 %v110, %v1270
    %1272 = vmatprep.subr.mxu0 %v1271
    %v1273 = vand.u32 %v109, 4294901760
    %v1274 = vsub.f32 %v109, %v1273
    %1275 = vmatpush1.msra.mxu0 %v1274
    %v1276 = vand.u32 %v104, 4294901760
    %v1277 = vsub.f32 %v104, %v1276
    %1278 = vmatprep.subr.mxu0 %v1277
    %v1279 = vand.u32 %v103, 4294901760
    %v1280 = vsub.f32 %v103, %v1279
    %1281 = vmatpush1.msra.mxu0 %v1280
    %v1282 = vand.u32 %v98, 4294901760
    %v1283 = vsub.f32 %v98, %v1282
    %1284 = vmatprep.subr.mxu0 %v1283
    %v1285 = vand.u32 %v97, 4294901760
    %v1286 = vsub.f32 %v97, %v1285
    %1287 = vmatpush1.msra.mxu0 %v1286
    %v1288 = vand.u32 %v92, 4294901760
    %v1289 = vsub.f32 %v92, %v1288
    %1290 = vmatprep.subr.mxu0 %v1289
    %v1291 = vand.u32 %v91, 4294901760
    %v1292 = vsub.f32 %v91, %v1291
    %1293 = vmatpush1.msra.mxu0 %v1292
    %v1294 = vand.u32 %v86, 4294901760
    %v1295 = vsub.f32 %v86, %v1294
    %1296 = vmatprep.subr.mxu0 %v1295
    %v1297 = vand.u32 %v85, 4294901760
    %v1298 = vsub.f32 %v85, %v1297
    %1299 = vmatpush1.msra.mxu0 %v1298
    %1300 = vmatprep.subr.mxu0 0.0
    %1301 = vmatpush2.msra.mxu0 0.0
    %1302 = vmatprep.subr.mxu0 0.0
    %1303 = vmatpush2.msra.mxu0 0.0
    %1304 = vmatprep.subr.mxu0 0.0
    %1305 = vmatpush2.msra.mxu0 0.0
    %1306 = vmatprep.subr.mxu0 0.0
    %1307 = vmatpush2.msra.mxu0 0.0
    %1308 = vmatprep.subr.mxu0 0.0
    %1309 = vmatpush2.msra.mxu0 0.0
    %1310 = vmatprep.subr.mxu0 0.0
    %1311 = vmatpush2.msra.mxu0 0.0
    %1312 = vmatprep.subr.mxu0 0.0
    %1313 = vmatpush2.msra.mxu0 0.0
    %1314 = vmatprep.subr.mxu0 0.0
    %1315 = vmatpush2.msra.mxu0 0.0
    %1316 = vmatprep.subr.mxu0 0.0
    %1317 = vmatpush2.msra.mxu0 0.0
    %1318 = vmatprep.subr.mxu0 0.0
    %1319 = vmatpush2.msra.mxu0 0.0
    %1320 = vmatprep.subr.mxu0 0.0
    %1321 = vmatpush2.msra.mxu0 0.0
    %1322 = vmatprep.subr.mxu0 0.0
    %1323 = vmatpush2.msra.mxu0 0.0
    %1324 = vmatprep.subr.mxu0 0.0
    %1325 = vmatpush2.msra.mxu0 0.0
    %1326 = vmatprep.subr.mxu0 0.0
    %1327 = vmatpush2.msra.mxu0 0.0
    %1328 = vmatprep.subr.mxu0 0.0
    %1329 = vmatpush2.msra.mxu0 0.0
    %1330 = vmatprep.subr.mxu0 0.0
    %1331 = vmatpush2.msra.mxu0 0.0
    %1332 = vmatprep.mubr.f32.mxu0 0.0
    %v1333 = vand.u32 %v133, 4294901760
    %v1334 = vsub.f32 %v133, %v1333
    %1335 = vmatmul.mubr.f32.gmra.mxu0 %v1334
    %v1336 = vpop.f32.mrf.mxu0
    %v1337 = vadd.f32 %v1211, %v1336
    %v1338 = vpop.f32.mrf.mxu0
    %v1339 = vadd.f32 %v1213, %v1338
    %1340 = vmatprep.mubr.f32.mxu0 0.0
    %v1341 = vand.u32 %v136, 4294901760
    %v1342 = vsub.f32 %v136, %v1341
    %1343 = vmatmul.mubr.f32.gmra.mxu0 %v1342
    %v1344 = vpop.f32.mrf.mxu0
    %v1345 = vadd.f32 %v1218, %v1344
    %v1346 = vpop.f32.mrf.mxu0
    %v1347 = vadd.f32 %v1220, %v1346
    %1348 = vmatprep.mubr.f32.mxu0 0.0
    %v1349 = vand.u32 %v139, 4294901760
    %v1350 = vsub.f32 %v139, %v1349
    %1351 = vmatmul.mubr.f32.gmra.mxu0 %v1350
    %v1352 = vpop.f32.mrf.mxu0
    %v1353 = vadd.f32 %v1225, %v1352
    %v1354 = vpop.f32.mrf.mxu0
    %v1355 = vadd.f32 %v1227, %v1354
    %1356 = vmatprep.mubr.f32.mxu0 0.0
    %v1357 = vand.u32 %v142, 4294901760
    %v1358 = vsub.f32 %v142, %v1357
    %1359 = vmatmul.mubr.f32.gmra.mxu0 %v1358
    %v1360 = vpop.f32.mrf.mxu0
    %v1361 = vadd.f32 %v1232, %v1360
    %v1362 = vpop.f32.mrf.mxu0
    %v1363 = vadd.f32 %v1234, %v1362
    %1364 = vdwg.mxu0
    %1365 = vmatprep.subr.mxu0 0.0
    %1366 = vmatpush1.msra.mxu0 0.0
    %1367 = vmatprep.subr.mxu0 0.0
    %1368 = vmatpush1.msra.mxu0 0.0
    %1369 = vmatprep.subr.mxu0 0.0
    %1370 = vmatpush1.msra.mxu0 0.0
    %1371 = vmatprep.subr.mxu0 0.0
    %1372 = vmatpush1.msra.mxu0 0.0
    %1373 = vmatprep.subr.mxu0 0.0
    %1374 = vmatpush1.msra.mxu0 0.0
    %1375 = vmatprep.subr.mxu0 0.0
    %1376 = vmatpush1.msra.mxu0 0.0
    %1377 = vmatprep.subr.mxu0 0.0
    %1378 = vmatpush1.msra.mxu0 0.0
    %1379 = vmatprep.subr.mxu0 0.0
    %1380 = vmatpush1.msra.mxu0 0.0
    %v1381 = vand.u32 %v128, 4294901760
    %1382 = vmatprep.subr.mxu0 %v1381
    %v1383 = vand.u32 %v127, 4294901760
    %1384 = vmatpush1.msra.mxu0 %v1383
    %v1385 = vand.u32 %v122, 4294901760
    %1386 = vmatprep.subr.mxu0 %v1385
    %v1387 = vand.u32 %v121, 4294901760
    %1388 = vmatpush1.msra.mxu0 %v1387
    %v1389 = vand.u32 %v116, 4294901760
    %1390 = vmatprep.subr.mxu0 %v1389
    %v1391 = vand.u32 %v115, 4294901760
    %1392 = vmatpush1.msra.mxu0 %v1391
    %v1393 = vand.u32 %v110, 4294901760
    %1394 = vmatprep.subr.mxu0 %v1393
    %v1395 = vand.u32 %v109, 4294901760
    %1396 = vmatpush1.msra.mxu0 %v1395
    %v1397 = vand.u32 %v104, 4294901760
    %1398 = vmatprep.subr.mxu0 %v1397
    %v1399 = vand.u32 %v103, 4294901760
    %1400 = vmatpush1.msra.mxu0 %v1399
    %v1401 = vand.u32 %v98, 4294901760
    %1402 = vmatprep.subr.mxu0 %v1401
    %v1403 = vand.u32 %v97, 4294901760
    %1404 = vmatpush1.msra.mxu0 %v1403
    %v1405 = vand.u32 %v92, 4294901760
    %1406 = vmatprep.subr.mxu0 %v1405
    %v1407 = vand.u32 %v91, 4294901760
    %1408 = vmatpush1.msra.mxu0 %v1407
    %v1409 = vand.u32 %v86, 4294901760
    %1410 = vmatprep.subr.mxu0 %v1409
    %v1411 = vand.u32 %v85, 4294901760
    %1412 = vmatpush1.msra.mxu0 %v1411
    %1413 = vmatprep.subr.mxu0 0.0
    %1414 = vmatpush2.msra.mxu0 0.0
    %1415 = vmatprep.subr.mxu0 0.0
    %1416 = vmatpush2.msra.mxu0 0.0
    %1417 = vmatprep.subr.mxu0 0.0
    %1418 = vmatpush2.msra.mxu0 0.0
    %1419 = vmatprep.subr.mxu0 0.0
    %1420 = vmatpush2.msra.mxu0 0.0
    %1421 = vmatprep.subr.mxu0 0.0
    %1422 = vmatpush2.msra.mxu0 0.0
    %1423 = vmatprep.subr.mxu0 0.0
    %1424 = vmatpush2.msra.mxu0 0.0
    %1425 = vmatprep.subr.mxu0 0.0
    %1426 = vmatpush2.msra.mxu0 0.0
    %1427 = vmatprep.subr.mxu0 0.0
    %1428 = vmatpush2.msra.mxu0 0.0
    %1429 = vmatprep.subr.mxu0 0.0
    %1430 = vmatpush2.msra.mxu0 0.0
    %1431 = vmatprep.subr.mxu0 0.0
    %1432 = vmatpush2.msra.mxu0 0.0
    %1433 = vmatprep.subr.mxu0 0.0
    %1434 = vmatpush2.msra.mxu0 0.0
    %1435 = vmatprep.subr.mxu0 0.0
    %1436 = vmatpush2.msra.mxu0 0.0
    %1437 = vmatprep.subr.mxu0 0.0
    %1438 = vmatpush2.msra.mxu0 0.0
    %1439 = vmatprep.subr.mxu0 0.0
    %1440 = vmatpush2.msra.mxu0 0.0
    %1441 = vmatprep.subr.mxu0 0.0
    %1442 = vmatpush2.msra.mxu0 0.0
    %1443 = vmatprep.subr.mxu0 0.0
    %1444 = vmatpush2.msra.mxu0 0.0
    %1445 = vmatprep.mubr.f32.mxu0 0.0
    %v1446 = vand.u32 %v133, 4294901760
    %v1447 = vsub.f32 %v133, %v1446
    %v1448 = vand.u32 %v1447, 4294901760
    %1449 = vmatmul.mubr.f32.gmra.mxu0 %v1448
    %v1450 = vpop.f32.mrf.mxu0
    %v1451 = vadd.f32 %v1337, %v1450
    %v1452 = vpop.f32.mrf.mxu0
    %v1453 = vadd.f32 %v1339, %v1452
    %1454 = vmatprep.mubr.f32.mxu0 0.0
    %v1455 = vand.u32 %v136, 4294901760
    %v1456 = vsub.f32 %v136, %v1455
    %v1457 = vand.u32 %v1456, 4294901760
    %1458 = vmatmul.mubr.f32.gmra.mxu0 %v1457
    %v1459 = vpop.f32.mrf.mxu0
    %v1460 = vadd.f32 %v1345, %v1459
    %v1461 = vpop.f32.mrf.mxu0
    %v1462 = vadd.f32 %v1347, %v1461
    %1463 = vmatprep.mubr.f32.mxu0 0.0
    %v1464 = vand.u32 %v139, 4294901760
    %v1465 = vsub.f32 %v139, %v1464
    %v1466 = vand.u32 %v1465, 4294901760
    %1467 = vmatmul.mubr.f32.gmra.mxu0 %v1466
    %v1468 = vpop.f32.mrf.mxu0
    %v1469 = vadd.f32 %v1353, %v1468
    %v1470 = vpop.f32.mrf.mxu0
    %v1471 = vadd.f32 %v1355, %v1470
    %1472 = vmatprep.mubr.f32.mxu0 0.0
    %v1473 = vand.u32 %v142, 4294901760
    %v1474 = vsub.f32 %v142, %v1473
    %v1475 = vand.u32 %v1474, 4294901760
    %1476 = vmatmul.mubr.f32.gmra.mxu0 %v1475
    %v1477 = vpop.f32.mrf.mxu0
    %v1478 = vadd.f32 %v1361, %v1477
    %v1479 = vpop.f32.mrf.mxu0
    %v1480 = vadd.f32 %v1363, %v1479
    %1481 = vdwg.mxu0
    %1482 = vmatprep.subr.mxu0 0.0
    %1483 = vmatpush1.msra.mxu0 0.0
    %1484 = vmatprep.subr.mxu0 0.0
    %1485 = vmatpush1.msra.mxu0 0.0
    %1486 = vmatprep.subr.mxu0 0.0
    %1487 = vmatpush1.msra.mxu0 0.0
    %1488 = vmatprep.subr.mxu0 0.0
    %1489 = vmatpush1.msra.mxu0 0.0
    %1490 = vmatprep.subr.mxu0 0.0
    %1491 = vmatpush1.msra.mxu0 0.0
    %1492 = vmatprep.subr.mxu0 0.0
    %1493 = vmatpush1.msra.mxu0 0.0
    %1494 = vmatprep.subr.mxu0 0.0
    %1495 = vmatpush1.msra.mxu0 0.0
    %1496 = vmatprep.subr.mxu0 0.0
    %1497 = vmatpush1.msra.mxu0 0.0
    %v1498 = vand.u32 %v128, 4294901760
    %v1499 = vsub.f32 %v128, %v1498
    %v1500 = vand.u32 %v1499, 4294901760
    %1501 = vmatprep.subr.mxu0 %v1500
    %v1502 = vand.u32 %v127, 4294901760
    %v1503 = vsub.f32 %v127, %v1502
    %v1504 = vand.u32 %v1503, 4294901760
    %1505 = vmatpush1.msra.mxu0 %v1504
    %v1506 = vand.u32 %v122, 4294901760
    %v1507 = vsub.f32 %v122, %v1506
    %v1508 = vand.u32 %v1507, 4294901760
    %1509 = vmatprep.subr.mxu0 %v1508
    %v1510 = vand.u32 %v121, 4294901760
    %v1511 = vsub.f32 %v121, %v1510
    %v1512 = vand.u32 %v1511, 4294901760
    %1513 = vmatpush1.msra.mxu0 %v1512
    %v1514 = vand.u32 %v116, 4294901760
    %v1515 = vsub.f32 %v116, %v1514
    %v1516 = vand.u32 %v1515, 4294901760
    %1517 = vmatprep.subr.mxu0 %v1516
    %v1518 = vand.u32 %v115, 4294901760
    %v1519 = vsub.f32 %v115, %v1518
    %v1520 = vand.u32 %v1519, 4294901760
    %1521 = vmatpush1.msra.mxu0 %v1520
    %v1522 = vand.u32 %v110, 4294901760
    %v1523 = vsub.f32 %v110, %v1522
    %v1524 = vand.u32 %v1523, 4294901760
    %1525 = vmatprep.subr.mxu0 %v1524
    %v1526 = vand.u32 %v109, 4294901760
    %v1527 = vsub.f32 %v109, %v1526
    %v1528 = vand.u32 %v1527, 4294901760
    %1529 = vmatpush1.msra.mxu0 %v1528
    %v1530 = vand.u32 %v104, 4294901760
    %v1531 = vsub.f32 %v104, %v1530
    %v1532 = vand.u32 %v1531, 4294901760
    %1533 = vmatprep.subr.mxu0 %v1532
    %v1534 = vand.u32 %v103, 4294901760
    %v1535 = vsub.f32 %v103, %v1534
    %v1536 = vand.u32 %v1535, 4294901760
    %1537 = vmatpush1.msra.mxu0 %v1536
    %v1538 = vand.u32 %v98, 4294901760
    %v1539 = vsub.f32 %v98, %v1538
    %v1540 = vand.u32 %v1539, 4294901760
    %1541 = vmatprep.subr.mxu0 %v1540
    %v1542 = vand.u32 %v97, 4294901760
    %v1543 = vsub.f32 %v97, %v1542
    %v1544 = vand.u32 %v1543, 4294901760
    %1545 = vmatpush1.msra.mxu0 %v1544
    %v1546 = vand.u32 %v92, 4294901760
    %v1547 = vsub.f32 %v92, %v1546
    %v1548 = vand.u32 %v1547, 4294901760
    %1549 = vmatprep.subr.mxu0 %v1548
    %v1550 = vand.u32 %v91, 4294901760
    %v1551 = vsub.f32 %v91, %v1550
    %v1552 = vand.u32 %v1551, 4294901760
    %1553 = vmatpush1.msra.mxu0 %v1552
    %v1554 = vand.u32 %v86, 4294901760
    %v1555 = vsub.f32 %v86, %v1554
    %v1556 = vand.u32 %v1555, 4294901760
    %1557 = vmatprep.subr.mxu0 %v1556
    %v1558 = vand.u32 %v85, 4294901760
    %v1559 = vsub.f32 %v85, %v1558
    %v1560 = vand.u32 %v1559, 4294901760
    %1561 = vmatpush1.msra.mxu0 %v1560
    %1562 = vmatprep.subr.mxu0 0.0
    %1563 = vmatpush2.msra.mxu0 0.0
    %1564 = vmatprep.subr.mxu0 0.0
    %1565 = vmatpush2.msra.mxu0 0.0
    %1566 = vmatprep.subr.mxu0 0.0
    %1567 = vmatpush2.msra.mxu0 0.0
    %1568 = vmatprep.subr.mxu0 0.0
    %1569 = vmatpush2.msra.mxu0 0.0
    %1570 = vmatprep.subr.mxu0 0.0
    %1571 = vmatpush2.msra.mxu0 0.0
    %1572 = vmatprep.subr.mxu0 0.0
    %1573 = vmatpush2.msra.mxu0 0.0
    %1574 = vmatprep.subr.mxu0 0.0
    %1575 = vmatpush2.msra.mxu0 0.0
    %1576 = vmatprep.subr.mxu0 0.0
    %1577 = vmatpush2.msra.mxu0 0.0
    %1578 = vmatprep.subr.mxu0 0.0
    %1579 = vmatpush2.msra.mxu0 0.0
    %1580 = vmatprep.subr.mxu0 0.0
    %1581 = vmatpush2.msra.mxu0 0.0
    %1582 = vmatprep.subr.mxu0 0.0
    %1583 = vmatpush2.msra.mxu0 0.0
    %1584 = vmatprep.subr.mxu0 0.0
    %1585 = vmatpush2.msra.mxu0 0.0
    %1586 = vmatprep.subr.mxu0 0.0
    %1587 = vmatpush2.msra.mxu0 0.0
    %1588 = vmatprep.subr.mxu0 0.0
    %1589 = vmatpush2.msra.mxu0 0.0
    %1590 = vmatprep.subr.mxu0 0.0
    %1591 = vmatpush2.msra.mxu0 0.0
    %1592 = vmatprep.subr.mxu0 0.0
    %1593 = vmatpush2.msra.mxu0 0.0
    %1594 = vmatprep.mubr.f32.mxu0 0.0
    %v1595 = vand.u32 %v133, 4294901760
    %1596 = vmatmul.mubr.f32.gmra.mxu0 %v1595
    %v1597 = vpop.f32.mrf.mxu0
    %v1598 = vadd.f32 %v1451, %v1597
    %v1599 = vpop.f32.mrf.mxu0
    %v1600 = vadd.f32 %v1453, %v1599
    %1601 = vmatprep.mubr.f32.mxu0 0.0
    %v1602 = vand.u32 %v136, 4294901760
    %1603 = vmatmul.mubr.f32.gmra.mxu0 %v1602
    %v1604 = vpop.f32.mrf.mxu0
    %v1605 = vadd.f32 %v1460, %v1604
    %v1606 = vpop.f32.mrf.mxu0
    %v1607 = vadd.f32 %v1462, %v1606
    %1608 = vmatprep.mubr.f32.mxu0 0.0
    %v1609 = vand.u32 %v139, 4294901760
    %1610 = vmatmul.mubr.f32.gmra.mxu0 %v1609
    %v1611 = vpop.f32.mrf.mxu0
    %v1612 = vadd.f32 %v1469, %v1611
    %v1613 = vpop.f32.mrf.mxu0
    %v1614 = vadd.f32 %v1471, %v1613
    %1615 = vmatprep.mubr.f32.mxu0 0.0
    %v1616 = vand.u32 %v142, 4294901760
    %1617 = vmatmul.mubr.f32.gmra.mxu0 %v1616
    %v1618 = vpop.f32.mrf.mxu0
    %v1619 = vadd.f32 %v1478, %v1618
    %v1620 = vpop.f32.mrf.mxu0
    %v1621 = vadd.f32 %v1480, %v1620
    %1622 = vdwg.mxu0
    %1623 = vmatprep.subr.mxu0 0.0
    %1624 = vmatpush1.msra.mxu0 0.0
    %1625 = vmatprep.subr.mxu0 0.0
    %1626 = vmatpush1.msra.mxu0 0.0
    %1627 = vmatprep.subr.mxu0 0.0
    %1628 = vmatpush1.msra.mxu0 0.0
    %1629 = vmatprep.subr.mxu0 0.0
    %1630 = vmatpush1.msra.mxu0 0.0
    %1631 = vmatprep.subr.mxu0 0.0
    %1632 = vmatpush1.msra.mxu0 0.0
    %1633 = vmatprep.subr.mxu0 0.0
    %1634 = vmatpush1.msra.mxu0 0.0
    %1635 = vmatprep.subr.mxu0 0.0
    %1636 = vmatpush1.msra.mxu0 0.0
    %1637 = vmatprep.subr.mxu0 0.0
    %1638 = vmatpush1.msra.mxu0 0.0
    %v1639 = vand.u32 %v128, 4294901760
    %1640 = vmatprep.subr.mxu0 %v1639
    %v1641 = vand.u32 %v127, 4294901760
    %1642 = vmatpush1.msra.mxu0 %v1641
    %v1643 = vand.u32 %v122, 4294901760
    %1644 = vmatprep.subr.mxu0 %v1643
    %v1645 = vand.u32 %v121, 4294901760
    %1646 = vmatpush1.msra.mxu0 %v1645
    %v1647 = vand.u32 %v116, 4294901760
    %1648 = vmatprep.subr.mxu0 %v1647
    %v1649 = vand.u32 %v115, 4294901760
    %1650 = vmatpush1.msra.mxu0 %v1649
    %v1651 = vand.u32 %v110, 4294901760
    %1652 = vmatprep.subr.mxu0 %v1651
    %v1653 = vand.u32 %v109, 4294901760
    %1654 = vmatpush1.msra.mxu0 %v1653
    %v1655 = vand.u32 %v104, 4294901760
    %1656 = vmatprep.subr.mxu0 %v1655
    %v1657 = vand.u32 %v103, 4294901760
    %1658 = vmatpush1.msra.mxu0 %v1657
    %v1659 = vand.u32 %v98, 4294901760
    %1660 = vmatprep.subr.mxu0 %v1659
    %v1661 = vand.u32 %v97, 4294901760
    %1662 = vmatpush1.msra.mxu0 %v1661
    %v1663 = vand.u32 %v92, 4294901760
    %1664 = vmatprep.subr.mxu0 %v1663
    %v1665 = vand.u32 %v91, 4294901760
    %1666 = vmatpush1.msra.mxu0 %v1665
    %v1667 = vand.u32 %v86, 4294901760
    %1668 = vmatprep.subr.mxu0 %v1667
    %v1669 = vand.u32 %v85, 4294901760
    %1670 = vmatpush1.msra.mxu0 %v1669
    %1671 = vmatprep.subr.mxu0 0.0
    %1672 = vmatpush2.msra.mxu0 0.0
    %1673 = vmatprep.subr.mxu0 0.0
    %1674 = vmatpush2.msra.mxu0 0.0
    %1675 = vmatprep.subr.mxu0 0.0
    %1676 = vmatpush2.msra.mxu0 0.0
    %1677 = vmatprep.subr.mxu0 0.0
    %1678 = vmatpush2.msra.mxu0 0.0
    %1679 = vmatprep.subr.mxu0 0.0
    %1680 = vmatpush2.msra.mxu0 0.0
    %1681 = vmatprep.subr.mxu0 0.0
    %1682 = vmatpush2.msra.mxu0 0.0
    %1683 = vmatprep.subr.mxu0 0.0
    %1684 = vmatpush2.msra.mxu0 0.0
    %1685 = vmatprep.subr.mxu0 0.0
    %1686 = vmatpush2.msra.mxu0 0.0
    %1687 = vmatprep.subr.mxu0 0.0
    %1688 = vmatpush2.msra.mxu0 0.0
    %1689 = vmatprep.subr.mxu0 0.0
    %1690 = vmatpush2.msra.mxu0 0.0
    %1691 = vmatprep.subr.mxu0 0.0
    %1692 = vmatpush2.msra.mxu0 0.0
    %1693 = vmatprep.subr.mxu0 0.0
    %1694 = vmatpush2.msra.mxu0 0.0
    %1695 = vmatprep.subr.mxu0 0.0
    %1696 = vmatpush2.msra.mxu0 0.0
    %1697 = vmatprep.subr.mxu0 0.0
    %1698 = vmatpush2.msra.mxu0 0.0
    %1699 = vmatprep.subr.mxu0 0.0
    %1700 = vmatpush2.msra.mxu0 0.0
    %1701 = vmatprep.subr.mxu0 0.0
    %1702 = vmatpush2.msra.mxu0 0.0
    %1703 = vmatprep.mubr.f32.mxu0 0.0
    %v1704 = vand.u32 %v133, 4294901760
    %1705 = vmatmul.mubr.f32.gmra.mxu0 %v1704
    %v1706 = vpop.f32.mrf.mxu0
    %v1707 = vadd.f32 %v1598, %v1706
    %v1708 = vpop.f32.mrf.mxu0
    %v1709 = vadd.f32 %v1600, %v1708
    %1710 = vmatprep.mubr.f32.mxu0 0.0
    %v1711 = vand.u32 %v136, 4294901760
    %1712 = vmatmul.mubr.f32.gmra.mxu0 %v1711
    %v1713 = vpop.f32.mrf.mxu0
    %v1714 = vadd.f32 %v1605, %v1713
    %v1715 = vpop.f32.mrf.mxu0
    %v1716 = vadd.f32 %v1607, %v1715
    %1717 = vmatprep.mubr.f32.mxu0 0.0
    %v1718 = vand.u32 %v139, 4294901760
    %1719 = vmatmul.mubr.f32.gmra.mxu0 %v1718
    %v1720 = vpop.f32.mrf.mxu0
    %v1721 = vadd.f32 %v1612, %v1720
    %v1722 = vpop.f32.mrf.mxu0
    %v1723 = vadd.f32 %v1614, %v1722
    %1724 = vmatprep.mubr.f32.mxu0 0.0
    %v1725 = vand.u32 %v142, 4294901760
    %1726 = vmatmul.mubr.f32.gmra.mxu0 %v1725
    %v1727 = vpop.f32.mrf.mxu0
    %v1728 = vadd.f32 %v1619, %v1727
    %v1729 = vpop.f32.mrf.mxu0
    %v1730 = vadd.f32 %v1621, %v1729
    %1731 = vdwg.mxu0
    %1732 = vmatprep.subr.mxu0 0.0
    %1733 = vmatpush1.msra.mxu0 0.0
    %1734 = vmatprep.subr.mxu0 0.0
    %1735 = vmatpush1.msra.mxu0 0.0
    %1736 = vmatprep.subr.mxu0 0.0
    %1737 = vmatpush1.msra.mxu0 0.0
    %1738 = vmatprep.subr.mxu0 0.0
    %1739 = vmatpush1.msra.mxu0 0.0
    %1740 = vmatprep.subr.mxu0 0.0
    %1741 = vmatpush1.msra.mxu0 0.0
    %1742 = vmatprep.subr.mxu0 0.0
    %1743 = vmatpush1.msra.mxu0 0.0
    %1744 = vmatprep.subr.mxu0 0.0
    %1745 = vmatpush1.msra.mxu0 0.0
    %1746 = vmatprep.subr.mxu0 0.0
    %1747 = vmatpush1.msra.mxu0 0.0
    %v1748 = vand.u32 %v130, 4294901760
    %1749 = vmatprep.subr.mxu0 %v1748
    %v1750 = vand.u32 %v129, 4294901760
    %1751 = vmatpush1.msra.mxu0 %v1750
    %v1752 = vand.u32 %v124, 4294901760
    %1753 = vmatprep.subr.mxu0 %v1752
    %v1754 = vand.u32 %v123, 4294901760
    %1755 = vmatpush1.msra.mxu0 %v1754
    %v1756 = vand.u32 %v118, 4294901760
    %1757 = vmatprep.subr.mxu0 %v1756
    %v1758 = vand.u32 %v117, 4294901760
    %1759 = vmatpush1.msra.mxu0 %v1758
    %v1760 = vand.u32 %v112, 4294901760
    %1761 = vmatprep.subr.mxu0 %v1760
    %v1762 = vand.u32 %v111, 4294901760
    %1763 = vmatpush1.msra.mxu0 %v1762
    %v1764 = vand.u32 %v106, 4294901760
    %1765 = vmatprep.subr.mxu0 %v1764
    %v1766 = vand.u32 %v105, 4294901760
    %1767 = vmatpush1.msra.mxu0 %v1766
    %v1768 = vand.u32 %v100, 4294901760
    %1769 = vmatprep.subr.mxu0 %v1768
    %v1770 = vand.u32 %v99, 4294901760
    %1771 = vmatpush1.msra.mxu0 %v1770
    %v1772 = vand.u32 %v94, 4294901760
    %1773 = vmatprep.subr.mxu0 %v1772
    %v1774 = vand.u32 %v93, 4294901760
    %1775 = vmatpush1.msra.mxu0 %v1774
    %v1776 = vand.u32 %v88, 4294901760
    %1777 = vmatprep.subr.mxu0 %v1776
    %v1778 = vand.u32 %v87, 4294901760
    %1779 = vmatpush1.msra.mxu0 %v1778
    %1780 = vmatprep.subr.mxu0 0.0
    %1781 = vmatpush2.msra.mxu0 0.0
    %1782 = vmatprep.subr.mxu0 0.0
    %1783 = vmatpush2.msra.mxu0 0.0
    %1784 = vmatprep.subr.mxu0 0.0
    %1785 = vmatpush2.msra.mxu0 0.0
    %1786 = vmatprep.subr.mxu0 0.0
    %1787 = vmatpush2.msra.mxu0 0.0
    %1788 = vmatprep.subr.mxu0 0.0
    %1789 = vmatpush2.msra.mxu0 0.0
    %1790 = vmatprep.subr.mxu0 0.0
    %1791 = vmatpush2.msra.mxu0 0.0
    %1792 = vmatprep.subr.mxu0 0.0
    %1793 = vmatpush2.msra.mxu0 0.0
    %1794 = vmatprep.subr.mxu0 0.0
    %1795 = vmatpush2.msra.mxu0 0.0
    %1796 = vmatprep.subr.mxu0 0.0
    %1797 = vmatpush2.msra.mxu0 0.0
    %1798 = vmatprep.subr.mxu0 0.0
    %1799 = vmatpush2.msra.mxu0 0.0
    %1800 = vmatprep.subr.mxu0 0.0
    %1801 = vmatpush2.msra.mxu0 0.0
    %1802 = vmatprep.subr.mxu0 0.0
    %1803 = vmatpush2.msra.mxu0 0.0
    %1804 = vmatprep.subr.mxu0 0.0
    %1805 = vmatpush2.msra.mxu0 0.0
    %1806 = vmatprep.subr.mxu0 0.0
    %1807 = vmatpush2.msra.mxu0 0.0
    %1808 = vmatprep.subr.mxu0 0.0
    %1809 = vmatpush2.msra.mxu0 0.0
    %1810 = vmatprep.subr.mxu0 0.0
    %1811 = vmatpush2.msra.mxu0 0.0
    %1812 = vmatprep.mubr.f32.mxu0 0.0
    %v1813 = vand.u32 %v133, 4294901760
    %v1814 = vsub.f32 %v133, %v1813
    %v1815 = vand.u32 %v1814, 4294901760
    %v1816 = vsub.f32 %v1814, %v1815
    %v1817 = vand.u32 %v1816, 4294901760
    %1818 = vmatmul.mubr.f32.gmra.mxu0 %v1817
    %v1819 = vpop.f32.mrf.mxu0
    %v1820 = vadd.f32 0.0, %v1819
    %v1821 = vpop.f32.mrf.mxu0
    %v1822 = vadd.f32 0.0, %v1821
    %1823 = vmatprep.mubr.f32.mxu0 0.0
    %v1824 = vand.u32 %v136, 4294901760
    %v1825 = vsub.f32 %v136, %v1824
    %v1826 = vand.u32 %v1825, 4294901760
    %v1827 = vsub.f32 %v1825, %v1826
    %v1828 = vand.u32 %v1827, 4294901760
    %1829 = vmatmul.mubr.f32.gmra.mxu0 %v1828
    %v1830 = vpop.f32.mrf.mxu0
    %v1831 = vadd.f32 0.0, %v1830
    %v1832 = vpop.f32.mrf.mxu0
    %v1833 = vadd.f32 0.0, %v1832
    %1834 = vmatprep.mubr.f32.mxu0 0.0
    %v1835 = vand.u32 %v139, 4294901760
    %v1836 = vsub.f32 %v139, %v1835
    %v1837 = vand.u32 %v1836, 4294901760
    %v1838 = vsub.f32 %v1836, %v1837
    %v1839 = vand.u32 %v1838, 4294901760
    %1840 = vmatmul.mubr.f32.gmra.mxu0 %v1839
    %v1841 = vpop.f32.mrf.mxu0
    %v1842 = vadd.f32 0.0, %v1841
    %v1843 = vpop.f32.mrf.mxu0
    %v1844 = vadd.f32 0.0, %v1843
    %1845 = vmatprep.mubr.f32.mxu0 0.0
    %v1846 = vand.u32 %v142, 4294901760
    %v1847 = vsub.f32 %v142, %v1846
    %v1848 = vand.u32 %v1847, 4294901760
    %v1849 = vsub.f32 %v1847, %v1848
    %v1850 = vand.u32 %v1849, 4294901760
    %1851 = vmatmul.mubr.f32.gmra.mxu0 %v1850
    %v1852 = vpop.f32.mrf.mxu0
    %v1853 = vadd.f32 0.0, %v1852
    %v1854 = vpop.f32.mrf.mxu0
    %v1855 = vadd.f32 0.0, %v1854
    %1856 = vdwg.mxu0
    %1857 = vmatprep.subr.mxu0 0.0
    %1858 = vmatpush1.msra.mxu0 0.0
    %1859 = vmatprep.subr.mxu0 0.0
    %1860 = vmatpush1.msra.mxu0 0.0
    %1861 = vmatprep.subr.mxu0 0.0
    %1862 = vmatpush1.msra.mxu0 0.0
    %1863 = vmatprep.subr.mxu0 0.0
    %1864 = vmatpush1.msra.mxu0 0.0
    %1865 = vmatprep.subr.mxu0 0.0
    %1866 = vmatpush1.msra.mxu0 0.0
    %1867 = vmatprep.subr.mxu0 0.0
    %1868 = vmatpush1.msra.mxu0 0.0
    %1869 = vmatprep.subr.mxu0 0.0
    %1870 = vmatpush1.msra.mxu0 0.0
    %1871 = vmatprep.subr.mxu0 0.0
    %1872 = vmatpush1.msra.mxu0 0.0
    %v1873 = vand.u32 %v130, 4294901760
    %v1874 = vsub.f32 %v130, %v1873
    %v1875 = vand.u32 %v1874, 4294901760
    %v1876 = vsub.f32 %v1874, %v1875
    %v1877 = vand.u32 %v1876, 4294901760
    %1878 = vmatprep.subr.mxu0 %v1877
    %v1879 = vand.u32 %v129, 4294901760
    %v1880 = vsub.f32 %v129, %v1879
    %v1881 = vand.u32 %v1880, 4294901760
    %v1882 = vsub.f32 %v1880, %v1881
    %v1883 = vand.u32 %v1882, 4294901760
    %1884 = vmatpush1.msra.mxu0 %v1883
    %v1885 = vand.u32 %v124, 4294901760
    %v1886 = vsub.f32 %v124, %v1885
    %v1887 = vand.u32 %v1886, 4294901760
    %v1888 = vsub.f32 %v1886, %v1887
    %v1889 = vand.u32 %v1888, 4294901760
    %1890 = vmatprep.subr.mxu0 %v1889
    %v1891 = vand.u32 %v123, 4294901760
    %v1892 = vsub.f32 %v123, %v1891
    %v1893 = vand.u32 %v1892, 4294901760
    %v1894 = vsub.f32 %v1892, %v1893
    %v1895 = vand.u32 %v1894, 4294901760
    %1896 = vmatpush1.msra.mxu0 %v1895
    %v1897 = vand.u32 %v118, 4294901760
    %v1898 = vsub.f32 %v118, %v1897
    %v1899 = vand.u32 %v1898, 4294901760
    %v1900 = vsub.f32 %v1898, %v1899
    %v1901 = vand.u32 %v1900, 4294901760
    %1902 = vmatprep.subr.mxu0 %v1901
    %v1903 = vand.u32 %v117, 4294901760
    %v1904 = vsub.f32 %v117, %v1903
    %v1905 = vand.u32 %v1904, 4294901760
    %v1906 = vsub.f32 %v1904, %v1905
    %v1907 = vand.u32 %v1906, 4294901760
    %1908 = vmatpush1.msra.mxu0 %v1907
    %v1909 = vand.u32 %v112, 4294901760
    %v1910 = vsub.f32 %v112, %v1909
    %v1911 = vand.u32 %v1910, 4294901760
    %v1912 = vsub.f32 %v1910, %v1911
    %v1913 = vand.u32 %v1912, 4294901760
    %1914 = vmatprep.subr.mxu0 %v1913
    %v1915 = vand.u32 %v111, 4294901760
    %v1916 = vsub.f32 %v111, %v1915
    %v1917 = vand.u32 %v1916, 4294901760
    %v1918 = vsub.f32 %v1916, %v1917
    %v1919 = vand.u32 %v1918, 4294901760
    %1920 = vmatpush1.msra.mxu0 %v1919
    %v1921 = vand.u32 %v106, 4294901760
    %v1922 = vsub.f32 %v106, %v1921
    %v1923 = vand.u32 %v1922, 4294901760
    %v1924 = vsub.f32 %v1922, %v1923
    %v1925 = vand.u32 %v1924, 4294901760
    %1926 = vmatprep.subr.mxu0 %v1925
    %v1927 = vand.u32 %v105, 4294901760
    %v1928 = vsub.f32 %v105, %v1927
    %v1929 = vand.u32 %v1928, 4294901760
    %v1930 = vsub.f32 %v1928, %v1929
    %v1931 = vand.u32 %v1930, 4294901760
    %1932 = vmatpush1.msra.mxu0 %v1931
    %v1933 = vand.u32 %v100, 4294901760
    %v1934 = vsub.f32 %v100, %v1933
    %v1935 = vand.u32 %v1934, 4294901760
    %v1936 = vsub.f32 %v1934, %v1935
    %v1937 = vand.u32 %v1936, 4294901760
    %1938 = vmatprep.subr.mxu0 %v1937
    %v1939 = vand.u32 %v99, 4294901760
    %v1940 = vsub.f32 %v99, %v1939
    %v1941 = vand.u32 %v1940, 4294901760
    %v1942 = vsub.f32 %v1940, %v1941
    %v1943 = vand.u32 %v1942, 4294901760
    %1944 = vmatpush1.msra.mxu0 %v1943
    %v1945 = vand.u32 %v94, 4294901760
    %v1946 = vsub.f32 %v94, %v1945
    %v1947 = vand.u32 %v1946, 4294901760
    %v1948 = vsub.f32 %v1946, %v1947
    %v1949 = vand.u32 %v1948, 4294901760
    %1950 = vmatprep.subr.mxu0 %v1949
    %v1951 = vand.u32 %v93, 4294901760
    %v1952 = vsub.f32 %v93, %v1951
    %v1953 = vand.u32 %v1952, 4294901760
    %v1954 = vsub.f32 %v1952, %v1953
    %v1955 = vand.u32 %v1954, 4294901760
    %1956 = vmatpush1.msra.mxu0 %v1955
    %v1957 = vand.u32 %v88, 4294901760
    %v1958 = vsub.f32 %v88, %v1957
    %v1959 = vand.u32 %v1958, 4294901760
    %v1960 = vsub.f32 %v1958, %v1959
    %v1961 = vand.u32 %v1960, 4294901760
    %1962 = vmatprep.subr.mxu0 %v1961
    %v1963 = vand.u32 %v87, 4294901760
    %v1964 = vsub.f32 %v87, %v1963
    %v1965 = vand.u32 %v1964, 4294901760
    %v1966 = vsub.f32 %v1964, %v1965
    %v1967 = vand.u32 %v1966, 4294901760
    %1968 = vmatpush1.msra.mxu0 %v1967
    %1969 = vmatprep.subr.mxu0 0.0
    %1970 = vmatpush2.msra.mxu0 0.0
    %1971 = vmatprep.subr.mxu0 0.0
    %1972 = vmatpush2.msra.mxu0 0.0
    %1973 = vmatprep.subr.mxu0 0.0
    %1974 = vmatpush2.msra.mxu0 0.0
    %1975 = vmatprep.subr.mxu0 0.0
    %1976 = vmatpush2.msra.mxu0 0.0
    %1977 = vmatprep.subr.mxu0 0.0
    %1978 = vmatpush2.msra.mxu0 0.0
    %1979 = vmatprep.subr.mxu0 0.0
    %1980 = vmatpush2.msra.mxu0 0.0
    %1981 = vmatprep.subr.mxu0 0.0
    %1982 = vmatpush2.msra.mxu0 0.0
    %1983 = vmatprep.subr.mxu0 0.0
    %1984 = vmatpush2.msra.mxu0 0.0
    %1985 = vmatprep.subr.mxu0 0.0
    %1986 = vmatpush2.msra.mxu0 0.0
    %1987 = vmatprep.subr.mxu0 0.0
    %1988 = vmatpush2.msra.mxu0 0.0
    %1989 = vmatprep.subr.mxu0 0.0
    %1990 = vmatpush2.msra.mxu0 0.0
    %1991 = vmatprep.subr.mxu0 0.0
    %1992 = vmatpush2.msra.mxu0 0.0
    %1993 = vmatprep.subr.mxu0 0.0
    %1994 = vmatpush2.msra.mxu0 0.0
    %1995 = vmatprep.subr.mxu0 0.0
    %1996 = vmatpush2.msra.mxu0 0.0
    %1997 = vmatprep.subr.mxu0 0.0
    %1998 = vmatpush2.msra.mxu0 0.0
    %1999 = vmatprep.subr.mxu0 0.0
    %2000 = vmatpush2.msra.mxu0 0.0
    %2001 = vmatprep.mubr.f32.mxu0 0.0
    %v2002 = vand.u32 %v133, 4294901760
    %2003 = vmatmul.mubr.f32.gmra.mxu0 %v2002
    %v2004 = vpop.f32.mrf.mxu0
    %v2005 = vadd.f32 %v1820, %v2004
    %v2006 = vpop.f32.mrf.mxu0
    %v2007 = vadd.f32 %v1822, %v2006
    %2008 = vmatprep.mubr.f32.mxu0 0.0
    %v2009 = vand.u32 %v136, 4294901760
    %2010 = vmatmul.mubr.f32.gmra.mxu0 %v2009
    %v2011 = vpop.f32.mrf.mxu0
    %v2012 = vadd.f32 %v1831, %v2011
    %v2013 = vpop.f32.mrf.mxu0
    %v2014 = vadd.f32 %v1833, %v2013
    %2015 = vmatprep.mubr.f32.mxu0 0.0
    %v2016 = vand.u32 %v139, 4294901760
    %2017 = vmatmul.mubr.f32.gmra.mxu0 %v2016
    %v2018 = vpop.f32.mrf.mxu0
    %v2019 = vadd.f32 %v1842, %v2018
    %v2020 = vpop.f32.mrf.mxu0
    %v2021 = vadd.f32 %v1844, %v2020
    %2022 = vmatprep.mubr.f32.mxu0 0.0
    %v2023 = vand.u32 %v142, 4294901760
    %2024 = vmatmul.mubr.f32.gmra.mxu0 %v2023
    %v2025 = vpop.f32.mrf.mxu0
    %v2026 = vadd.f32 %v1853, %v2025
    %v2027 = vpop.f32.mrf.mxu0
    %v2028 = vadd.f32 %v1855, %v2027
    %2029 = vdwg.mxu0
    %2030 = vmatprep.subr.mxu0 0.0
    %2031 = vmatpush1.msra.mxu0 0.0
    %2032 = vmatprep.subr.mxu0 0.0
    %2033 = vmatpush1.msra.mxu0 0.0
    %2034 = vmatprep.subr.mxu0 0.0
    %2035 = vmatpush1.msra.mxu0 0.0
    %2036 = vmatprep.subr.mxu0 0.0
    %2037 = vmatpush1.msra.mxu0 0.0
    %2038 = vmatprep.subr.mxu0 0.0
    %2039 = vmatpush1.msra.mxu0 0.0
    %2040 = vmatprep.subr.mxu0 0.0
    %2041 = vmatpush1.msra.mxu0 0.0
    %2042 = vmatprep.subr.mxu0 0.0
    %2043 = vmatpush1.msra.mxu0 0.0
    %2044 = vmatprep.subr.mxu0 0.0
    %2045 = vmatpush1.msra.mxu0 0.0
    %v2046 = vand.u32 %v130, 4294901760
    %v2047 = vsub.f32 %v130, %v2046
    %2048 = vmatprep.subr.mxu0 %v2047
    %v2049 = vand.u32 %v129, 4294901760
    %v2050 = vsub.f32 %v129, %v2049
    %2051 = vmatpush1.msra.mxu0 %v2050
    %v2052 = vand.u32 %v124, 4294901760
    %v2053 = vsub.f32 %v124, %v2052
    %2054 = vmatprep.subr.mxu0 %v2053
    %v2055 = vand.u32 %v123, 4294901760
    %v2056 = vsub.f32 %v123, %v2055
    %2057 = vmatpush1.msra.mxu0 %v2056
    %v2058 = vand.u32 %v118, 4294901760
    %v2059 = vsub.f32 %v118, %v2058
    %2060 = vmatprep.subr.mxu0 %v2059
    %v2061 = vand.u32 %v117, 4294901760
    %v2062 = vsub.f32 %v117, %v2061
    %2063 = vmatpush1.msra.mxu0 %v2062
    %v2064 = vand.u32 %v112, 4294901760
    %v2065 = vsub.f32 %v112, %v2064
    %2066 = vmatprep.subr.mxu0 %v2065
    %v2067 = vand.u32 %v111, 4294901760
    %v2068 = vsub.f32 %v111, %v2067
    %2069 = vmatpush1.msra.mxu0 %v2068
    %v2070 = vand.u32 %v106, 4294901760
    %v2071 = vsub.f32 %v106, %v2070
    %2072 = vmatprep.subr.mxu0 %v2071
    %v2073 = vand.u32 %v105, 4294901760
    %v2074 = vsub.f32 %v105, %v2073
    %2075 = vmatpush1.msra.mxu0 %v2074
    %v2076 = vand.u32 %v100, 4294901760
    %v2077 = vsub.f32 %v100, %v2076
    %2078 = vmatprep.subr.mxu0 %v2077
    %v2079 = vand.u32 %v99, 4294901760
    %v2080 = vsub.f32 %v99, %v2079
    %2081 = vmatpush1.msra.mxu0 %v2080
    %v2082 = vand.u32 %v94, 4294901760
    %v2083 = vsub.f32 %v94, %v2082
    %2084 = vmatprep.subr.mxu0 %v2083
    %v2085 = vand.u32 %v93, 4294901760
    %v2086 = vsub.f32 %v93, %v2085
    %2087 = vmatpush1.msra.mxu0 %v2086
    %v2088 = vand.u32 %v88, 4294901760
    %v2089 = vsub.f32 %v88, %v2088
    %2090 = vmatprep.subr.mxu0 %v2089
    %v2091 = vand.u32 %v87, 4294901760
    %v2092 = vsub.f32 %v87, %v2091
    %2093 = vmatpush1.msra.mxu0 %v2092
    %2094 = vmatprep.subr.mxu0 0.0
    %2095 = vmatpush2.msra.mxu0 0.0
    %2096 = vmatprep.subr.mxu0 0.0
    %2097 = vmatpush2.msra.mxu0 0.0
    %2098 = vmatprep.subr.mxu0 0.0
    %2099 = vmatpush2.msra.mxu0 0.0
    %2100 = vmatprep.subr.mxu0 0.0
    %2101 = vmatpush2.msra.mxu0 0.0
    %2102 = vmatprep.subr.mxu0 0.0
    %2103 = vmatpush2.msra.mxu0 0.0
    %2104 = vmatprep.subr.mxu0 0.0
    %2105 = vmatpush2.msra.mxu0 0.0
    %2106 = vmatprep.subr.mxu0 0.0
    %2107 = vmatpush2.msra.mxu0 0.0
    %2108 = vmatprep.subr.mxu0 0.0
    %2109 = vmatpush2.msra.mxu0 0.0
    %2110 = vmatprep.subr.mxu0 0.0
    %2111 = vmatpush2.msra.mxu0 0.0
    %2112 = vmatprep.subr.mxu0 0.0
    %2113 = vmatpush2.msra.mxu0 0.0
    %2114 = vmatprep.subr.mxu0 0.0
    %2115 = vmatpush2.msra.mxu0 0.0
    %2116 = vmatprep.subr.mxu0 0.0
    %2117 = vmatpush2.msra.mxu0 0.0
    %2118 = vmatprep.subr.mxu0 0.0
    %2119 = vmatpush2.msra.mxu0 0.0
    %2120 = vmatprep.subr.mxu0 0.0
    %2121 = vmatpush2.msra.mxu0 0.0
    %2122 = vmatprep.subr.mxu0 0.0
    %2123 = vmatpush2.msra.mxu0 0.0
    %2124 = vmatprep.subr.mxu0 0.0
    %2125 = vmatpush2.msra.mxu0 0.0
    %2126 = vmatprep.mubr.f32.mxu0 0.0
    %v2127 = vand.u32 %v133, 4294901760
    %v2128 = vsub.f32 %v133, %v2127
    %2129 = vmatmul.mubr.f32.gmra.mxu0 %v2128
    %v2130 = vpop.f32.mrf.mxu0
    %v2131 = vadd.f32 %v2005, %v2130
    %v2132 = vpop.f32.mrf.mxu0
    %v2133 = vadd.f32 %v2007, %v2132
    %2134 = vmatprep.mubr.f32.mxu0 0.0
    %v2135 = vand.u32 %v136, 4294901760
    %v2136 = vsub.f32 %v136, %v2135
    %2137 = vmatmul.mubr.f32.gmra.mxu0 %v2136
    %v2138 = vpop.f32.mrf.mxu0
    %v2139 = vadd.f32 %v2012, %v2138
    %v2140 = vpop.f32.mrf.mxu0
    %v2141 = vadd.f32 %v2014, %v2140
    %2142 = vmatprep.mubr.f32.mxu0 0.0
    %v2143 = vand.u32 %v139, 4294901760
    %v2144 = vsub.f32 %v139, %v2143
    %2145 = vmatmul.mubr.f32.gmra.mxu0 %v2144
    %v2146 = vpop.f32.mrf.mxu0
    %v2147 = vadd.f32 %v2019, %v2146
    %v2148 = vpop.f32.mrf.mxu0
    %v2149 = vadd.f32 %v2021, %v2148
    %2150 = vmatprep.mubr.f32.mxu0 0.0
    %v2151 = vand.u32 %v142, 4294901760
    %v2152 = vsub.f32 %v142, %v2151
    %2153 = vmatmul.mubr.f32.gmra.mxu0 %v2152
    %v2154 = vpop.f32.mrf.mxu0
    %v2155 = vadd.f32 %v2026, %v2154
    %v2156 = vpop.f32.mrf.mxu0
    %v2157 = vadd.f32 %v2028, %v2156
    %2158 = vdwg.mxu0
    %2159 = vmatprep.subr.mxu0 0.0
    %2160 = vmatpush1.msra.mxu0 0.0
    %2161 = vmatprep.subr.mxu0 0.0
    %2162 = vmatpush1.msra.mxu0 0.0
    %2163 = vmatprep.subr.mxu0 0.0
    %2164 = vmatpush1.msra.mxu0 0.0
    %2165 = vmatprep.subr.mxu0 0.0
    %2166 = vmatpush1.msra.mxu0 0.0
    %2167 = vmatprep.subr.mxu0 0.0
    %2168 = vmatpush1.msra.mxu0 0.0
    %2169 = vmatprep.subr.mxu0 0.0
    %2170 = vmatpush1.msra.mxu0 0.0
    %2171 = vmatprep.subr.mxu0 0.0
    %2172 = vmatpush1.msra.mxu0 0.0
    %2173 = vmatprep.subr.mxu0 0.0
    %2174 = vmatpush1.msra.mxu0 0.0
    %v2175 = vand.u32 %v130, 4294901760
    %2176 = vmatprep.subr.mxu0 %v2175
    %v2177 = vand.u32 %v129, 4294901760
    %2178 = vmatpush1.msra.mxu0 %v2177
    %v2179 = vand.u32 %v124, 4294901760
    %2180 = vmatprep.subr.mxu0 %v2179
    %v2181 = vand.u32 %v123, 4294901760
    %2182 = vmatpush1.msra.mxu0 %v2181
    %v2183 = vand.u32 %v118, 4294901760
    %2184 = vmatprep.subr.mxu0 %v2183
    %v2185 = vand.u32 %v117, 4294901760
    %2186 = vmatpush1.msra.mxu0 %v2185
    %v2187 = vand.u32 %v112, 4294901760
    %2188 = vmatprep.subr.mxu0 %v2187
    %v2189 = vand.u32 %v111, 4294901760
    %2190 = vmatpush1.msra.mxu0 %v2189
    %v2191 = vand.u32 %v106, 4294901760
    %2192 = vmatprep.subr.mxu0 %v2191
    %v2193 = vand.u32 %v105, 4294901760
    %2194 = vmatpush1.msra.mxu0 %v2193
    %v2195 = vand.u32 %v100, 4294901760
    %2196 = vmatprep.subr.mxu0 %v2195
    %v2197 = vand.u32 %v99, 4294901760
    %2198 = vmatpush1.msra.mxu0 %v2197
    %v2199 = vand.u32 %v94, 4294901760
    %2200 = vmatprep.subr.mxu0 %v2199
    %v2201 = vand.u32 %v93, 4294901760
    %2202 = vmatpush1.msra.mxu0 %v2201
    %v2203 = vand.u32 %v88, 4294901760
    %2204 = vmatprep.subr.mxu0 %v2203
    %v2205 = vand.u32 %v87, 4294901760
    %2206 = vmatpush1.msra.mxu0 %v2205
    %2207 = vmatprep.subr.mxu0 0.0
    %2208 = vmatpush2.msra.mxu0 0.0
    %2209 = vmatprep.subr.mxu0 0.0
    %2210 = vmatpush2.msra.mxu0 0.0
    %2211 = vmatprep.subr.mxu0 0.0
    %2212 = vmatpush2.msra.mxu0 0.0
    %2213 = vmatprep.subr.mxu0 0.0
    %2214 = vmatpush2.msra.mxu0 0.0
    %2215 = vmatprep.subr.mxu0 0.0
    %2216 = vmatpush2.msra.mxu0 0.0
    %2217 = vmatprep.subr.mxu0 0.0
    %2218 = vmatpush2.msra.mxu0 0.0
    %2219 = vmatprep.subr.mxu0 0.0
    %2220 = vmatpush2.msra.mxu0 0.0
    %2221 = vmatprep.subr.mxu0 0.0
    %2222 = vmatpush2.msra.mxu0 0.0
    %2223 = vmatprep.subr.mxu0 0.0
    %2224 = vmatpush2.msra.mxu0 0.0
    %2225 = vmatprep.subr.mxu0 0.0
    %2226 = vmatpush2.msra.mxu0 0.0
    %2227 = vmatprep.subr.mxu0 0.0
    %2228 = vmatpush2.msra.mxu0 0.0
    %2229 = vmatprep.subr.mxu0 0.0
    %2230 = vmatpush2.msra.mxu0 0.0
    %2231 = vmatprep.subr.mxu0 0.0
    %2232 = vmatpush2.msra.mxu0 0.0
    %2233 = vmatprep.subr.mxu0 0.0
    %2234 = vmatpush2.msra.mxu0 0.0
    %2235 = vmatprep.subr.mxu0 0.0
    %2236 = vmatpush2.msra.mxu0 0.0
    %2237 = vmatprep.subr.mxu0 0.0
    %2238 = vmatpush2.msra.mxu0 0.0
    %2239 = vmatprep.mubr.f32.mxu0 0.0
    %v2240 = vand.u32 %v133, 4294901760
    %v2241 = vsub.f32 %v133, %v2240
    %v2242 = vand.u32 %v2241, 4294901760
    %2243 = vmatmul.mubr.f32.gmra.mxu0 %v2242
    %v2244 = vpop.f32.mrf.mxu0
    %v2245 = vadd.f32 %v2131, %v2244
    %v2246 = vpop.f32.mrf.mxu0
    %v2247 = vadd.f32 %v2133, %v2246
    %2248 = vmatprep.mubr.f32.mxu0 0.0
    %v2249 = vand.u32 %v136, 4294901760
    %v2250 = vsub.f32 %v136, %v2249
    %v2251 = vand.u32 %v2250, 4294901760
    %2252 = vmatmul.mubr.f32.gmra.mxu0 %v2251
    %v2253 = vpop.f32.mrf.mxu0
    %v2254 = vadd.f32 %v2139, %v2253
    %v2255 = vpop.f32.mrf.mxu0
    %v2256 = vadd.f32 %v2141, %v2255
    %2257 = vmatprep.mubr.f32.mxu0 0.0
    %v2258 = vand.u32 %v139, 4294901760
    %v2259 = vsub.f32 %v139, %v2258
    %v2260 = vand.u32 %v2259, 4294901760
    %2261 = vmatmul.mubr.f32.gmra.mxu0 %v2260
    %v2262 = vpop.f32.mrf.mxu0
    %v2263 = vadd.f32 %v2147, %v2262
    %v2264 = vpop.f32.mrf.mxu0
    %v2265 = vadd.f32 %v2149, %v2264
    %2266 = vmatprep.mubr.f32.mxu0 0.0
    %v2267 = vand.u32 %v142, 4294901760
    %v2268 = vsub.f32 %v142, %v2267
    %v2269 = vand.u32 %v2268, 4294901760
    %2270 = vmatmul.mubr.f32.gmra.mxu0 %v2269
    %v2271 = vpop.f32.mrf.mxu0
    %v2272 = vadd.f32 %v2155, %v2271
    %v2273 = vpop.f32.mrf.mxu0
    %v2274 = vadd.f32 %v2157, %v2273
    %2275 = vdwg.mxu0
    %2276 = vmatprep.subr.mxu0 0.0
    %2277 = vmatpush1.msra.mxu0 0.0
    %2278 = vmatprep.subr.mxu0 0.0
    %2279 = vmatpush1.msra.mxu0 0.0
    %2280 = vmatprep.subr.mxu0 0.0
    %2281 = vmatpush1.msra.mxu0 0.0
    %2282 = vmatprep.subr.mxu0 0.0
    %2283 = vmatpush1.msra.mxu0 0.0
    %2284 = vmatprep.subr.mxu0 0.0
    %2285 = vmatpush1.msra.mxu0 0.0
    %2286 = vmatprep.subr.mxu0 0.0
    %2287 = vmatpush1.msra.mxu0 0.0
    %2288 = vmatprep.subr.mxu0 0.0
    %2289 = vmatpush1.msra.mxu0 0.0
    %2290 = vmatprep.subr.mxu0 0.0
    %2291 = vmatpush1.msra.mxu0 0.0
    %v2292 = vand.u32 %v130, 4294901760
    %v2293 = vsub.f32 %v130, %v2292
    %v2294 = vand.u32 %v2293, 4294901760
    %2295 = vmatprep.subr.mxu0 %v2294
    %v2296 = vand.u32 %v129, 4294901760
    %v2297 = vsub.f32 %v129, %v2296
    %v2298 = vand.u32 %v2297, 4294901760
    %2299 = vmatpush1.msra.mxu0 %v2298
    %v2300 = vand.u32 %v124, 4294901760
    %v2301 = vsub.f32 %v124, %v2300
    %v2302 = vand.u32 %v2301, 4294901760
    %2303 = vmatprep.subr.mxu0 %v2302
    %v2304 = vand.u32 %v123, 4294901760
    %v2305 = vsub.f32 %v123, %v2304
    %v2306 = vand.u32 %v2305, 4294901760
    %2307 = vmatpush1.msra.mxu0 %v2306
    %v2308 = vand.u32 %v118, 4294901760
    %v2309 = vsub.f32 %v118, %v2308
    %v2310 = vand.u32 %v2309, 4294901760
    %2311 = vmatprep.subr.mxu0 %v2310
    %v2312 = vand.u32 %v117, 4294901760
    %v2313 = vsub.f32 %v117, %v2312
    %v2314 = vand.u32 %v2313, 4294901760
    %2315 = vmatpush1.msra.mxu0 %v2314
    %v2316 = vand.u32 %v112, 4294901760
    %v2317 = vsub.f32 %v112, %v2316
    %v2318 = vand.u32 %v2317, 4294901760
    %2319 = vmatprep.subr.mxu0 %v2318
    %v2320 = vand.u32 %v111, 4294901760
    %v2321 = vsub.f32 %v111, %v2320
    %v2322 = vand.u32 %v2321, 4294901760
    %2323 = vmatpush1.msra.mxu0 %v2322
    %v2324 = vand.u32 %v106, 4294901760
    %v2325 = vsub.f32 %v106, %v2324
    %v2326 = vand.u32 %v2325, 4294901760
    %2327 = vmatprep.subr.mxu0 %v2326
    %v2328 = vand.u32 %v105, 4294901760
    %v2329 = vsub.f32 %v105, %v2328
    %v2330 = vand.u32 %v2329, 4294901760
    %2331 = vmatpush1.msra.mxu0 %v2330
    %v2332 = vand.u32 %v100, 4294901760
    %v2333 = vsub.f32 %v100, %v2332
    %v2334 = vand.u32 %v2333, 4294901760
    %2335 = vmatprep.subr.mxu0 %v2334
    %v2336 = vand.u32 %v99, 4294901760
    %v2337 = vsub.f32 %v99, %v2336
    %v2338 = vand.u32 %v2337, 4294901760
    %2339 = vmatpush1.msra.mxu0 %v2338
    %v2340 = vand.u32 %v94, 4294901760
    %v2341 = vsub.f32 %v94, %v2340
    %v2342 = vand.u32 %v2341, 4294901760
    %2343 = vmatprep.subr.mxu0 %v2342
    %v2344 = vand.u32 %v93, 4294901760
    %v2345 = vsub.f32 %v93, %v2344
    %v2346 = vand.u32 %v2345, 4294901760
    %2347 = vmatpush1.msra.mxu0 %v2346
    %v2348 = vand.u32 %v88, 4294901760
    %v2349 = vsub.f32 %v88, %v2348
    %v2350 = vand.u32 %v2349, 4294901760
    %2351 = vmatprep.subr.mxu0 %v2350
    %v2352 = vand.u32 %v87, 4294901760
    %v2353 = vsub.f32 %v87, %v2352
    %v2354 = vand.u32 %v2353, 4294901760
    %2355 = vmatpush1.msra.mxu0 %v2354
    %2356 = vmatprep.subr.mxu0 0.0
    %2357 = vmatpush2.msra.mxu0 0.0
    %2358 = vmatprep.subr.mxu0 0.0
    %2359 = vmatpush2.msra.mxu0 0.0
    %2360 = vmatprep.subr.mxu0 0.0
    %2361 = vmatpush2.msra.mxu0 0.0
    %2362 = vmatprep.subr.mxu0 0.0
    %2363 = vmatpush2.msra.mxu0 0.0
    %2364 = vmatprep.subr.mxu0 0.0
    %2365 = vmatpush2.msra.mxu0 0.0
    %2366 = vmatprep.subr.mxu0 0.0
    %2367 = vmatpush2.msra.mxu0 0.0
    %2368 = vmatprep.subr.mxu0 0.0
    %2369 = vmatpush2.msra.mxu0 0.0
    %2370 = vmatprep.subr.mxu0 0.0
    %2371 = vmatpush2.msra.mxu0 0.0
    %2372 = vmatprep.subr.mxu0 0.0
    %2373 = vmatpush2.msra.mxu0 0.0
    %2374 = vmatprep.subr.mxu0 0.0
    %2375 = vmatpush2.msra.mxu0 0.0
    %2376 = vmatprep.subr.mxu0 0.0
    %2377 = vmatpush2.msra.mxu0 0.0
    %2378 = vmatprep.subr.mxu0 0.0
    %2379 = vmatpush2.msra.mxu0 0.0
    %2380 = vmatprep.subr.mxu0 0.0
    %2381 = vmatpush2.msra.mxu0 0.0
    %2382 = vmatprep.subr.mxu0 0.0
    %2383 = vmatpush2.msra.mxu0 0.0
    %2384 = vmatprep.subr.mxu0 0.0
    %2385 = vmatpush2.msra.mxu0 0.0
    %2386 = vmatprep.subr.mxu0 0.0
    %2387 = vmatpush2.msra.mxu0 0.0
    %2388 = vmatprep.mubr.f32.mxu0 0.0
    %v2389 = vand.u32 %v133, 4294901760
    %2390 = vmatmul.mubr.f32.gmra.mxu0 %v2389
    %v2391 = vpop.f32.mrf.mxu0
    %v2392 = vadd.f32 %v2245, %v2391
    %v2393 = vpop.f32.mrf.mxu0
    %v2394 = vadd.f32 %v2247, %v2393
    %2395 = vmatprep.mubr.f32.mxu0 0.0
    %v2396 = vand.u32 %v136, 4294901760
    %2397 = vmatmul.mubr.f32.gmra.mxu0 %v2396
    %v2398 = vpop.f32.mrf.mxu0
    %v2399 = vadd.f32 %v2254, %v2398
    %v2400 = vpop.f32.mrf.mxu0
    %v2401 = vadd.f32 %v2256, %v2400
    %2402 = vmatprep.mubr.f32.mxu0 0.0
    %v2403 = vand.u32 %v139, 4294901760
    %2404 = vmatmul.mubr.f32.gmra.mxu0 %v2403
    %v2405 = vpop.f32.mrf.mxu0
    %v2406 = vadd.f32 %v2263, %v2405
    %v2407 = vpop.f32.mrf.mxu0
    %v2408 = vadd.f32 %v2265, %v2407
    %2409 = vmatprep.mubr.f32.mxu0 0.0
    %v2410 = vand.u32 %v142, 4294901760
    %2411 = vmatmul.mubr.f32.gmra.mxu0 %v2410
    %v2412 = vpop.f32.mrf.mxu0
    %v2413 = vadd.f32 %v2272, %v2412
    %v2414 = vpop.f32.mrf.mxu0
    %v2415 = vadd.f32 %v2274, %v2414
    %2416 = vdwg.mxu0
    %2417 = vmatprep.subr.mxu0 0.0
    %2418 = vmatpush1.msra.mxu0 0.0
    %2419 = vmatprep.subr.mxu0 0.0
    %2420 = vmatpush1.msra.mxu0 0.0
    %2421 = vmatprep.subr.mxu0 0.0
    %2422 = vmatpush1.msra.mxu0 0.0
    %2423 = vmatprep.subr.mxu0 0.0
    %2424 = vmatpush1.msra.mxu0 0.0
    %2425 = vmatprep.subr.mxu0 0.0
    %2426 = vmatpush1.msra.mxu0 0.0
    %2427 = vmatprep.subr.mxu0 0.0
    %2428 = vmatpush1.msra.mxu0 0.0
    %2429 = vmatprep.subr.mxu0 0.0
    %2430 = vmatpush1.msra.mxu0 0.0
    %2431 = vmatprep.subr.mxu0 0.0
    %2432 = vmatpush1.msra.mxu0 0.0
    %v2433 = vand.u32 %v130, 4294901760
    %2434 = vmatprep.subr.mxu0 %v2433
    %v2435 = vand.u32 %v129, 4294901760
    %2436 = vmatpush1.msra.mxu0 %v2435
    %v2437 = vand.u32 %v124, 4294901760
    %2438 = vmatprep.subr.mxu0 %v2437
    %v2439 = vand.u32 %v123, 4294901760
    %2440 = vmatpush1.msra.mxu0 %v2439
    %v2441 = vand.u32 %v118, 4294901760
    %2442 = vmatprep.subr.mxu0 %v2441
    %v2443 = vand.u32 %v117, 4294901760
    %2444 = vmatpush1.msra.mxu0 %v2443
    %v2445 = vand.u32 %v112, 4294901760
    %2446 = vmatprep.subr.mxu0 %v2445
    %v2447 = vand.u32 %v111, 4294901760
    %2448 = vmatpush1.msra.mxu0 %v2447
    %v2449 = vand.u32 %v106, 4294901760
    %2450 = vmatprep.subr.mxu0 %v2449
    %v2451 = vand.u32 %v105, 4294901760
    %2452 = vmatpush1.msra.mxu0 %v2451
    %v2453 = vand.u32 %v100, 4294901760
    %2454 = vmatprep.subr.mxu0 %v2453
    %v2455 = vand.u32 %v99, 4294901760
    %2456 = vmatpush1.msra.mxu0 %v2455
    %v2457 = vand.u32 %v94, 4294901760
    %2458 = vmatprep.subr.mxu0 %v2457
    %v2459 = vand.u32 %v93, 4294901760
    %2460 = vmatpush1.msra.mxu0 %v2459
    %v2461 = vand.u32 %v88, 4294901760
    %2462 = vmatprep.subr.mxu0 %v2461
    %v2463 = vand.u32 %v87, 4294901760
    %2464 = vmatpush1.msra.mxu0 %v2463
    %2465 = vmatprep.subr.mxu0 0.0
    %2466 = vmatpush2.msra.mxu0 0.0
    %2467 = vmatprep.subr.mxu0 0.0
    %2468 = vmatpush2.msra.mxu0 0.0
    %2469 = vmatprep.subr.mxu0 0.0
    %2470 = vmatpush2.msra.mxu0 0.0
    %2471 = vmatprep.subr.mxu0 0.0
    %2472 = vmatpush2.msra.mxu0 0.0
    %2473 = vmatprep.subr.mxu0 0.0
    %2474 = vmatpush2.msra.mxu0 0.0
    %2475 = vmatprep.subr.mxu0 0.0
    %2476 = vmatpush2.msra.mxu0 0.0
    %2477 = vmatprep.subr.mxu0 0.0
    %2478 = vmatpush2.msra.mxu0 0.0
    %2479 = vmatprep.subr.mxu0 0.0
    %2480 = vmatpush2.msra.mxu0 0.0
    %2481 = vmatprep.subr.mxu0 0.0
    %2482 = vmatpush2.msra.mxu0 0.0
    %2483 = vmatprep.subr.mxu0 0.0
    %2484 = vmatpush2.msra.mxu0 0.0
    %2485 = vmatprep.subr.mxu0 0.0
    %2486 = vmatpush2.msra.mxu0 0.0
    %2487 = vmatprep.subr.mxu0 0.0
    %2488 = vmatpush2.msra.mxu0 0.0
    %2489 = vmatprep.subr.mxu0 0.0
    %2490 = vmatpush2.msra.mxu0 0.0
    %2491 = vmatprep.subr.mxu0 0.0
    %2492 = vmatpush2.msra.mxu0 0.0
    %2493 = vmatprep.subr.mxu0 0.0
    %2494 = vmatpush2.msra.mxu0 0.0
    %2495 = vmatprep.subr.mxu0 0.0
    %2496 = vmatpush2.msra.mxu0 0.0
    %2497 = vmatprep.mubr.f32.mxu0 0.0
    %v2498 = vand.u32 %v133, 4294901760
    %2499 = vmatmul.mubr.f32.gmra.mxu0 %v2498
    %v2500 = vpop.f32.mrf.mxu0
    %v2501 = vadd.f32 %v2392, %v2500
    %v2502 = vpop.f32.mrf.mxu0
    %v2503 = vadd.f32 %v2394, %v2502
    %2504 = vmatprep.mubr.f32.mxu0 0.0
    %v2505 = vand.u32 %v136, 4294901760
    %2506 = vmatmul.mubr.f32.gmra.mxu0 %v2505
    %v2507 = vpop.f32.mrf.mxu0
    %v2508 = vadd.f32 %v2399, %v2507
    %v2509 = vpop.f32.mrf.mxu0
    %v2510 = vadd.f32 %v2401, %v2509
    %2511 = vmatprep.mubr.f32.mxu0 0.0
    %v2512 = vand.u32 %v139, 4294901760
    %2513 = vmatmul.mubr.f32.gmra.mxu0 %v2512
    %v2514 = vpop.f32.mrf.mxu0
    %v2515 = vadd.f32 %v2406, %v2514
    %v2516 = vpop.f32.mrf.mxu0
    %v2517 = vadd.f32 %v2408, %v2516
    %2518 = vmatprep.mubr.f32.mxu0 0.0
    %v2519 = vand.u32 %v142, 4294901760
    %2520 = vmatmul.mubr.f32.gmra.mxu0 %v2519
    %v2521 = vpop.f32.mrf.mxu0
    %v2522 = vadd.f32 %v2413, %v2521
    %v2523 = vpop.f32.mrf.mxu0
    %v2524 = vadd.f32 %v2415, %v2523
    %2525 = vdwg.mxu0
    %v2526 = vld [vmem:[#allocation7] sm:$0xff]
    %v2527 = vld [vmem:[#allocation7 + $0x8] sm:$0xff]
    %v2528 = vld [vmem:[#allocation7 + $0x10] sm:$0xff]
    %v2529 = vld [vmem:[#allocation7 + $0x18] sm:$0xff]
    %v2530 = vld [vmem:[#allocation7 + $0x20] sm:$0xff]
    %v2531 = vld [vmem:[#allocation7 + $0x28] sm:$0xff]
    %v2532 = vld [vmem:[#allocation7 + $0x30] sm:$0xff]
    %v2533 = vld [vmem:[#allocation7 + $0x38] sm:$0xff]
    %vm2534 = vcmask 785408
    %v2536 = vsel %vm2534, %v2526, 0
    %v2539 = vsel %vm2534, %v2527, 0
    %v2542 = vsel %vm2534, %v2528, 0
    %v2545 = vsel %vm2534, %v2529, 0
    %v2548 = vsel %vm2534, %v2530, 0
    %v2551 = vsel %vm2534, %v2531, 0
    %v2554 = vsel %vm2534, %v2532, 0
    %v2557 = vsel %vm2534, %v2533, 0
    %2559 = vmatprep.subr.mxu0 0.0
    %2560 = vmatpush1.msra.mxu0 0.0
    %2561 = vmatprep.subr.mxu0 0.0
    %2562 = vmatpush1.msra.mxu0 0.0
    %2563 = vmatprep.subr.mxu0 0.0
    %2564 = vmatpush1.msra.mxu0 0.0
    %2565 = vmatprep.subr.mxu0 0.0
    %2566 = vmatpush1.msra.mxu0 0.0
    %v2567 = vand.u32 %v2524, 4294901760
    %2568 = vmatprep.subr.mxu0 %v2567
    %v2569 = vand.u32 %v2522, 4294901760
    %2570 = vmatpush1.msra.mxu0 %v2569
    %v2571 = vand.u32 %v2517, 4294901760
    %2572 = vmatprep.subr.mxu0 %v2571
    %v2573 = vand.u32 %v2515, 4294901760
    %2574 = vmatpush1.msra.mxu0 %v2573
    %v2575 = vand.u32 %v1730, 4294901760
    %2576 = vmatprep.subr.mxu0 %v2575
    %v2577 = vand.u32 %v1728, 4294901760
    %2578 = vmatpush1.msra.mxu0 %v2577
    %v2579 = vand.u32 %v1723, 4294901760
    %2580 = vmatprep.subr.mxu0 %v2579
    %v2581 = vand.u32 %v1721, 4294901760
    %2582 = vmatpush1.msra.mxu0 %v2581
    %v2583 = vand.u32 %v936, 4294901760
    %2584 = vmatprep.subr.mxu0 %v2583
    %v2585 = vand.u32 %v934, 4294901760
    %2586 = vmatpush1.msra.mxu0 %v2585
    %v2587 = vand.u32 %v929, 4294901760
    %2588 = vmatprep.subr.mxu0 %v2587
    %v2589 = vand.u32 %v927, 4294901760
    %2590 = vmatpush1.msra.mxu0 %v2589
    %v2591 = vand.u32 %v2510, 4294901760
    %2592 = vmatprep.subr.mxu0 %v2591
    %v2593 = vand.u32 %v2508, 4294901760
    %2594 = vmatpush1.msra.mxu0 %v2593
    %v2595 = vand.u32 %v2503, 4294901760
    %2596 = vmatprep.subr.mxu0 %v2595
    %v2597 = vand.u32 %v2501, 4294901760
    %2598 = vmatpush1.msra.mxu0 %v2597
    %v2599 = vand.u32 %v1716, 4294901760
    %2600 = vmatprep.subr.mxu0 %v2599
    %v2601 = vand.u32 %v1714, 4294901760
    %2602 = vmatpush1.msra.mxu0 %v2601
    %v2603 = vand.u32 %v1709, 4294901760
    %2604 = vmatprep.subr.mxu0 %v2603
    %v2605 = vand.u32 %v1707, 4294901760
    %2606 = vmatpush1.msra.mxu0 %v2605
    %v2607 = vand.u32 %v922, 4294901760
    %2608 = vmatprep.subr.mxu0 %v2607
    %v2609 = vand.u32 %v920, 4294901760
    %2610 = vmatpush1.msra.mxu0 %v2609
    %v2611 = vand.u32 %v915, 4294901760
    %2612 = vmatprep.subr.mxu0 %v2611
    %v2613 = vand.u32 %v913, 4294901760
    %2614 = vmatpush1.msra.mxu0 %v2613
    %2615 = vmatprep.subr.mxu0 0.0
    %2616 = vmatpush2.msra.mxu0 0.0
    %2617 = vmatprep.subr.mxu0 0.0
    %2618 = vmatpush2.msra.mxu0 0.0
    %2619 = vmatprep.subr.mxu0 0.0
    %2620 = vmatpush2.msra.mxu0 0.0
    %2621 = vmatprep.subr.mxu0 0.0
    %2622 = vmatpush2.msra.mxu0 0.0
    %2623 = vmatprep.subr.mxu0 0.0
    %2624 = vmatpush2.msra.mxu0 0.0
    %2625 = vmatprep.subr.mxu0 0.0
    %2626 = vmatpush2.msra.mxu0 0.0
    %2627 = vmatprep.subr.mxu0 0.0
    %2628 = vmatpush2.msra.mxu0 0.0
    %2629 = vmatprep.subr.mxu0 0.0
    %2630 = vmatpush2.msra.mxu0 0.0
    %2631 = vmatprep.subr.mxu0 0.0
    %2632 = vmatpush2.msra.mxu0 0.0
    %2633 = vmatprep.subr.mxu0 0.0
    %2634 = vmatpush2.msra.mxu0 0.0
    %2635 = vmatprep.subr.mxu0 0.0
    %2636 = vmatpush2.msra.mxu0 0.0
    %2637 = vmatprep.subr.mxu0 0.0
    %2638 = vmatpush2.msra.mxu0 0.0
    %2639 = vmatprep.subr.mxu0 0.0
    %2640 = vmatpush2.msra.mxu0 0.0
    %2641 = vmatprep.subr.mxu0 0.0
    %2642 = vmatpush2.msra.mxu0 0.0
    %2643 = vmatprep.subr.mxu0 0.0
    %2644 = vmatpush2.msra.mxu0 0.0
    %2645 = vmatprep.subr.mxu0 0.0
    %2646 = vmatpush2.msra.mxu0 0.0
    %2647 = vmatprep.mubr.f32.mxu0 0.0
    %v2648 = vand.u32 %v2536, 4294901760
    %v2649 = vsub.f32 %v2536, %v2648
    %v2650 = vand.u32 %v2649, 4294901760
    %v2651 = vsub.f32 %v2649, %v2650
    %v2652 = vand.u32 %v2651, 4294901760
    %2653 = vmatmul.mubr.f32.gmra.mxu0 %v2652
    %v2654 = vpop.f32.mrf.mxu0
    %v2655 = vadd.f32 0.0, %v2654
    %v2656 = vpop.f32.mrf.mxu0
    %v2657 = vadd.f32 0.0, %v2656
    %2658 = vmatprep.mubr.f32.mxu0 0.0
    %v2659 = vand.u32 %v2539, 4294901760
    %v2660 = vsub.f32 %v2539, %v2659
    %v2661 = vand.u32 %v2660, 4294901760
    %v2662 = vsub.f32 %v2660, %v2661
    %v2663 = vand.u32 %v2662, 4294901760
    %2664 = vmatmul.mubr.f32.gmra.mxu0 %v2663
    %v2665 = vpop.f32.mrf.mxu0
    %v2666 = vadd.f32 0.0, %v2665
    %v2667 = vpop.f32.mrf.mxu0
    %v2668 = vadd.f32 0.0, %v2667
    %2669 = vmatprep.mubr.f32.mxu0 0.0
    %v2670 = vand.u32 %v2542, 4294901760
    %v2671 = vsub.f32 %v2542, %v2670
    %v2672 = vand.u32 %v2671, 4294901760
    %v2673 = vsub.f32 %v2671, %v2672
    %v2674 = vand.u32 %v2673, 4294901760
    %2675 = vmatmul.mubr.f32.gmra.mxu0 %v2674
    %v2676 = vpop.f32.mrf.mxu0
    %v2677 = vadd.f32 0.0, %v2676
    %v2678 = vpop.f32.mrf.mxu0
    %v2679 = vadd.f32 0.0, %v2678
    %2680 = vmatprep.mubr.f32.mxu0 0.0
    %v2681 = vand.u32 %v2545, 4294901760
    %v2682 = vsub.f32 %v2545, %v2681
    %v2683 = vand.u32 %v2682, 4294901760
    %v2684 = vsub.f32 %v2682, %v2683
    %v2685 = vand.u32 %v2684, 4294901760
    %2686 = vmatmul.mubr.f32.gmra.mxu0 %v2685
    %v2687 = vpop.f32.mrf.mxu0
    %v2688 = vadd.f32 0.0, %v2687
    %v2689 = vpop.f32.mrf.mxu0
    %v2690 = vadd.f32 0.0, %v2689
    %2691 = vmatprep.mubr.f32.mxu0 0.0
    %v2692 = vand.u32 %v2548, 4294901760
    %v2693 = vsub.f32 %v2548, %v2692
    %v2694 = vand.u32 %v2693, 4294901760
    %v2695 = vsub.f32 %v2693, %v2694
    %v2696 = vand.u32 %v2695, 4294901760
    %2697 = vmatmul.mubr.f32.gmra.mxu0 %v2696
    %v2698 = vpop.f32.mrf.mxu0
    %v2699 = vadd.f32 0.0, %v2698
    %v2700 = vpop.f32.mrf.mxu0
    %v2701 = vadd.f32 0.0, %v2700
    %2702 = vmatprep.mubr.f32.mxu0 0.0
    %v2703 = vand.u32 %v2551, 4294901760
    %v2704 = vsub.f32 %v2551, %v2703
    %v2705 = vand.u32 %v2704, 4294901760
    %v2706 = vsub.f32 %v2704, %v2705
    %v2707 = vand.u32 %v2706, 4294901760
    %2708 = vmatmul.mubr.f32.gmra.mxu0 %v2707
    %v2709 = vpop.f32.mrf.mxu0
    %v2710 = vadd.f32 0.0, %v2709
    %v2711 = vpop.f32.mrf.mxu0
    %v2712 = vadd.f32 0.0, %v2711
    %2713 = vmatprep.mubr.f32.mxu0 0.0
    %v2714 = vand.u32 %v2554, 4294901760
    %v2715 = vsub.f32 %v2554, %v2714
    %v2716 = vand.u32 %v2715, 4294901760
    %v2717 = vsub.f32 %v2715, %v2716
    %v2718 = vand.u32 %v2717, 4294901760
    %2719 = vmatmul.mubr.f32.gmra.mxu0 %v2718
    %v2720 = vpop.f32.mrf.mxu0
    %v2721 = vadd.f32 0.0, %v2720
    %v2722 = vpop.f32.mrf.mxu0
    %v2723 = vadd.f32 0.0, %v2722
    %2724 = vmatprep.mubr.f32.mxu0 0.0
    %v2725 = vand.u32 %v2557, 4294901760
    %v2726 = vsub.f32 %v2557, %v2725
    %v2727 = vand.u32 %v2726, 4294901760
    %v2728 = vsub.f32 %v2726, %v2727
    %v2729 = vand.u32 %v2728, 4294901760
    %2730 = vmatmul.mubr.f32.gmra.mxu0 %v2729
    %v2731 = vpop.f32.mrf.mxu0
    %v2732 = vadd.f32 0.0, %v2731
    %v2733 = vpop.f32.mrf.mxu0
    %v2734 = vadd.f32 0.0, %v2733
    %2735 = vdwg.mxu0
    %2736 = vmatprep.subr.mxu0 0.0
    %2737 = vmatpush1.msra.mxu0 0.0
    %2738 = vmatprep.subr.mxu0 0.0
    %2739 = vmatpush1.msra.mxu0 0.0
    %2740 = vmatprep.subr.mxu0 0.0
    %2741 = vmatpush1.msra.mxu0 0.0
    %2742 = vmatprep.subr.mxu0 0.0
    %2743 = vmatpush1.msra.mxu0 0.0
    %v2744 = vand.u32 %v2524, 4294901760
    %v2745 = vsub.f32 %v2524, %v2744
    %v2746 = vand.u32 %v2745, 4294901760
    %v2747 = vsub.f32 %v2745, %v2746
    %v2748 = vand.u32 %v2747, 4294901760
    %2749 = vmatprep.subr.mxu0 %v2748
    %v2750 = vand.u32 %v2522, 4294901760
    %v2751 = vsub.f32 %v2522, %v2750
    %v2752 = vand.u32 %v2751, 4294901760
    %v2753 = vsub.f32 %v2751, %v2752
    %v2754 = vand.u32 %v2753, 4294901760
    %2755 = vmatpush1.msra.mxu0 %v2754
    %v2756 = vand.u32 %v2517, 4294901760
    %v2757 = vsub.f32 %v2517, %v2756
    %v2758 = vand.u32 %v2757, 4294901760
    %v2759 = vsub.f32 %v2757, %v2758
    %v2760 = vand.u32 %v2759, 4294901760
    %2761 = vmatprep.subr.mxu0 %v2760
    %v2762 = vand.u32 %v2515, 4294901760
    %v2763 = vsub.f32 %v2515, %v2762
    %v2764 = vand.u32 %v2763, 4294901760
    %v2765 = vsub.f32 %v2763, %v2764
    %v2766 = vand.u32 %v2765, 4294901760
    %2767 = vmatpush1.msra.mxu0 %v2766
    %v2768 = vand.u32 %v1730, 4294901760
    %v2769 = vsub.f32 %v1730, %v2768
    %v2770 = vand.u32 %v2769, 4294901760
    %v2771 = vsub.f32 %v2769, %v2770
    %v2772 = vand.u32 %v2771, 4294901760
    %2773 = vmatprep.subr.mxu0 %v2772
    %v2774 = vand.u32 %v1728, 4294901760
    %v2775 = vsub.f32 %v1728, %v2774
    %v2776 = vand.u32 %v2775, 4294901760
    %v2777 = vsub.f32 %v2775, %v2776
    %v2778 = vand.u32 %v2777, 4294901760
    %2779 = vmatpush1.msra.mxu0 %v2778
    %v2780 = vand.u32 %v1723, 4294901760
    %v2781 = vsub.f32 %v1723, %v2780
    %v2782 = vand.u32 %v2781, 4294901760
    %v2783 = vsub.f32 %v2781, %v2782
    %v2784 = vand.u32 %v2783, 4294901760
    %2785 = vmatprep.subr.mxu0 %v2784
    %v2786 = vand.u32 %v1721, 4294901760
    %v2787 = vsub.f32 %v1721, %v2786
    %v2788 = vand.u32 %v2787, 4294901760
    %v2789 = vsub.f32 %v2787, %v2788
    %v2790 = vand.u32 %v2789, 4294901760
    %2791 = vmatpush1.msra.mxu0 %v2790
    %v2792 = vand.u32 %v936, 4294901760
    %v2793 = vsub.f32 %v936, %v2792
    %v2794 = vand.u32 %v2793, 4294901760
    %v2795 = vsub.f32 %v2793, %v2794
    %v2796 = vand.u32 %v2795, 4294901760
    %2797 = vmatprep.subr.mxu0 %v2796
    %v2798 = vand.u32 %v934, 4294901760
    %v2799 = vsub.f32 %v934, %v2798
    %v2800 = vand.u32 %v2799, 4294901760
    %v2801 = vsub.f32 %v2799, %v2800
    %v2802 = vand.u32 %v2801, 4294901760
    %2803 = vmatpush1.msra.mxu0 %v2802
    %v2804 = vand.u32 %v929, 4294901760
    %v2805 = vsub.f32 %v929, %v2804
    %v2806 = vand.u32 %v2805, 4294901760
    %v2807 = vsub.f32 %v2805, %v2806
    %v2808 = vand.u32 %v2807, 4294901760
    %2809 = vmatprep.subr.mxu0 %v2808
    %v2810 = vand.u32 %v927, 4294901760
    %v2811 = vsub.f32 %v927, %v2810
    %v2812 = vand.u32 %v2811, 4294901760
    %v2813 = vsub.f32 %v2811, %v2812
    %v2814 = vand.u32 %v2813, 4294901760
    %2815 = vmatpush1.msra.mxu0 %v2814
    %v2816 = vand.u32 %v2510, 4294901760
    %v2817 = vsub.f32 %v2510, %v2816
    %v2818 = vand.u32 %v2817, 4294901760
    %v2819 = vsub.f32 %v2817, %v2818
    %v2820 = vand.u32 %v2819, 4294901760
    %2821 = vmatprep.subr.mxu0 %v2820
    %v2822 = vand.u32 %v2508, 4294901760
    %v2823 = vsub.f32 %v2508, %v2822
    %v2824 = vand.u32 %v2823, 4294901760
    %v2825 = vsub.f32 %v2823, %v2824
    %v2826 = vand.u32 %v2825, 4294901760
    %2827 = vmatpush1.msra.mxu0 %v2826
    %v2828 = vand.u32 %v2503, 4294901760
    %v2829 = vsub.f32 %v2503, %v2828
    %v2830 = vand.u32 %v2829, 4294901760
    %v2831 = vsub.f32 %v2829, %v2830
    %v2832 = vand.u32 %v2831, 4294901760
    %2833 = vmatprep.subr.mxu0 %v2832
    %v2834 = vand.u32 %v2501, 4294901760
    %v2835 = vsub.f32 %v2501, %v2834
    %v2836 = vand.u32 %v2835, 4294901760
    %v2837 = vsub.f32 %v2835, %v2836
    %v2838 = vand.u32 %v2837, 4294901760
    %2839 = vmatpush1.msra.mxu0 %v2838
    %v2840 = vand.u32 %v1716, 4294901760
    %v2841 = vsub.f32 %v1716, %v2840
    %v2842 = vand.u32 %v2841, 4294901760
    %v2843 = vsub.f32 %v2841, %v2842
    %v2844 = vand.u32 %v2843, 4294901760
    %2845 = vmatprep.subr.mxu0 %v2844
    %v2846 = vand.u32 %v1714, 4294901760
    %v2847 = vsub.f32 %v1714, %v2846
    %v2848 = vand.u32 %v2847, 4294901760
    %v2849 = vsub.f32 %v2847, %v2848
    %v2850 = vand.u32 %v2849, 4294901760
    %2851 = vmatpush1.msra.mxu0 %v2850
    %v2852 = vand.u32 %v1709, 4294901760
    %v2853 = vsub.f32 %v1709, %v2852
    %v2854 = vand.u32 %v2853, 4294901760
    %v2855 = vsub.f32 %v2853, %v2854
    %v2856 = vand.u32 %v2855, 4294901760
    %2857 = vmatprep.subr.mxu0 %v2856
    %v2858 = vand.u32 %v1707, 4294901760
    %v2859 = vsub.f32 %v1707, %v2858
    %v2860 = vand.u32 %v2859, 4294901760
    %v2861 = vsub.f32 %v2859, %v2860
    %v2862 = vand.u32 %v2861, 4294901760
    %2863 = vmatpush1.msra.mxu0 %v2862
    %v2864 = vand.u32 %v922, 4294901760
    %v2865 = vsub.f32 %v922, %v2864
    %v2866 = vand.u32 %v2865, 4294901760
    %v2867 = vsub.f32 %v2865, %v2866
    %v2868 = vand.u32 %v2867, 4294901760
    %2869 = vmatprep.subr.mxu0 %v2868
    %v2870 = vand.u32 %v920, 4294901760
    %v2871 = vsub.f32 %v920, %v2870
    %v2872 = vand.u32 %v2871, 4294901760
    %v2873 = vsub.f32 %v2871, %v2872
    %v2874 = vand.u32 %v2873, 4294901760
    %2875 = vmatpush1.msra.mxu0 %v2874
    %v2876 = vand.u32 %v915, 4294901760
    %v2877 = vsub.f32 %v915, %v2876
    %v2878 = vand.u32 %v2877, 4294901760
    %v2879 = vsub.f32 %v2877, %v2878
    %v2880 = vand.u32 %v2879, 4294901760
    %2881 = vmatprep.subr.mxu0 %v2880
    %v2882 = vand.u32 %v913, 4294901760
    %v2883 = vsub.f32 %v913, %v2882
    %v2884 = vand.u32 %v2883, 4294901760
    %v2885 = vsub.f32 %v2883, %v2884
    %v2886 = vand.u32 %v2885, 4294901760
    %2887 = vmatpush1.msra.mxu0 %v2886
    %2888 = vmatprep.subr.mxu0 0.0
    %2889 = vmatpush2.msra.mxu0 0.0
    %2890 = vmatprep.subr.mxu0 0.0
    %2891 = vmatpush2.msra.mxu0 0.0
    %2892 = vmatprep.subr.mxu0 0.0
    %2893 = vmatpush2.msra.mxu0 0.0
    %2894 = vmatprep.subr.mxu0 0.0
    %2895 = vmatpush2.msra.mxu0 0.0
    %2896 = vmatprep.subr.mxu0 0.0
    %2897 = vmatpush2.msra.mxu0 0.0
    %2898 = vmatprep.subr.mxu0 0.0
    %2899 = vmatpush2.msra.mxu0 0.0
    %2900 = vmatprep.subr.mxu0 0.0
    %2901 = vmatpush2.msra.mxu0 0.0
    %2902 = vmatprep.subr.mxu0 0.0
    %2903 = vmatpush2.msra.mxu0 0.0
    %2904 = vmatprep.subr.mxu0 0.0
    %2905 = vmatpush2.msra.mxu0 0.0
    %2906 = vmatprep.subr.mxu0 0.0
    %2907 = vmatpush2.msra.mxu0 0.0
    %2908 = vmatprep.subr.mxu0 0.0
    %2909 = vmatpush2.msra.mxu0 0.0
    %2910 = vmatprep.subr.mxu0 0.0
    %2911 = vmatpush2.msra.mxu0 0.0
    %2912 = vmatprep.subr.mxu0 0.0
    %2913 = vmatpush2.msra.mxu0 0.0
    %2914 = vmatprep.subr.mxu0 0.0
    %2915 = vmatpush2.msra.mxu0 0.0
    %2916 = vmatprep.subr.mxu0 0.0
    %2917 = vmatpush2.msra.mxu0 0.0
    %2918 = vmatprep.subr.mxu0 0.0
    %2919 = vmatpush2.msra.mxu0 0.0
    %2920 = vmatprep.mubr.f32.mxu0 0.0
    %v2921 = vand.u32 %v2536, 4294901760
    %2922 = vmatmul.mubr.f32.gmra.mxu0 %v2921
    %v2923 = vpop.f32.mrf.mxu0
    %v2924 = vadd.f32 %v2655, %v2923
    %v2925 = vpop.f32.mrf.mxu0
    %v2926 = vadd.f32 %v2657, %v2925
    %2927 = vmatprep.mubr.f32.mxu0 0.0
    %v2928 = vand.u32 %v2539, 4294901760
    %2929 = vmatmul.mubr.f32.gmra.mxu0 %v2928
    %v2930 = vpop.f32.mrf.mxu0
    %v2931 = vadd.f32 %v2666, %v2930
    %v2932 = vpop.f32.mrf.mxu0
    %v2933 = vadd.f32 %v2668, %v2932
    %2934 = vmatprep.mubr.f32.mxu0 0.0
    %v2935 = vand.u32 %v2542, 4294901760
    %2936 = vmatmul.mubr.f32.gmra.mxu0 %v2935
    %v2937 = vpop.f32.mrf.mxu0
    %v2938 = vadd.f32 %v2677, %v2937
    %v2939 = vpop.f32.mrf.mxu0
    %v2940 = vadd.f32 %v2679, %v2939
    %2941 = vmatprep.mubr.f32.mxu0 0.0
    %v2942 = vand.u32 %v2545, 4294901760
    %2943 = vmatmul.mubr.f32.gmra.mxu0 %v2942
    %v2944 = vpop.f32.mrf.mxu0
    %v2945 = vadd.f32 %v2688, %v2944
    %v2946 = vpop.f32.mrf.mxu0
    %v2947 = vadd.f32 %v2690, %v2946
    %2948 = vmatprep.mubr.f32.mxu0 0.0
    %v2949 = vand.u32 %v2548, 4294901760
    %2950 = vmatmul.mubr.f32.gmra.mxu0 %v2949
    %v2951 = vpop.f32.mrf.mxu0
    %v2952 = vadd.f32 %v2699, %v2951
    %v2953 = vpop.f32.mrf.mxu0
    %v2954 = vadd.f32 %v2701, %v2953
    %2955 = vmatprep.mubr.f32.mxu0 0.0
    %v2956 = vand.u32 %v2551, 4294901760
    %2957 = vmatmul.mubr.f32.gmra.mxu0 %v2956
    %v2958 = vpop.f32.mrf.mxu0
    %v2959 = vadd.f32 %v2710, %v2958
    %v2960 = vpop.f32.mrf.mxu0
    %v2961 = vadd.f32 %v2712, %v2960
    %2962 = vmatprep.mubr.f32.mxu0 0.0
    %v2963 = vand.u32 %v2554, 4294901760
    %2964 = vmatmul.mubr.f32.gmra.mxu0 %v2963
    %v2965 = vpop.f32.mrf.mxu0
    %v2966 = vadd.f32 %v2721, %v2965
    %v2967 = vpop.f32.mrf.mxu0
    %v2968 = vadd.f32 %v2723, %v2967
    %2969 = vmatprep.mubr.f32.mxu0 0.0
    %v2970 = vand.u32 %v2557, 4294901760
    %2971 = vmatmul.mubr.f32.gmra.mxu0 %v2970
    %v2972 = vpop.f32.mrf.mxu0
    %v2973 = vadd.f32 %v2732, %v2972
    %v2974 = vpop.f32.mrf.mxu0
    %v2975 = vadd.f32 %v2734, %v2974
    %2976 = vdwg.mxu0
    %2977 = vmatprep.subr.mxu0 0.0
    %2978 = vmatpush1.msra.mxu0 0.0
    %2979 = vmatprep.subr.mxu0 0.0
    %2980 = vmatpush1.msra.mxu0 0.0
    %2981 = vmatprep.subr.mxu0 0.0
    %2982 = vmatpush1.msra.mxu0 0.0
    %2983 = vmatprep.subr.mxu0 0.0
    %2984 = vmatpush1.msra.mxu0 0.0
    %v2985 = vand.u32 %v2524, 4294901760
    %v2986 = vsub.f32 %v2524, %v2985
    %2987 = vmatprep.subr.mxu0 %v2986
    %v2988 = vand.u32 %v2522, 4294901760
    %v2989 = vsub.f32 %v2522, %v2988
    %2990 = vmatpush1.msra.mxu0 %v2989
    %v2991 = vand.u32 %v2517, 4294901760
    %v2992 = vsub.f32 %v2517, %v2991
    %2993 = vmatprep.subr.mxu0 %v2992
    %v2994 = vand.u32 %v2515, 4294901760
    %v2995 = vsub.f32 %v2515, %v2994
    %2996 = vmatpush1.msra.mxu0 %v2995
    %v2997 = vand.u32 %v1730, 4294901760
    %v2998 = vsub.f32 %v1730, %v2997
    %2999 = vmatprep.subr.mxu0 %v2998
    %v3000 = vand.u32 %v1728, 4294901760
    %v3001 = vsub.f32 %v1728, %v3000
    %3002 = vmatpush1.msra.mxu0 %v3001
    %v3003 = vand.u32 %v1723, 4294901760
    %v3004 = vsub.f32 %v1723, %v3003
    %3005 = vmatprep.subr.mxu0 %v3004
    %v3006 = vand.u32 %v1721, 4294901760
    %v3007 = vsub.f32 %v1721, %v3006
    %3008 = vmatpush1.msra.mxu0 %v3007
    %v3009 = vand.u32 %v936, 4294901760
    %v3010 = vsub.f32 %v936, %v3009
    %3011 = vmatprep.subr.mxu0 %v3010
    %v3012 = vand.u32 %v934, 4294901760
    %v3013 = vsub.f32 %v934, %v3012
    %3014 = vmatpush1.msra.mxu0 %v3013
    %v3015 = vand.u32 %v929, 4294901760
    %v3016 = vsub.f32 %v929, %v3015
    %3017 = vmatprep.subr.mxu0 %v3016
    %v3018 = vand.u32 %v927, 4294901760
    %v3019 = vsub.f32 %v927, %v3018
    %3020 = vmatpush1.msra.mxu0 %v3019
    %v3021 = vand.u32 %v2510, 4294901760
    %v3022 = vsub.f32 %v2510, %v3021
    %3023 = vmatprep.subr.mxu0 %v3022
    %v3024 = vand.u32 %v2508, 4294901760
    %v3025 = vsub.f32 %v2508, %v3024
    %3026 = vmatpush1.msra.mxu0 %v3025
    %v3027 = vand.u32 %v2503, 4294901760
    %v3028 = vsub.f32 %v2503, %v3027
    %3029 = vmatprep.subr.mxu0 %v3028
    %v3030 = vand.u32 %v2501, 4294901760
    %v3031 = vsub.f32 %v2501, %v3030
    %3032 = vmatpush1.msra.mxu0 %v3031
    %v3033 = vand.u32 %v1716, 4294901760
    %v3034 = vsub.f32 %v1716, %v3033
    %3035 = vmatprep.subr.mxu0 %v3034
    %v3036 = vand.u32 %v1714, 4294901760
    %v3037 = vsub.f32 %v1714, %v3036
    %3038 = vmatpush1.msra.mxu0 %v3037
    %v3039 = vand.u32 %v1709, 4294901760
    %v3040 = vsub.f32 %v1709, %v3039
    %3041 = vmatprep.subr.mxu0 %v3040
    %v3042 = vand.u32 %v1707, 4294901760
    %v3043 = vsub.f32 %v1707, %v3042
    %3044 = vmatpush1.msra.mxu0 %v3043
    %v3045 = vand.u32 %v922, 4294901760
    %v3046 = vsub.f32 %v922, %v3045
    %3047 = vmatprep.subr.mxu0 %v3046
    %v3048 = vand.u32 %v920, 4294901760
    %v3049 = vsub.f32 %v920, %v3048
    %3050 = vmatpush1.msra.mxu0 %v3049
    %v3051 = vand.u32 %v915, 4294901760
    %v3052 = vsub.f32 %v915, %v3051
    %3053 = vmatprep.subr.mxu0 %v3052
    %v3054 = vand.u32 %v913, 4294901760
    %v3055 = vsub.f32 %v913, %v3054
    %3056 = vmatpush1.msra.mxu0 %v3055
    %3057 = vmatprep.subr.mxu0 0.0
    %3058 = vmatpush2.msra.mxu0 0.0
    %3059 = vmatprep.subr.mxu0 0.0
    %3060 = vmatpush2.msra.mxu0 0.0
    %3061 = vmatprep.subr.mxu0 0.0
    %3062 = vmatpush2.msra.mxu0 0.0
    %3063 = vmatprep.subr.mxu0 0.0
    %3064 = vmatpush2.msra.mxu0 0.0
    %3065 = vmatprep.subr.mxu0 0.0
    %3066 = vmatpush2.msra.mxu0 0.0
    %3067 = vmatprep.subr.mxu0 0.0
    %3068 = vmatpush2.msra.mxu0 0.0
    %3069 = vmatprep.subr.mxu0 0.0
    %3070 = vmatpush2.msra.mxu0 0.0
    %3071 = vmatprep.subr.mxu0 0.0
    %3072 = vmatpush2.msra.mxu0 0.0
    %3073 = vmatprep.subr.mxu0 0.0
    %3074 = vmatpush2.msra.mxu0 0.0
    %3075 = vmatprep.subr.mxu0 0.0
    %3076 = vmatpush2.msra.mxu0 0.0
    %3077 = vmatprep.subr.mxu0 0.0
    %3078 = vmatpush2.msra.mxu0 0.0
    %3079 = vmatprep.subr.mxu0 0.0
    %3080 = vmatpush2.msra.mxu0 0.0
    %3081 = vmatprep.subr.mxu0 0.0
    %3082 = vmatpush2.msra.mxu0 0.0
    %3083 = vmatprep.subr.mxu0 0.0
    %3084 = vmatpush2.msra.mxu0 0.0
    %3085 = vmatprep.subr.mxu0 0.0
    %3086 = vmatpush2.msra.mxu0 0.0
    %3087 = vmatprep.subr.mxu0 0.0
    %3088 = vmatpush2.msra.mxu0 0.0
    %3089 = vmatprep.mubr.f32.mxu0 0.0
    %v3090 = vand.u32 %v2536, 4294901760
    %v3091 = vsub.f32 %v2536, %v3090
    %3092 = vmatmul.mubr.f32.gmra.mxu0 %v3091
    %v3093 = vpop.f32.mrf.mxu0
    %v3094 = vadd.f32 %v2924, %v3093
    %v3095 = vpop.f32.mrf.mxu0
    %v3096 = vadd.f32 %v2926, %v3095
    %3097 = vmatprep.mubr.f32.mxu0 0.0
    %v3098 = vand.u32 %v2539, 4294901760
    %v3099 = vsub.f32 %v2539, %v3098
    %3100 = vmatmul.mubr.f32.gmra.mxu0 %v3099
    %v3101 = vpop.f32.mrf.mxu0
    %v3102 = vadd.f32 %v2931, %v3101
    %v3103 = vpop.f32.mrf.mxu0
    %v3104 = vadd.f32 %v2933, %v3103
    %3105 = vmatprep.mubr.f32.mxu0 0.0
    %v3106 = vand.u32 %v2542, 4294901760
    %v3107 = vsub.f32 %v2542, %v3106
    %3108 = vmatmul.mubr.f32.gmra.mxu0 %v3107
    %v3109 = vpop.f32.mrf.mxu0
    %v3110 = vadd.f32 %v2938, %v3109
    %v3111 = vpop.f32.mrf.mxu0
    %v3112 = vadd.f32 %v2940, %v3111
    %3113 = vmatprep.mubr.f32.mxu0 0.0
    %v3114 = vand.u32 %v2545, 4294901760
    %v3115 = vsub.f32 %v2545, %v3114
    %3116 = vmatmul.mubr.f32.gmra.mxu0 %v3115
    %v3117 = vpop.f32.mrf.mxu0
    %v3118 = vadd.f32 %v2945, %v3117
    %v3119 = vpop.f32.mrf.mxu0
    %v3120 = vadd.f32 %v2947, %v3119
    %3121 = vmatprep.mubr.f32.mxu0 0.0
    %v3122 = vand.u32 %v2548, 4294901760
    %v3123 = vsub.f32 %v2548, %v3122
    %3124 = vmatmul.mubr.f32.gmra.mxu0 %v3123
    %v3125 = vpop.f32.mrf.mxu0
    %v3126 = vadd.f32 %v2952, %v3125
    %v3127 = vpop.f32.mrf.mxu0
    %v3128 = vadd.f32 %v2954, %v3127
    %3129 = vmatprep.mubr.f32.mxu0 0.0
    %v3130 = vand.u32 %v2551, 4294901760
    %v3131 = vsub.f32 %v2551, %v3130
    %3132 = vmatmul.mubr.f32.gmra.mxu0 %v3131
    %v3133 = vpop.f32.mrf.mxu0
    %v3134 = vadd.f32 %v2959, %v3133
    %v3135 = vpop.f32.mrf.mxu0
    %v3136 = vadd.f32 %v2961, %v3135
    %3137 = vmatprep.mubr.f32.mxu0 0.0
    %v3138 = vand.u32 %v2554, 4294901760
    %v3139 = vsub.f32 %v2554, %v3138
    %3140 = vmatmul.mubr.f32.gmra.mxu0 %v3139
    %v3141 = vpop.f32.mrf.mxu0
    %v3142 = vadd.f32 %v2966, %v3141
    %v3143 = vpop.f32.mrf.mxu0
    %v3144 = vadd.f32 %v2968, %v3143
    %3145 = vmatprep.mubr.f32.mxu0 0.0
    %v3146 = vand.u32 %v2557, 4294901760
    %v3147 = vsub.f32 %v2557, %v3146
    %3148 = vmatmul.mubr.f32.gmra.mxu0 %v3147
    %v3149 = vpop.f32.mrf.mxu0
    %v3150 = vadd.f32 %v2973, %v3149
    %v3151 = vpop.f32.mrf.mxu0
    %v3152 = vadd.f32 %v2975, %v3151
    %3153 = vdwg.mxu0
    %3154 = vmatprep.subr.mxu0 0.0
    %3155 = vmatpush1.msra.mxu0 0.0
    %3156 = vmatprep.subr.mxu0 0.0
    %3157 = vmatpush1.msra.mxu0 0.0
    %3158 = vmatprep.subr.mxu0 0.0
    %3159 = vmatpush1.msra.mxu0 0.0
    %3160 = vmatprep.subr.mxu0 0.0
    %3161 = vmatpush1.msra.mxu0 0.0
    %v3162 = vand.u32 %v2524, 4294901760
    %3163 = vmatprep.subr.mxu0 %v3162
    %v3164 = vand.u32 %v2522, 4294901760
    %3165 = vmatpush1.msra.mxu0 %v3164
    %v3166 = vand.u32 %v2517, 4294901760
    %3167 = vmatprep.subr.mxu0 %v3166
    %v3168 = vand.u32 %v2515, 4294901760
    %3169 = vmatpush1.msra.mxu0 %v3168
    %v3170 = vand.u32 %v1730, 4294901760
    %3171 = vmatprep.subr.mxu0 %v3170
    %v3172 = vand.u32 %v1728, 4294901760
    %3173 = vmatpush1.msra.mxu0 %v3172
    %v3174 = vand.u32 %v1723, 4294901760
    %3175 = vmatprep.subr.mxu0 %v3174
    %v3176 = vand.u32 %v1721, 4294901760
    %3177 = vmatpush1.msra.mxu0 %v3176
    %v3178 = vand.u32 %v936, 4294901760
    %3179 = vmatprep.subr.mxu0 %v3178
    %v3180 = vand.u32 %v934, 4294901760
    %3181 = vmatpush1.msra.mxu0 %v3180
    %v3182 = vand.u32 %v929, 4294901760
    %3183 = vmatprep.subr.mxu0 %v3182
    %v3184 = vand.u32 %v927, 4294901760
    %3185 = vmatpush1.msra.mxu0 %v3184
    %v3186 = vand.u32 %v2510, 4294901760
    %3187 = vmatprep.subr.mxu0 %v3186
    %v3188 = vand.u32 %v2508, 4294901760
    %3189 = vmatpush1.msra.mxu0 %v3188
    %v3190 = vand.u32 %v2503, 4294901760
    %3191 = vmatprep.subr.mxu0 %v3190
    %v3192 = vand.u32 %v2501, 4294901760
    %3193 = vmatpush1.msra.mxu0 %v3192
    %v3194 = vand.u32 %v1716, 4294901760
    %3195 = vmatprep.subr.mxu0 %v3194
    %v3196 = vand.u32 %v1714, 4294901760
    %3197 = vmatpush1.msra.mxu0 %v3196
    %v3198 = vand.u32 %v1709, 4294901760
    %3199 = vmatprep.subr.mxu0 %v3198
    %v3200 = vand.u32 %v1707, 4294901760
    %3201 = vmatpush1.msra.mxu0 %v3200
    %v3202 = vand.u32 %v922, 4294901760
    %3203 = vmatprep.subr.mxu0 %v3202
    %v3204 = vand.u32 %v920, 4294901760
    %3205 = vmatpush1.msra.mxu0 %v3204
    %v3206 = vand.u32 %v915, 4294901760
    %3207 = vmatprep.subr.mxu0 %v3206
    %v3208 = vand.u32 %v913, 4294901760
    %3209 = vmatpush1.msra.mxu0 %v3208
    %3210 = vmatprep.subr.mxu0 0.0
    %3211 = vmatpush2.msra.mxu0 0.0
    %3212 = vmatprep.subr.mxu0 0.0
    %3213 = vmatpush2.msra.mxu0 0.0
    %3214 = vmatprep.subr.mxu0 0.0
    %3215 = vmatpush2.msra.mxu0 0.0
    %3216 = vmatprep.subr.mxu0 0.0
    %3217 = vmatpush2.msra.mxu0 0.0
    %3218 = vmatprep.subr.mxu0 0.0
    %3219 = vmatpush2.msra.mxu0 0.0
    %3220 = vmatprep.subr.mxu0 0.0
    %3221 = vmatpush2.msra.mxu0 0.0
    %3222 = vmatprep.subr.mxu0 0.0
    %3223 = vmatpush2.msra.mxu0 0.0
    %3224 = vmatprep.subr.mxu0 0.0
    %3225 = vmatpush2.msra.mxu0 0.0
    %3226 = vmatprep.subr.mxu0 0.0
    %3227 = vmatpush2.msra.mxu0 0.0
    %3228 = vmatprep.subr.mxu0 0.0
    %3229 = vmatpush2.msra.mxu0 0.0
    %3230 = vmatprep.subr.mxu0 0.0
    %3231 = vmatpush2.msra.mxu0 0.0
    %3232 = vmatprep.subr.mxu0 0.0
    %3233 = vmatpush2.msra.mxu0 0.0
    %3234 = vmatprep.subr.mxu0 0.0
    %3235 = vmatpush2.msra.mxu0 0.0
    %3236 = vmatprep.subr.mxu0 0.0
    %3237 = vmatpush2.msra.mxu0 0.0
    %3238 = vmatprep.subr.mxu0 0.0
    %3239 = vmatpush2.msra.mxu0 0.0
    %3240 = vmatprep.subr.mxu0 0.0
    %3241 = vmatpush2.msra.mxu0 0.0
    %3242 = vmatprep.mubr.f32.mxu0 0.0
    %v3243 = vand.u32 %v2536, 4294901760
    %v3244 = vsub.f32 %v2536, %v3243
    %v3245 = vand.u32 %v3244, 4294901760
    %3246 = vmatmul.mubr.f32.gmra.mxu0 %v3245
    %v3247 = vpop.f32.mrf.mxu0
    %v3248 = vadd.f32 %v3094, %v3247
    %v3249 = vpop.f32.mrf.mxu0
    %v3250 = vadd.f32 %v3096, %v3249
    %3251 = vmatprep.mubr.f32.mxu0 0.0
    %v3252 = vand.u32 %v2539, 4294901760
    %v3253 = vsub.f32 %v2539, %v3252
    %v3254 = vand.u32 %v3253, 4294901760
    %3255 = vmatmul.mubr.f32.gmra.mxu0 %v3254
    %v3256 = vpop.f32.mrf.mxu0
    %v3257 = vadd.f32 %v3102, %v3256
    %v3258 = vpop.f32.mrf.mxu0
    %v3259 = vadd.f32 %v3104, %v3258
    %3260 = vmatprep.mubr.f32.mxu0 0.0
    %v3261 = vand.u32 %v2542, 4294901760
    %v3262 = vsub.f32 %v2542, %v3261
    %v3263 = vand.u32 %v3262, 4294901760
    %3264 = vmatmul.mubr.f32.gmra.mxu0 %v3263
    %v3265 = vpop.f32.mrf.mxu0
    %v3266 = vadd.f32 %v3110, %v3265
    %v3267 = vpop.f32.mrf.mxu0
    %v3268 = vadd.f32 %v3112, %v3267
    %3269 = vmatprep.mubr.f32.mxu0 0.0
    %v3270 = vand.u32 %v2545, 4294901760
    %v3271 = vsub.f32 %v2545, %v3270
    %v3272 = vand.u32 %v3271, 4294901760
    %3273 = vmatmul.mubr.f32.gmra.mxu0 %v3272
    %v3274 = vpop.f32.mrf.mxu0
    %v3275 = vadd.f32 %v3118, %v3274
    %v3276 = vpop.f32.mrf.mxu0
    %v3277 = vadd.f32 %v3120, %v3276
    %3278 = vmatprep.mubr.f32.mxu0 0.0
    %v3279 = vand.u32 %v2548, 4294901760
    %v3280 = vsub.f32 %v2548, %v3279
    %v3281 = vand.u32 %v3280, 4294901760
    %3282 = vmatmul.mubr.f32.gmra.mxu0 %v3281
    %v3283 = vpop.f32.mrf.mxu0
    %v3284 = vadd.f32 %v3126, %v3283
    %v3285 = vpop.f32.mrf.mxu0
    %v3286 = vadd.f32 %v3128, %v3285
    %3287 = vmatprep.mubr.f32.mxu0 0.0
    %v3288 = vand.u32 %v2551, 4294901760
    %v3289 = vsub.f32 %v2551, %v3288
    %v3290 = vand.u32 %v3289, 4294901760
    %3291 = vmatmul.mubr.f32.gmra.mxu0 %v3290
    %v3292 = vpop.f32.mrf.mxu0
    %v3293 = vadd.f32 %v3134, %v3292
    %v3294 = vpop.f32.mrf.mxu0
    %v3295 = vadd.f32 %v3136, %v3294
    %3296 = vmatprep.mubr.f32.mxu0 0.0
    %v3297 = vand.u32 %v2554, 4294901760
    %v3298 = vsub.f32 %v2554, %v3297
    %v3299 = vand.u32 %v3298, 4294901760
    %3300 = vmatmul.mubr.f32.gmra.mxu0 %v3299
    %v3301 = vpop.f32.mrf.mxu0
    %v3302 = vadd.f32 %v3142, %v3301
    %v3303 = vpop.f32.mrf.mxu0
    %v3304 = vadd.f32 %v3144, %v3303
    %3305 = vmatprep.mubr.f32.mxu0 0.0
    %v3306 = vand.u32 %v2557, 4294901760
    %v3307 = vsub.f32 %v2557, %v3306
    %v3308 = vand.u32 %v3307, 4294901760
    %3309 = vmatmul.mubr.f32.gmra.mxu0 %v3308
    %v3310 = vpop.f32.mrf.mxu0
    %v3311 = vadd.f32 %v3150, %v3310
    %v3312 = vpop.f32.mrf.mxu0
    %v3313 = vadd.f32 %v3152, %v3312
    %3314 = vdwg.mxu0
    %3315 = vmatprep.subr.mxu0 0.0
    %3316 = vmatpush1.msra.mxu0 0.0
    %3317 = vmatprep.subr.mxu0 0.0
    %3318 = vmatpush1.msra.mxu0 0.0
    %3319 = vmatprep.subr.mxu0 0.0
    %3320 = vmatpush1.msra.mxu0 0.0
    %3321 = vmatprep.subr.mxu0 0.0
    %3322 = vmatpush1.msra.mxu0 0.0
    %v3323 = vand.u32 %v2524, 4294901760
    %v3324 = vsub.f32 %v2524, %v3323
    %v3325 = vand.u32 %v3324, 4294901760
    %3326 = vmatprep.subr.mxu0 %v3325
    %v3327 = vand.u32 %v2522, 4294901760
    %v3328 = vsub.f32 %v2522, %v3327
    %v3329 = vand.u32 %v3328, 4294901760
    %3330 = vmatpush1.msra.mxu0 %v3329
    %v3331 = vand.u32 %v2517, 4294901760
    %v3332 = vsub.f32 %v2517, %v3331
    %v3333 = vand.u32 %v3332, 4294901760
    %3334 = vmatprep.subr.mxu0 %v3333
    %v3335 = vand.u32 %v2515, 4294901760
    %v3336 = vsub.f32 %v2515, %v3335
    %v3337 = vand.u32 %v3336, 4294901760
    %3338 = vmatpush1.msra.mxu0 %v3337
    %v3339 = vand.u32 %v1730, 4294901760
    %v3340 = vsub.f32 %v1730, %v3339
    %v3341 = vand.u32 %v3340, 4294901760
    %3342 = vmatprep.subr.mxu0 %v3341
    %v3343 = vand.u32 %v1728, 4294901760
    %v3344 = vsub.f32 %v1728, %v3343
    %v3345 = vand.u32 %v3344, 4294901760
    %3346 = vmatpush1.msra.mxu0 %v3345
    %v3347 = vand.u32 %v1723, 4294901760
    %v3348 = vsub.f32 %v1723, %v3347
    %v3349 = vand.u32 %v3348, 4294901760
    %3350 = vmatprep.subr.mxu0 %v3349
    %v3351 = vand.u32 %v1721, 4294901760
    %v3352 = vsub.f32 %v1721, %v3351
    %v3353 = vand.u32 %v3352, 4294901760
    %3354 = vmatpush1.msra.mxu0 %v3353
    %v3355 = vand.u32 %v936, 4294901760
    %v3356 = vsub.f32 %v936, %v3355
    %v3357 = vand.u32 %v3356, 4294901760
    %3358 = vmatprep.subr.mxu0 %v3357
    %v3359 = vand.u32 %v934, 4294901760
    %v3360 = vsub.f32 %v934, %v3359
    %v3361 = vand.u32 %v3360, 4294901760
    %3362 = vmatpush1.msra.mxu0 %v3361
    %v3363 = vand.u32 %v929, 4294901760
    %v3364 = vsub.f32 %v929, %v3363
    %v3365 = vand.u32 %v3364, 4294901760
    %3366 = vmatprep.subr.mxu0 %v3365
    %v3367 = vand.u32 %v927, 4294901760
    %v3368 = vsub.f32 %v927, %v3367
    %v3369 = vand.u32 %v3368, 4294901760
    %3370 = vmatpush1.msra.mxu0 %v3369
    %v3371 = vand.u32 %v2510, 4294901760
    %v3372 = vsub.f32 %v2510, %v3371
    %v3373 = vand.u32 %v3372, 4294901760
    %3374 = vmatprep.subr.mxu0 %v3373
    %v3375 = vand.u32 %v2508, 4294901760
    %v3376 = vsub.f32 %v2508, %v3375
    %v3377 = vand.u32 %v3376, 4294901760
    %3378 = vmatpush1.msra.mxu0 %v3377
    %v3379 = vand.u32 %v2503, 4294901760
    %v3380 = vsub.f32 %v2503, %v3379
    %v3381 = vand.u32 %v3380, 4294901760
    %3382 = vmatprep.subr.mxu0 %v3381
    %v3383 = vand.u32 %v2501, 4294901760
    %v3384 = vsub.f32 %v2501, %v3383
    %v3385 = vand.u32 %v3384, 4294901760
    %3386 = vmatpush1.msra.mxu0 %v3385
    %v3387 = vand.u32 %v1716, 4294901760
    %v3388 = vsub.f32 %v1716, %v3387
    %v3389 = vand.u32 %v3388, 4294901760
    %3390 = vmatprep.subr.mxu0 %v3389
    %v3391 = vand.u32 %v1714, 4294901760
    %v3392 = vsub.f32 %v1714, %v3391
    %v3393 = vand.u32 %v3392, 4294901760
    %3394 = vmatpush1.msra.mxu0 %v3393
    %v3395 = vand.u32 %v1709, 4294901760
    %v3396 = vsub.f32 %v1709, %v3395
    %v3397 = vand.u32 %v3396, 4294901760
    %3398 = vmatprep.subr.mxu0 %v3397
    %v3399 = vand.u32 %v1707, 4294901760
    %v3400 = vsub.f32 %v1707, %v3399
    %v3401 = vand.u32 %v3400, 4294901760
    %3402 = vmatpush1.msra.mxu0 %v3401
    %v3403 = vand.u32 %v922, 4294901760
    %v3404 = vsub.f32 %v922, %v3403
    %v3405 = vand.u32 %v3404, 4294901760
    %3406 = vmatprep.subr.mxu0 %v3405
    %v3407 = vand.u32 %v920, 4294901760
    %v3408 = vsub.f32 %v920, %v3407
    %v3409 = vand.u32 %v3408, 4294901760
    %3410 = vmatpush1.msra.mxu0 %v3409
    %v3411 = vand.u32 %v915, 4294901760
    %v3412 = vsub.f32 %v915, %v3411
    %v3413 = vand.u32 %v3412, 4294901760
    %3414 = vmatprep.subr.mxu0 %v3413
    %v3415 = vand.u32 %v913, 4294901760
    %v3416 = vsub.f32 %v913, %v3415
    %v3417 = vand.u32 %v3416, 4294901760
    %3418 = vmatpush1.msra.mxu0 %v3417
    %3419 = vmatprep.subr.mxu0 0.0
    %3420 = vmatpush2.msra.mxu0 0.0
    %3421 = vmatprep.subr.mxu0 0.0
    %3422 = vmatpush2.msra.mxu0 0.0
    %3423 = vmatprep.subr.mxu0 0.0
    %3424 = vmatpush2.msra.mxu0 0.0
    %3425 = vmatprep.subr.mxu0 0.0
    %3426 = vmatpush2.msra.mxu0 0.0
    %3427 = vmatprep.subr.mxu0 0.0
    %3428 = vmatpush2.msra.mxu0 0.0
    %3429 = vmatprep.subr.mxu0 0.0
    %3430 = vmatpush2.msra.mxu0 0.0
    %3431 = vmatprep.subr.mxu0 0.0
    %3432 = vmatpush2.msra.mxu0 0.0
    %3433 = vmatprep.subr.mxu0 0.0
    %3434 = vmatpush2.msra.mxu0 0.0
    %3435 = vmatprep.subr.mxu0 0.0
    %3436 = vmatpush2.msra.mxu0 0.0
    %3437 = vmatprep.subr.mxu0 0.0
    %3438 = vmatpush2.msra.mxu0 0.0
    %3439 = vmatprep.subr.mxu0 0.0
    %3440 = vmatpush2.msra.mxu0 0.0
    %3441 = vmatprep.subr.mxu0 0.0
    %3442 = vmatpush2.msra.mxu0 0.0
    %3443 = vmatprep.subr.mxu0 0.0
    %3444 = vmatpush2.msra.mxu0 0.0
    %3445 = vmatprep.subr.mxu0 0.0
    %3446 = vmatpush2.msra.mxu0 0.0
    %3447 = vmatprep.subr.mxu0 0.0
    %3448 = vmatpush2.msra.mxu0 0.0
    %3449 = vmatprep.subr.mxu0 0.0
    %3450 = vmatpush2.msra.mxu0 0.0
    %3451 = vmatprep.mubr.f32.mxu0 0.0
    %v3452 = vand.u32 %v2536, 4294901760
    %3453 = vmatmul.mubr.f32.gmra.mxu0 %v3452
    %v3454 = vpop.f32.mrf.mxu0
    %v3455 = vadd.f32 %v3248, %v3454
    %v3456 = vpop.f32.mrf.mxu0
    %v3457 = vadd.f32 %v3250, %v3456
    %3458 = vmatprep.mubr.f32.mxu0 0.0
    %v3459 = vand.u32 %v2539, 4294901760
    %3460 = vmatmul.mubr.f32.gmra.mxu0 %v3459
    %v3461 = vpop.f32.mrf.mxu0
    %v3462 = vadd.f32 %v3257, %v3461
    %v3463 = vpop.f32.mrf.mxu0
    %v3464 = vadd.f32 %v3259, %v3463
    %3465 = vmatprep.mubr.f32.mxu0 0.0
    %v3466 = vand.u32 %v2542, 4294901760
    %3467 = vmatmul.mubr.f32.gmra.mxu0 %v3466
    %v3468 = vpop.f32.mrf.mxu0
    %v3469 = vadd.f32 %v3266, %v3468
    %v3470 = vpop.f32.mrf.mxu0
    %v3471 = vadd.f32 %v3268, %v3470
    %3472 = vmatprep.mubr.f32.mxu0 0.0
    %v3473 = vand.u32 %v2545, 4294901760
    %3474 = vmatmul.mubr.f32.gmra.mxu0 %v3473
    %v3475 = vpop.f32.mrf.mxu0
    %v3476 = vadd.f32 %v3275, %v3475
    %v3477 = vpop.f32.mrf.mxu0
    %v3478 = vadd.f32 %v3277, %v3477
    %3479 = vmatprep.mubr.f32.mxu0 0.0
    %v3480 = vand.u32 %v2548, 4294901760
    %3481 = vmatmul.mubr.f32.gmra.mxu0 %v3480
    %v3482 = vpop.f32.mrf.mxu0
    %v3483 = vadd.f32 %v3284, %v3482
    %v3484 = vpop.f32.mrf.mxu0
    %v3485 = vadd.f32 %v3286, %v3484
    %3486 = vmatprep.mubr.f32.mxu0 0.0
    %v3487 = vand.u32 %v2551, 4294901760
    %3488 = vmatmul.mubr.f32.gmra.mxu0 %v3487
    %v3489 = vpop.f32.mrf.mxu0
    %v3490 = vadd.f32 %v3293, %v3489
    %v3491 = vpop.f32.mrf.mxu0
    %v3492 = vadd.f32 %v3295, %v3491
    %3493 = vmatprep.mubr.f32.mxu0 0.0
    %v3494 = vand.u32 %v2554, 4294901760
    %3495 = vmatmul.mubr.f32.gmra.mxu0 %v3494
    %v3496 = vpop.f32.mrf.mxu0
    %v3497 = vadd.f32 %v3302, %v3496
    %v3498 = vpop.f32.mrf.mxu0
    %v3499 = vadd.f32 %v3304, %v3498
    %3500 = vmatprep.mubr.f32.mxu0 0.0
    %v3501 = vand.u32 %v2557, 4294901760
    %3502 = vmatmul.mubr.f32.gmra.mxu0 %v3501
    %v3503 = vpop.f32.mrf.mxu0
    %v3504 = vadd.f32 %v3311, %v3503
    %v3505 = vpop.f32.mrf.mxu0
    %v3506 = vadd.f32 %v3313, %v3505
    %3507 = vdwg.mxu0
    %3508 = vmatprep.subr.mxu0 0.0
    %3509 = vmatpush1.msra.mxu0 0.0
    %3510 = vmatprep.subr.mxu0 0.0
    %3511 = vmatpush1.msra.mxu0 0.0
    %3512 = vmatprep.subr.mxu0 0.0
    %3513 = vmatpush1.msra.mxu0 0.0
    %3514 = vmatprep.subr.mxu0 0.0
    %3515 = vmatpush1.msra.mxu0 0.0
    %v3516 = vand.u32 %v2524, 4294901760
    %3517 = vmatprep.subr.mxu0 %v3516
    %v3518 = vand.u32 %v2522, 4294901760
    %3519 = vmatpush1.msra.mxu0 %v3518
    %v3520 = vand.u32 %v2517, 4294901760
    %3521 = vmatprep.subr.mxu0 %v3520
    %v3522 = vand.u32 %v2515, 4294901760
    %3523 = vmatpush1.msra.mxu0 %v3522
    %v3524 = vand.u32 %v1730, 4294901760
    %3525 = vmatprep.subr.mxu0 %v3524
    %v3526 = vand.u32 %v1728, 4294901760
    %3527 = vmatpush1.msra.mxu0 %v3526
    %v3528 = vand.u32 %v1723, 4294901760
    %3529 = vmatprep.subr.mxu0 %v3528
    %v3530 = vand.u32 %v1721, 4294901760
    %3531 = vmatpush1.msra.mxu0 %v3530
    %v3532 = vand.u32 %v936, 4294901760
    %3533 = vmatprep.subr.mxu0 %v3532
    %v3534 = vand.u32 %v934, 4294901760
    %3535 = vmatpush1.msra.mxu0 %v3534
    %v3536 = vand.u32 %v929, 4294901760
    %3537 = vmatprep.subr.mxu0 %v3536
    %v3538 = vand.u32 %v927, 4294901760
    %3539 = vmatpush1.msra.mxu0 %v3538
    %v3540 = vand.u32 %v2510, 4294901760
    %3541 = vmatprep.subr.mxu0 %v3540
    %v3542 = vand.u32 %v2508, 4294901760
    %3543 = vmatpush1.msra.mxu0 %v3542
    %v3544 = vand.u32 %v2503, 4294901760
    %3545 = vmatprep.subr.mxu0 %v3544
    %v3546 = vand.u32 %v2501, 4294901760
    %3547 = vmatpush1.msra.mxu0 %v3546
    %v3548 = vand.u32 %v1716, 4294901760
    %3549 = vmatprep.subr.mxu0 %v3548
    %v3550 = vand.u32 %v1714, 4294901760
    %3551 = vmatpush1.msra.mxu0 %v3550
    %v3552 = vand.u32 %v1709, 4294901760
    %3553 = vmatprep.subr.mxu0 %v3552
    %v3554 = vand.u32 %v1707, 4294901760
    %3555 = vmatpush1.msra.mxu0 %v3554
    %v3556 = vand.u32 %v922, 4294901760
    %3557 = vmatprep.subr.mxu0 %v3556
    %v3558 = vand.u32 %v920, 4294901760
    %3559 = vmatpush1.msra.mxu0 %v3558
    %v3560 = vand.u32 %v915, 4294901760
    %3561 = vmatprep.subr.mxu0 %v3560
    %v3562 = vand.u32 %v913, 4294901760
    %3563 = vmatpush1.msra.mxu0 %v3562
    %3564 = vmatprep.subr.mxu0 0.0
    %3565 = vmatpush2.msra.mxu0 0.0
    %3566 = vmatprep.subr.mxu0 0.0
    %3567 = vmatpush2.msra.mxu0 0.0
    %3568 = vmatprep.subr.mxu0 0.0
    %3569 = vmatpush2.msra.mxu0 0.0
    %3570 = vmatprep.subr.mxu0 0.0
    %3571 = vmatpush2.msra.mxu0 0.0
    %3572 = vmatprep.subr.mxu0 0.0
    %3573 = vmatpush2.msra.mxu0 0.0
    %3574 = vmatprep.subr.mxu0 0.0
    %3575 = vmatpush2.msra.mxu0 0.0
    %3576 = vmatprep.subr.mxu0 0.0
    %3577 = vmatpush2.msra.mxu0 0.0
    %3578 = vmatprep.subr.mxu0 0.0
    %3579 = vmatpush2.msra.mxu0 0.0
    %3580 = vmatprep.subr.mxu0 0.0
    %3581 = vmatpush2.msra.mxu0 0.0
    %3582 = vmatprep.subr.mxu0 0.0
    %3583 = vmatpush2.msra.mxu0 0.0
    %3584 = vmatprep.subr.mxu0 0.0
    %3585 = vmatpush2.msra.mxu0 0.0
    %3586 = vmatprep.subr.mxu0 0.0
    %3587 = vmatpush2.msra.mxu0 0.0
    %3588 = vmatprep.subr.mxu0 0.0
    %3589 = vmatpush2.msra.mxu0 0.0
    %3590 = vmatprep.subr.mxu0 0.0
    %3591 = vmatpush2.msra.mxu0 0.0
    %3592 = vmatprep.subr.mxu0 0.0
    %3593 = vmatpush2.msra.mxu0 0.0
    %3594 = vmatprep.subr.mxu0 0.0
    %3595 = vmatpush2.msra.mxu0 0.0
    %3596 = vmatprep.mubr.f32.mxu0 0.0
    %v3597 = vand.u32 %v2536, 4294901760
    %3598 = vmatmul.mubr.f32.gmra.mxu0 %v3597
    %v3599 = vpop.f32.mrf.mxu0
    %v3600 = vadd.f32 %v3455, %v3599
    %v3601 = vpop.f32.mrf.mxu0
    %v3602 = vadd.f32 %v3457, %v3601
    %3603 = vmatprep.mubr.f32.mxu0 0.0
    %v3604 = vand.u32 %v2539, 4294901760
    %3605 = vmatmul.mubr.f32.gmra.mxu0 %v3604
    %v3606 = vpop.f32.mrf.mxu0
    %v3607 = vadd.f32 %v3462, %v3606
    %v3608 = vpop.f32.mrf.mxu0
    %v3609 = vadd.f32 %v3464, %v3608
    %3610 = vmatprep.mubr.f32.mxu0 0.0
    %v3611 = vand.u32 %v2542, 4294901760
    %3612 = vmatmul.mubr.f32.gmra.mxu0 %v3611
    %v3613 = vpop.f32.mrf.mxu0
    %v3614 = vadd.f32 %v3469, %v3613
    %v3615 = vpop.f32.mrf.mxu0
    %v3616 = vadd.f32 %v3471, %v3615
    %3617 = vmatprep.mubr.f32.mxu0 0.0
    %v3618 = vand.u32 %v2545, 4294901760
    %3619 = vmatmul.mubr.f32.gmra.mxu0 %v3618
    %v3620 = vpop.f32.mrf.mxu0
    %v3621 = vadd.f32 %v3476, %v3620
    %v3622 = vpop.f32.mrf.mxu0
    %v3623 = vadd.f32 %v3478, %v3622
    %3624 = vmatprep.mubr.f32.mxu0 0.0
    %v3625 = vand.u32 %v2548, 4294901760
    %3626 = vmatmul.mubr.f32.gmra.mxu0 %v3625
    %v3627 = vpop.f32.mrf.mxu0
    %v3628 = vadd.f32 %v3483, %v3627
    %v3629 = vpop.f32.mrf.mxu0
    %v3630 = vadd.f32 %v3485, %v3629
    %3631 = vmatprep.mubr.f32.mxu0 0.0
    %v3632 = vand.u32 %v2551, 4294901760
    %3633 = vmatmul.mubr.f32.gmra.mxu0 %v3632
    %v3634 = vpop.f32.mrf.mxu0
    %v3635 = vadd.f32 %v3490, %v3634
    %v3636 = vpop.f32.mrf.mxu0
    %v3637 = vadd.f32 %v3492, %v3636
    %3638 = vmatprep.mubr.f32.mxu0 0.0
    %v3639 = vand.u32 %v2554, 4294901760
    %3640 = vmatmul.mubr.f32.gmra.mxu0 %v3639
    %v3641 = vpop.f32.mrf.mxu0
    %v3642 = vadd.f32 %v3497, %v3641
    %v3643 = vpop.f32.mrf.mxu0
    %v3644 = vadd.f32 %v3499, %v3643
    %3645 = vmatprep.mubr.f32.mxu0 0.0
    %v3646 = vand.u32 %v2557, 4294901760
    %3647 = vmatmul.mubr.f32.gmra.mxu0 %v3646
    %v3648 = vpop.f32.mrf.mxu0
    %v3649 = vadd.f32 %v3504, %v3648
    %v3650 = vpop.f32.mrf.mxu0
    %v3651 = vadd.f32 %v3506, %v3650
    %3652 = vdwg.mxu0
    %v3653 = vadd.f32 %v3600, %v3607
    %v3654 = vadd.f32 %v3653, %v3614
    %v3655 = vadd.f32 %v3654, %v3621
    %v3656 = vrot.slane %v3655, 4
    %v3657 = vadd.f32 %v3655, %v3656
    %v3658 = vrot.slane %v3657, 2
    %v3659 = vadd.f32 %v3657, %v3658
    %v3660 = vrot.slane %v3659, 1
    %v3661 = vadd.f32 %v3659, %v3660
    %v3662 = vadd.f32 %v3602, %v3609
    %v3663 = vadd.f32 %v3662, %v3616
    %v3664 = vadd.f32 %v3663, %v3623
    %v3665 = vrot.slane %v3664, 4
    %v3666 = vadd.f32 %v3664, %v3665
    %v3667 = vrot.slane %v3666, 2
    %v3668 = vadd.f32 %v3666, %v3667
    %v3669 = vrot.slane %v3668, 1
    %v3670 = vadd.f32 %v3668, %v3669
    %v3671 = vmul.f32 %v3600, %v3600
    %v3672 = vmul.f32 %v3602, %v3602
    %v3673 = vmul.f32 %v3607, %v3607
    %v3674 = vmul.f32 %v3609, %v3609
    %v3675 = vmul.f32 %v3614, %v3614
    %v3676 = vmul.f32 %v3616, %v3616
    %v3677 = vmul.f32 %v3621, %v3621
    %v3678 = vmul.f32 %v3623, %v3623
    %v3679 = vadd.f32 %v3671, %v3673
    %v3680 = vadd.f32 %v3679, %v3675
    %v3681 = vadd.f32 %v3680, %v3677
    %v3682 = vrot.slane %v3681, 4
    %v3683 = vadd.f32 %v3681, %v3682
    %v3684 = vrot.slane %v3683, 2
    %v3685 = vadd.f32 %v3683, %v3684
    %v3686 = vrot.slane %v3685, 1
    %v3687 = vadd.f32 %v3685, %v3686
    %v3688 = vadd.f32 %v3672, %v3674
    %v3689 = vadd.f32 %v3688, %v3676
    %v3690 = vadd.f32 %v3689, %v3678
    %v3691 = vrot.slane %v3690, 4
    %v3692 = vadd.f32 %v3690, %v3691
    %v3693 = vrot.slane %v3692, 2
    %v3694 = vadd.f32 %v3692, %v3693
    %v3695 = vrot.slane %v3694, 1
    %v3696 = vadd.f32 %v3694, %v3695
    %v3697 = vadd.f32 %v3628, %v3635
    %v3698 = vadd.f32 %v3697, %v3642
    %v3699 = vadd.f32 %v3698, %v3649
    %v3700 = vrot.slane %v3699, 4
    %v3701 = vadd.f32 %v3699, %v3700
    %v3702 = vrot.slane %v3701, 2
    %v3703 = vadd.f32 %v3701, %v3702
    %v3704 = vrot.slane %v3703, 1
    %v3705 = vadd.f32 %v3703, %v3704
    %v3706 = vadd.f32 %v3630, %v3637
    %v3707 = vadd.f32 %v3706, %v3644
    %v3708 = vadd.f32 %v3707, %v3651
    %v3709 = vrot.slane %v3708, 4
    %v3710 = vadd.f32 %v3708, %v3709
    %v3711 = vrot.slane %v3710, 2
    %v3712 = vadd.f32 %v3710, %v3711
    %v3713 = vrot.slane %v3712, 1
    %v3714 = vadd.f32 %v3712, %v3713
    %v3715 = vmul.f32 %v3628, %v3628
    %v3716 = vmul.f32 %v3630, %v3630
    %v3717 = vmul.f32 %v3635, %v3635
    %v3718 = vmul.f32 %v3637, %v3637
    %v3719 = vmul.f32 %v3642, %v3642
    %v3720 = vmul.f32 %v3644, %v3644
    %v3721 = vmul.f32 %v3649, %v3649
    %v3722 = vmul.f32 %v3651, %v3651
    %v3723 = vadd.f32 %v3715, %v3717
    %v3724 = vadd.f32 %v3723, %v3719
    %v3725 = vadd.f32 %v3724, %v3721
    %v3726 = vrot.slane %v3725, 4
    %v3727 = vadd.f32 %v3725, %v3726
    %v3728 = vrot.slane %v3727, 2
    %v3729 = vadd.f32 %v3727, %v3728
    %v3730 = vrot.slane %v3729, 1
    %v3731 = vadd.f32 %v3729, %v3730
    %v3732 = vadd.f32 %v3716, %v3718
    %v3733 = vadd.f32 %v3732, %v3720
    %v3734 = vadd.f32 %v3733, %v3722
    %v3735 = vrot.slane %v3734, 4
    %v3736 = vadd.f32 %v3734, %v3735
    %v3737 = vrot.slane %v3736, 2
    %v3738 = vadd.f32 %v3736, %v3737
    %v3739 = vrot.slane %v3738, 1
    %v3740 = vadd.f32 %v3738, %v3739
    %vm3741 = vcmask 1040384
    %v3742 = vsel %vm3741, %v3661, %v3687
    %v3743 = vsel %vm3741, %v3670, %v3696
    %vm3744 = vcmask 1041408
    %v3745 = vsel %vm3744, %v3742, %v3705
    %v3746 = vsel %vm3744, %v3743, %v3714
    %vm3747 = vcmask 1042432
    %v3748 = vsel %vm3747, %v3745, %v3731
    %v3749 = vsel %vm3747, %v3746, %v3740
    %v3750 = vld [vmem:[#allocation8] sm:$0xff]
    %v3751 = vld [vmem:[#allocation8 + $0x8] sm:$0xff]
    %v3752 = vld [vmem:[#allocation8 + $0x10] sm:$0xff]
    %v3753 = vld [vmem:[#allocation8 + $0x18] sm:$0xff]
    %v3754 = vld [vmem:[#allocation8 + $0x20] sm:$0xff]
    %v3755 = vld [vmem:[#allocation8 + $0x28] sm:$0xff]
    %v3756 = vld [vmem:[#allocation8 + $0x30] sm:$0xff]
    %v3757 = vld [vmem:[#allocation8 + $0x38] sm:$0xff]
    %v3758 = vld [vmem:[#allocation8 + $0x40] sm:$0xff]
    %v3759 = vld [vmem:[#allocation8 + $0x48] sm:$0xff]
    %v3760 = vld [vmem:[#allocation8 + $0x50] sm:$0xff]
    %v3761 = vld [vmem:[#allocation8 + $0x58] sm:$0xff]
    %v3762 = vld [vmem:[#allocation8 + $0x60] sm:$0xff]
    %v3763 = vld [vmem:[#allocation8 + $0x68] sm:$0xff]
    %v3764 = vld [vmem:[#allocation8 + $0x70] sm:$0xff]
    %v3765 = vld [vmem:[#allocation8 + $0x78] sm:$0xff]
    %v3766 = vld [vmem:[#allocation8 + $0x80] sm:$0xff]
    %v3767 = vld [vmem:[#allocation8 + $0x88] sm:$0xff]
    %v3768 = vld [vmem:[#allocation8 + $0x90] sm:$0xff]
    %v3769 = vld [vmem:[#allocation8 + $0x98] sm:$0xff]
    %v3770 = vld [vmem:[#allocation8 + $0xa0] sm:$0xff]
    %v3771 = vld [vmem:[#allocation8 + $0xa8] sm:$0xff]
    %v3772 = vld [vmem:[#allocation8 + $0xb0] sm:$0xff]
    %v3773 = vld [vmem:[#allocation8 + $0xb8] sm:$0xff]
    %v3774 = vld [vmem:[#allocation8 + $0xc0] sm:$0xff]
    %v3775 = vld [vmem:[#allocation8 + $0xc8] sm:$0xff]
    %v3776 = vld [vmem:[#allocation8 + $0xd0] sm:$0xff]
    %v3777 = vld [vmem:[#allocation8 + $0xd8] sm:$0xff]
    %v3778 = vld [vmem:[#allocation8 + $0xe0] sm:$0xff]
    %v3779 = vld [vmem:[#allocation8 + $0xe8] sm:$0xff]
    %v3780 = vld [vmem:[#allocation8 + $0xf0] sm:$0xff]
    %v3781 = vld [vmem:[#allocation8 + $0xf8] sm:$0xff]
    %v3782 = vld [vmem:[#allocation8 + $0x100] sm:$0xff]
    %v3783 = vld [vmem:[#allocation8 + $0x108] sm:$0xff]
    %v3784 = vld [vmem:[#allocation8 + $0x110] sm:$0xff]
    %v3785 = vld [vmem:[#allocation8 + $0x118] sm:$0xff]
    %v3786 = vld [vmem:[#allocation8 + $0x120] sm:$0xff]
    %v3787 = vld [vmem:[#allocation8 + $0x128] sm:$0xff]
    %v3788 = vld [vmem:[#allocation8 + $0x130] sm:$0xff]
    %v3789 = vld [vmem:[#allocation8 + $0x138] sm:$0xff]
    %v3790 = vld [vmem:[#allocation8 + $0x140] sm:$0xff]
    %v3791 = vld [vmem:[#allocation8 + $0x148] sm:$0xff]
    %v3792 = vld [vmem:[#allocation8 + $0x150] sm:$0xff]
    %v3793 = vld [vmem:[#allocation8 + $0x158] sm:$0xff]
    %v3794 = vld [vmem:[#allocation8 + $0x160] sm:$0xff]
    %v3795 = vld [vmem:[#allocation8 + $0x168] sm:$0xff]
    %v3796 = vld [vmem:[#allocation8 + $0x170] sm:$0xff]
    %v3797 = vld [vmem:[#allocation8 + $0x178] sm:$0xff]
    %v3798 = vld [vmem:[#allocation8 + $0x180] sm:$0xff]
    %v3799 = vld [vmem:[#allocation8 + $0x188] sm:$0xff]
    %v3800 = vld [vmem:[#allocation8 + $0x190] sm:$0xff]
    %v3801 = vld [vmem:[#allocation8 + $0x198] sm:$0xff]
    %v3802 = vld [vmem:[#allocation8 + $0x1a0] sm:$0xff]
    %v3803 = vld [vmem:[#allocation8 + $0x1a8] sm:$0xff]
    %v3804 = vld [vmem:[#allocation8 + $0x1b0] sm:$0xff]
    %v3805 = vld [vmem:[#allocation8 + $0x1b8] sm:$0xff]
    %v3806 = vld [vmem:[#allocation8 + $0x1c0] sm:$0xff]
    %v3807 = vld [vmem:[#allocation8 + $0x1c8] sm:$0xff]
    %v3808 = vld [vmem:[#allocation8 + $0x1d0] sm:$0xff]
    %v3809 = vld [vmem:[#allocation8 + $0x1d8] sm:$0xff]
    %v3810 = vld [vmem:[#allocation8 + $0x1e0] sm:$0xff]
    %v3811 = vld [vmem:[#allocation8 + $0x1e8] sm:$0xff]
    %v3812 = vld [vmem:[#allocation8 + $0x1f0] sm:$0xff]
    %v3813 = vld [vmem:[#allocation8 + $0x1f8] sm:$0xff]
    %v3814 = vand.u32 %v3781, 4294901760
    %3815 = vmatprep.subr.mxu0 %v3814
    %v3816 = vand.u32 %v3780, 4294901760
    %3817 = vmatpush1.msra.mxu0 %v3816
    %v3818 = vand.u32 %v3779, 4294901760
    %3819 = vmatprep.subr.mxu0 %v3818
    %v3820 = vand.u32 %v3778, 4294901760
    %3821 = vmatpush1.msra.mxu0 %v3820
    %v3822 = vand.u32 %v3777, 4294901760
    %3823 = vmatprep.subr.mxu0 %v3822
    %v3824 = vand.u32 %v3776, 4294901760
    %3825 = vmatpush1.msra.mxu0 %v3824
    %v3826 = vand.u32 %v3775, 4294901760
    %3827 = vmatprep.subr.mxu0 %v3826
    %v3828 = vand.u32 %v3774, 4294901760
    %3829 = vmatpush1.msra.mxu0 %v3828
    %v3830 = vand.u32 %v3773, 4294901760
    %3831 = vmatprep.subr.mxu0 %v3830
    %v3832 = vand.u32 %v3772, 4294901760
    %3833 = vmatpush1.msra.mxu0 %v3832
    %v3834 = vand.u32 %v3771, 4294901760
    %3835 = vmatprep.subr.mxu0 %v3834
    %v3836 = vand.u32 %v3770, 4294901760
    %3837 = vmatpush1.msra.mxu0 %v3836
    %v3838 = vand.u32 %v3769, 4294901760
    %3839 = vmatprep.subr.mxu0 %v3838
    %v3840 = vand.u32 %v3768, 4294901760
    %3841 = vmatpush1.msra.mxu0 %v3840
    %v3842 = vand.u32 %v3767, 4294901760
    %3843 = vmatprep.subr.mxu0 %v3842
    %v3844 = vand.u32 %v3766, 4294901760
    %3845 = vmatpush1.msra.mxu0 %v3844
    %v3846 = vand.u32 %v3765, 4294901760
    %3847 = vmatprep.subr.mxu0 %v3846
    %v3848 = vand.u32 %v3764, 4294901760
    %3849 = vmatpush1.msra.mxu0 %v3848
    %v3850 = vand.u32 %v3763, 4294901760
    %3851 = vmatprep.subr.mxu0 %v3850
    %v3852 = vand.u32 %v3762, 4294901760
    %3853 = vmatpush1.msra.mxu0 %v3852
    %v3854 = vand.u32 %v3761, 4294901760
    %3855 = vmatprep.subr.mxu0 %v3854
    %v3856 = vand.u32 %v3760, 4294901760
    %3857 = vmatpush1.msra.mxu0 %v3856
    %v3858 = vand.u32 %v3759, 4294901760
    %3859 = vmatprep.subr.mxu0 %v3858
    %v3860 = vand.u32 %v3758, 4294901760
    %3861 = vmatpush1.msra.mxu0 %v3860
    %v3862 = vand.u32 %v3757, 4294901760
    %3863 = vmatprep.subr.mxu0 %v3862
    %v3864 = vand.u32 %v3756, 4294901760
    %3865 = vmatpush1.msra.mxu0 %v3864
    %v3866 = vand.u32 %v3755, 4294901760
    %3867 = vmatprep.subr.mxu0 %v3866
    %v3868 = vand.u32 %v3754, 4294901760
    %3869 = vmatpush1.msra.mxu0 %v3868
    %v3870 = vand.u32 %v3753, 4294901760
    %3871 = vmatprep.subr.mxu0 %v3870
    %v3872 = vand.u32 %v3752, 4294901760
    %3873 = vmatpush1.msra.mxu0 %v3872
    %v3874 = vand.u32 %v3751, 4294901760
    %3875 = vmatprep.subr.mxu0 %v3874
    %v3876 = vand.u32 %v3750, 4294901760
    %3877 = vmatpush1.msra.mxu0 %v3876
    %v3878 = vand.u32 %v3813, 4294901760
    %3879 = vmatprep.subr.mxu0 %v3878
    %v3880 = vand.u32 %v3812, 4294901760
    %3881 = vmatpush2.msra.mxu0 %v3880
    %v3882 = vand.u32 %v3811, 4294901760
    %3883 = vmatprep.subr.mxu0 %v3882
    %v3884 = vand.u32 %v3810, 4294901760
    %3885 = vmatpush2.msra.mxu0 %v3884
    %v3886 = vand.u32 %v3809, 4294901760
    %3887 = vmatprep.subr.mxu0 %v3886
    %v3888 = vand.u32 %v3808, 4294901760
    %3889 = vmatpush2.msra.mxu0 %v3888
    %v3890 = vand.u32 %v3807, 4294901760
    %3891 = vmatprep.subr.mxu0 %v3890
    %v3892 = vand.u32 %v3806, 4294901760
    %3893 = vmatpush2.msra.mxu0 %v3892
    %v3894 = vand.u32 %v3805, 4294901760
    %3895 = vmatprep.subr.mxu0 %v3894
    %v3896 = vand.u32 %v3804, 4294901760
    %3897 = vmatpush2.msra.mxu0 %v3896
    %v3898 = vand.u32 %v3803, 4294901760
    %3899 = vmatprep.subr.mxu0 %v3898
    %v3900 = vand.u32 %v3802, 4294901760
    %3901 = vmatpush2.msra.mxu0 %v3900
    %v3902 = vand.u32 %v3801, 4294901760
    %3903 = vmatprep.subr.mxu0 %v3902
    %v3904 = vand.u32 %v3800, 4294901760
    %3905 = vmatpush2.msra.mxu0 %v3904
    %v3906 = vand.u32 %v3799, 4294901760
    %3907 = vmatprep.subr.mxu0 %v3906
    %v3908 = vand.u32 %v3798, 4294901760
    %3909 = vmatpush2.msra.mxu0 %v3908
    %v3910 = vand.u32 %v3797, 4294901760
    %3911 = vmatprep.subr.mxu0 %v3910
    %v3912 = vand.u32 %v3796, 4294901760
    %3913 = vmatpush2.msra.mxu0 %v3912
    %v3914 = vand.u32 %v3795, 4294901760
    %3915 = vmatprep.subr.mxu0 %v3914
    %v3916 = vand.u32 %v3794, 4294901760
    %3917 = vmatpush2.msra.mxu0 %v3916
    %v3918 = vand.u32 %v3793, 4294901760
    %3919 = vmatprep.subr.mxu0 %v3918
    %v3920 = vand.u32 %v3792, 4294901760
    %3921 = vmatpush2.msra.mxu0 %v3920
    %v3922 = vand.u32 %v3791, 4294901760
    %3923 = vmatprep.subr.mxu0 %v3922
    %v3924 = vand.u32 %v3790, 4294901760
    %3925 = vmatpush2.msra.mxu0 %v3924
    %v3926 = vand.u32 %v3789, 4294901760
    %3927 = vmatprep.subr.mxu0 %v3926
    %v3928 = vand.u32 %v3788, 4294901760
    %3929 = vmatpush2.msra.mxu0 %v3928
    %v3930 = vand.u32 %v3787, 4294901760
    %3931 = vmatprep.subr.mxu0 %v3930
    %v3932 = vand.u32 %v3786, 4294901760
    %3933 = vmatpush2.msra.mxu0 %v3932
    %v3934 = vand.u32 %v3785, 4294901760
    %3935 = vmatprep.subr.mxu0 %v3934
    %v3936 = vand.u32 %v3784, 4294901760
    %3937 = vmatpush2.msra.mxu0 %v3936
    %v3938 = vand.u32 %v3783, 4294901760
    %3939 = vmatprep.subr.mxu0 %v3938
    %v3940 = vand.u32 %v3782, 4294901760
    %3941 = vmatpush2.msra.mxu0 %v3940
    %v3942 = vand.u32 %v3749, 4294901760
    %v3943 = vsub.f32 %v3749, %v3942
    %v3944 = vand.u32 %v3943, 4294901760
    %v3945 = vsub.f32 %v3943, %v3944
    %v3946 = vand.u32 %v3945, 4294901760
    %3947 = vmatprep.mubr.f32.mxu0 %v3946
    %v3948 = vand.u32 %v3748, 4294901760
    %v3949 = vsub.f32 %v3748, %v3948
    %v3950 = vand.u32 %v3949, 4294901760
    %v3951 = vsub.f32 %v3949, %v3950
    %v3952 = vand.u32 %v3951, 4294901760
    %3953 = vmatmul.mubr.f32.gmra.mxu0 %v3952
    %v3954 = vpop.f32.mrf.mxu0
    %v3955 = vadd.f32 0.0, %v3954
    %v3956 = vpop.f32.mrf.mxu0
    %v3957 = vadd.f32 0.0, %v3956
    %3958 = vdwg.mxu0
    %v3959 = vand.u32 %v3781, 4294901760
    %v3960 = vsub.f32 %v3781, %v3959
    %v3961 = vand.u32 %v3960, 4294901760
    %v3962 = vsub.f32 %v3960, %v3961
    %v3963 = vand.u32 %v3962, 4294901760
    %3964 = vmatprep.subr.mxu0 %v3963
    %v3965 = vand.u32 %v3780, 4294901760
    %v3966 = vsub.f32 %v3780, %v3965
    %v3967 = vand.u32 %v3966, 4294901760
    %v3968 = vsub.f32 %v3966, %v3967
    %v3969 = vand.u32 %v3968, 4294901760
    %3970 = vmatpush1.msra.mxu0 %v3969
    %v3971 = vand.u32 %v3779, 4294901760
    %v3972 = vsub.f32 %v3779, %v3971
    %v3973 = vand.u32 %v3972, 4294901760
    %v3974 = vsub.f32 %v3972, %v3973
    %v3975 = vand.u32 %v3974, 4294901760
    %3976 = vmatprep.subr.mxu0 %v3975
    %v3977 = vand.u32 %v3778, 4294901760
    %v3978 = vsub.f32 %v3778, %v3977
    %v3979 = vand.u32 %v3978, 4294901760
    %v3980 = vsub.f32 %v3978, %v3979
    %v3981 = vand.u32 %v3980, 4294901760
    %3982 = vmatpush1.msra.mxu0 %v3981
    %v3983 = vand.u32 %v3777, 4294901760
    %v3984 = vsub.f32 %v3777, %v3983
    %v3985 = vand.u32 %v3984, 4294901760
    %v3986 = vsub.f32 %v3984, %v3985
    %v3987 = vand.u32 %v3986, 4294901760
    %3988 = vmatprep.subr.mxu0 %v3987
    %v3989 = vand.u32 %v3776, 4294901760
    %v3990 = vsub.f32 %v3776, %v3989
    %v3991 = vand.u32 %v3990, 4294901760
    %v3992 = vsub.f32 %v3990, %v3991
    %v3993 = vand.u32 %v3992, 4294901760
    %3994 = vmatpush1.msra.mxu0 %v3993
    %v3995 = vand.u32 %v3775, 4294901760
    %v3996 = vsub.f32 %v3775, %v3995
    %v3997 = vand.u32 %v3996, 4294901760
    %v3998 = vsub.f32 %v3996, %v3997
    %v3999 = vand.u32 %v3998, 4294901760
    %4000 = vmatprep.subr.mxu0 %v3999
    %v4001 = vand.u32 %v3774, 4294901760
    %v4002 = vsub.f32 %v3774, %v4001
    %v4003 = vand.u32 %v4002, 4294901760
    %v4004 = vsub.f32 %v4002, %v4003
    %v4005 = vand.u32 %v4004, 4294901760
    %4006 = vmatpush1.msra.mxu0 %v4005
    %v4007 = vand.u32 %v3773, 4294901760
    %v4008 = vsub.f32 %v3773, %v4007
    %v4009 = vand.u32 %v4008, 4294901760
    %v4010 = vsub.f32 %v4008, %v4009
    %v4011 = vand.u32 %v4010, 4294901760
    %4012 = vmatprep.subr.mxu0 %v4011
    %v4013 = vand.u32 %v3772, 4294901760
    %v4014 = vsub.f32 %v3772, %v4013
    %v4015 = vand.u32 %v4014, 4294901760
    %v4016 = vsub.f32 %v4014, %v4015
    %v4017 = vand.u32 %v4016, 4294901760
    %4018 = vmatpush1.msra.mxu0 %v4017
    %v4019 = vand.u32 %v3771, 4294901760
    %v4020 = vsub.f32 %v3771, %v4019
    %v4021 = vand.u32 %v4020, 4294901760
    %v4022 = vsub.f32 %v4020, %v4021
    %v4023 = vand.u32 %v4022, 4294901760
    %4024 = vmatprep.subr.mxu0 %v4023
    %v4025 = vand.u32 %v3770, 4294901760
    %v4026 = vsub.f32 %v3770, %v4025
    %v4027 = vand.u32 %v4026, 4294901760
    %v4028 = vsub.f32 %v4026, %v4027
    %v4029 = vand.u32 %v4028, 4294901760
    %4030 = vmatpush1.msra.mxu0 %v4029
    %v4031 = vand.u32 %v3769, 4294901760
    %v4032 = vsub.f32 %v3769, %v4031
    %v4033 = vand.u32 %v4032, 4294901760
    %v4034 = vsub.f32 %v4032, %v4033
    %v4035 = vand.u32 %v4034, 4294901760
    %4036 = vmatprep.subr.mxu0 %v4035
    %v4037 = vand.u32 %v3768, 4294901760
    %v4038 = vsub.f32 %v3768, %v4037
    %v4039 = vand.u32 %v4038, 4294901760
    %v4040 = vsub.f32 %v4038, %v4039
    %v4041 = vand.u32 %v4040, 4294901760
    %4042 = vmatpush1.msra.mxu0 %v4041
    %v4043 = vand.u32 %v3767, 4294901760
    %v4044 = vsub.f32 %v3767, %v4043
    %v4045 = vand.u32 %v4044, 4294901760
    %v4046 = vsub.f32 %v4044, %v4045
    %v4047 = vand.u32 %v4046, 4294901760
    %4048 = vmatprep.subr.mxu0 %v4047
    %v4049 = vand.u32 %v3766, 4294901760
    %v4050 = vsub.f32 %v3766, %v4049
    %v4051 = vand.u32 %v4050, 4294901760
    %v4052 = vsub.f32 %v4050, %v4051
    %v4053 = vand.u32 %v4052, 4294901760
    %4054 = vmatpush1.msra.mxu0 %v4053
    %v4055 = vand.u32 %v3765, 4294901760
    %v4056 = vsub.f32 %v3765, %v4055
    %v4057 = vand.u32 %v4056, 4294901760
    %v4058 = vsub.f32 %v4056, %v4057
    %v4059 = vand.u32 %v4058, 4294901760
    %4060 = vmatprep.subr.mxu0 %v4059
    %v4061 = vand.u32 %v3764, 4294901760
    %v4062 = vsub.f32 %v3764, %v4061
    %v4063 = vand.u32 %v4062, 4294901760
    %v4064 = vsub.f32 %v4062, %v4063
    %v4065 = vand.u32 %v4064, 4294901760
    %4066 = vmatpush1.msra.mxu0 %v4065
    %v4067 = vand.u32 %v3763, 4294901760
    %v4068 = vsub.f32 %v3763, %v4067
    %v4069 = vand.u32 %v4068, 4294901760
    %v4070 = vsub.f32 %v4068, %v4069
    %v4071 = vand.u32 %v4070, 4294901760
    %4072 = vmatprep.subr.mxu0 %v4071
    %v4073 = vand.u32 %v3762, 4294901760
    %v4074 = vsub.f32 %v3762, %v4073
    %v4075 = vand.u32 %v4074, 4294901760
    %v4076 = vsub.f32 %v4074, %v4075
    %v4077 = vand.u32 %v4076, 4294901760
    %4078 = vmatpush1.msra.mxu0 %v4077
    %v4079 = vand.u32 %v3761, 4294901760
    %v4080 = vsub.f32 %v3761, %v4079
    %v4081 = vand.u32 %v4080, 4294901760
    %v4082 = vsub.f32 %v4080, %v4081
    %v4083 = vand.u32 %v4082, 4294901760
    %4084 = vmatprep.subr.mxu0 %v4083
    %v4085 = vand.u32 %v3760, 4294901760
    %v4086 = vsub.f32 %v3760, %v4085
    %v4087 = vand.u32 %v4086, 4294901760
    %v4088 = vsub.f32 %v4086, %v4087
    %v4089 = vand.u32 %v4088, 4294901760
    %4090 = vmatpush1.msra.mxu0 %v4089
    %v4091 = vand.u32 %v3759, 4294901760
    %v4092 = vsub.f32 %v3759, %v4091
    %v4093 = vand.u32 %v4092, 4294901760
    %v4094 = vsub.f32 %v4092, %v4093
    %v4095 = vand.u32 %v4094, 4294901760
    %4096 = vmatprep.subr.mxu0 %v4095
    %v4097 = vand.u32 %v3758, 4294901760
    %v4098 = vsub.f32 %v3758, %v4097
    %v4099 = vand.u32 %v4098, 4294901760
    %v4100 = vsub.f32 %v4098, %v4099
    %v4101 = vand.u32 %v4100, 4294901760
    %4102 = vmatpush1.msra.mxu0 %v4101
    %v4103 = vand.u32 %v3757, 4294901760
    %v4104 = vsub.f32 %v3757, %v4103
    %v4105 = vand.u32 %v4104, 4294901760
    %v4106 = vsub.f32 %v4104, %v4105
    %v4107 = vand.u32 %v4106, 4294901760
    %4108 = vmatprep.subr.mxu0 %v4107
    %v4109 = vand.u32 %v3756, 4294901760
    %v4110 = vsub.f32 %v3756, %v4109
    %v4111 = vand.u32 %v4110, 4294901760
    %v4112 = vsub.f32 %v4110, %v4111
    %v4113 = vand.u32 %v4112, 4294901760
    %4114 = vmatpush1.msra.mxu0 %v4113
    %v4115 = vand.u32 %v3755, 4294901760
    %v4116 = vsub.f32 %v3755, %v4115
    %v4117 = vand.u32 %v4116, 4294901760
    %v4118 = vsub.f32 %v4116, %v4117
    %v4119 = vand.u32 %v4118, 4294901760
    %4120 = vmatprep.subr.mxu0 %v4119
    %v4121 = vand.u32 %v3754, 4294901760
    %v4122 = vsub.f32 %v3754, %v4121
    %v4123 = vand.u32 %v4122, 4294901760
    %v4124 = vsub.f32 %v4122, %v4123
    %v4125 = vand.u32 %v4124, 4294901760
    %4126 = vmatpush1.msra.mxu0 %v4125
    %v4127 = vand.u32 %v3753, 4294901760
    %v4128 = vsub.f32 %v3753, %v4127
    %v4129 = vand.u32 %v4128, 4294901760
    %v4130 = vsub.f32 %v4128, %v4129
    %v4131 = vand.u32 %v4130, 4294901760
    %4132 = vmatprep.subr.mxu0 %v4131
    %v4133 = vand.u32 %v3752, 4294901760
    %v4134 = vsub.f32 %v3752, %v4133
    %v4135 = vand.u32 %v4134, 4294901760
    %v4136 = vsub.f32 %v4134, %v4135
    %v4137 = vand.u32 %v4136, 4294901760
    %4138 = vmatpush1.msra.mxu0 %v4137
    %v4139 = vand.u32 %v3751, 4294901760
    %v4140 = vsub.f32 %v3751, %v4139
    %v4141 = vand.u32 %v4140, 4294901760
    %v4142 = vsub.f32 %v4140, %v4141
    %v4143 = vand.u32 %v4142, 4294901760
    %4144 = vmatprep.subr.mxu0 %v4143
    %v4145 = vand.u32 %v3750, 4294901760
    %v4146 = vsub.f32 %v3750, %v4145
    %v4147 = vand.u32 %v4146, 4294901760
    %v4148 = vsub.f32 %v4146, %v4147
    %v4149 = vand.u32 %v4148, 4294901760
    %4150 = vmatpush1.msra.mxu0 %v4149
    %v4151 = vand.u32 %v3813, 4294901760
    %v4152 = vsub.f32 %v3813, %v4151
    %v4153 = vand.u32 %v4152, 4294901760
    %v4154 = vsub.f32 %v4152, %v4153
    %v4155 = vand.u32 %v4154, 4294901760
    %4156 = vmatprep.subr.mxu0 %v4155
    %v4157 = vand.u32 %v3812, 4294901760
    %v4158 = vsub.f32 %v3812, %v4157
    %v4159 = vand.u32 %v4158, 4294901760
    %v4160 = vsub.f32 %v4158, %v4159
    %v4161 = vand.u32 %v4160, 4294901760
    %4162 = vmatpush2.msra.mxu0 %v4161
    %v4163 = vand.u32 %v3811, 4294901760
    %v4164 = vsub.f32 %v3811, %v4163
    %v4165 = vand.u32 %v4164, 4294901760
    %v4166 = vsub.f32 %v4164, %v4165
    %v4167 = vand.u32 %v4166, 4294901760
    %4168 = vmatprep.subr.mxu0 %v4167
    %v4169 = vand.u32 %v3810, 4294901760
    %v4170 = vsub.f32 %v3810, %v4169
    %v4171 = vand.u32 %v4170, 4294901760
    %v4172 = vsub.f32 %v4170, %v4171
    %v4173 = vand.u32 %v4172, 4294901760
    %4174 = vmatpush2.msra.mxu0 %v4173
    %v4175 = vand.u32 %v3809, 4294901760
    %v4176 = vsub.f32 %v3809, %v4175
    %v4177 = vand.u32 %v4176, 4294901760
    %v4178 = vsub.f32 %v4176, %v4177
    %v4179 = vand.u32 %v4178, 4294901760
    %4180 = vmatprep.subr.mxu0 %v4179
    %v4181 = vand.u32 %v3808, 4294901760
    %v4182 = vsub.f32 %v3808, %v4181
    %v4183 = vand.u32 %v4182, 4294901760
    %v4184 = vsub.f32 %v4182, %v4183
    %v4185 = vand.u32 %v4184, 4294901760
    %4186 = vmatpush2.msra.mxu0 %v4185
    %v4187 = vand.u32 %v3807, 4294901760
    %v4188 = vsub.f32 %v3807, %v4187
    %v4189 = vand.u32 %v4188, 4294901760
    %v4190 = vsub.f32 %v4188, %v4189
    %v4191 = vand.u32 %v4190, 4294901760
    %4192 = vmatprep.subr.mxu0 %v4191
    %v4193 = vand.u32 %v3806, 4294901760
    %v4194 = vsub.f32 %v3806, %v4193
    %v4195 = vand.u32 %v4194, 4294901760
    %v4196 = vsub.f32 %v4194, %v4195
    %v4197 = vand.u32 %v4196, 4294901760
    %4198 = vmatpush2.msra.mxu0 %v4197
    %v4199 = vand.u32 %v3805, 4294901760
    %v4200 = vsub.f32 %v3805, %v4199
    %v4201 = vand.u32 %v4200, 4294901760
    %v4202 = vsub.f32 %v4200, %v4201
    %v4203 = vand.u32 %v4202, 4294901760
    %4204 = vmatprep.subr.mxu0 %v4203
    %v4205 = vand.u32 %v3804, 4294901760
    %v4206 = vsub.f32 %v3804, %v4205
    %v4207 = vand.u32 %v4206, 4294901760
    %v4208 = vsub.f32 %v4206, %v4207
    %v4209 = vand.u32 %v4208, 4294901760
    %4210 = vmatpush2.msra.mxu0 %v4209
    %v4211 = vand.u32 %v3803, 4294901760
    %v4212 = vsub.f32 %v3803, %v4211
    %v4213 = vand.u32 %v4212, 4294901760
    %v4214 = vsub.f32 %v4212, %v4213
    %v4215 = vand.u32 %v4214, 4294901760
    %4216 = vmatprep.subr.mxu0 %v4215
    %v4217 = vand.u32 %v3802, 4294901760
    %v4218 = vsub.f32 %v3802, %v4217
    %v4219 = vand.u32 %v4218, 4294901760
    %v4220 = vsub.f32 %v4218, %v4219
    %v4221 = vand.u32 %v4220, 4294901760
    %4222 = vmatpush2.msra.mxu0 %v4221
    %v4223 = vand.u32 %v3801, 4294901760
    %v4224 = vsub.f32 %v3801, %v4223
    %v4225 = vand.u32 %v4224, 4294901760
    %v4226 = vsub.f32 %v4224, %v4225
    %v4227 = vand.u32 %v4226, 4294901760
    %4228 = vmatprep.subr.mxu0 %v4227
    %v4229 = vand.u32 %v3800, 4294901760
    %v4230 = vsub.f32 %v3800, %v4229
    %v4231 = vand.u32 %v4230, 4294901760
    %v4232 = vsub.f32 %v4230, %v4231
    %v4233 = vand.u32 %v4232, 4294901760
    %4234 = vmatpush2.msra.mxu0 %v4233
    %v4235 = vand.u32 %v3799, 4294901760
    %v4236 = vsub.f32 %v3799, %v4235
    %v4237 = vand.u32 %v4236, 4294901760
    %v4238 = vsub.f32 %v4236, %v4237
    %v4239 = vand.u32 %v4238, 4294901760
    %4240 = vmatprep.subr.mxu0 %v4239
    %v4241 = vand.u32 %v3798, 4294901760
    %v4242 = vsub.f32 %v3798, %v4241
    %v4243 = vand.u32 %v4242, 4294901760
    %v4244 = vsub.f32 %v4242, %v4243
    %v4245 = vand.u32 %v4244, 4294901760
    %4246 = vmatpush2.msra.mxu0 %v4245
    %v4247 = vand.u32 %v3797, 4294901760
    %v4248 = vsub.f32 %v3797, %v4247
    %v4249 = vand.u32 %v4248, 4294901760
    %v4250 = vsub.f32 %v4248, %v4249
    %v4251 = vand.u32 %v4250, 4294901760
    %4252 = vmatprep.subr.mxu0 %v4251
    %v4253 = vand.u32 %v3796, 4294901760
    %v4254 = vsub.f32 %v3796, %v4253
    %v4255 = vand.u32 %v4254, 4294901760
    %v4256 = vsub.f32 %v4254, %v4255
    %v4257 = vand.u32 %v4256, 4294901760
    %4258 = vmatpush2.msra.mxu0 %v4257
    %v4259 = vand.u32 %v3795, 4294901760
    %v4260 = vsub.f32 %v3795, %v4259
    %v4261 = vand.u32 %v4260, 4294901760
    %v4262 = vsub.f32 %v4260, %v4261
    %v4263 = vand.u32 %v4262, 4294901760
    %4264 = vmatprep.subr.mxu0 %v4263
    %v4265 = vand.u32 %v3794, 4294901760
    %v4266 = vsub.f32 %v3794, %v4265
    %v4267 = vand.u32 %v4266, 4294901760
    %v4268 = vsub.f32 %v4266, %v4267
    %v4269 = vand.u32 %v4268, 4294901760
    %4270 = vmatpush2.msra.mxu0 %v4269
    %v4271 = vand.u32 %v3793, 4294901760
    %v4272 = vsub.f32 %v3793, %v4271
    %v4273 = vand.u32 %v4272, 4294901760
    %v4274 = vsub.f32 %v4272, %v4273
    %v4275 = vand.u32 %v4274, 4294901760
    %4276 = vmatprep.subr.mxu0 %v4275
    %v4277 = vand.u32 %v3792, 4294901760
    %v4278 = vsub.f32 %v3792, %v4277
    %v4279 = vand.u32 %v4278, 4294901760
    %v4280 = vsub.f32 %v4278, %v4279
    %v4281 = vand.u32 %v4280, 4294901760
    %4282 = vmatpush2.msra.mxu0 %v4281
    %v4283 = vand.u32 %v3791, 4294901760
    %v4284 = vsub.f32 %v3791, %v4283
    %v4285 = vand.u32 %v4284, 4294901760
    %v4286 = vsub.f32 %v4284, %v4285
    %v4287 = vand.u32 %v4286, 4294901760
    %4288 = vmatprep.subr.mxu0 %v4287
    %v4289 = vand.u32 %v3790, 4294901760
    %v4290 = vsub.f32 %v3790, %v4289
    %v4291 = vand.u32 %v4290, 4294901760
    %v4292 = vsub.f32 %v4290, %v4291
    %v4293 = vand.u32 %v4292, 4294901760
    %4294 = vmatpush2.msra.mxu0 %v4293
    %v4295 = vand.u32 %v3789, 4294901760
    %v4296 = vsub.f32 %v3789, %v4295
    %v4297 = vand.u32 %v4296, 4294901760
    %v4298 = vsub.f32 %v4296, %v4297
    %v4299 = vand.u32 %v4298, 4294901760
    %4300 = vmatprep.subr.mxu0 %v4299
    %v4301 = vand.u32 %v3788, 4294901760
    %v4302 = vsub.f32 %v3788, %v4301
    %v4303 = vand.u32 %v4302, 4294901760
    %v4304 = vsub.f32 %v4302, %v4303
    %v4305 = vand.u32 %v4304, 4294901760
    %4306 = vmatpush2.msra.mxu0 %v4305
    %v4307 = vand.u32 %v3787, 4294901760
    %v4308 = vsub.f32 %v3787, %v4307
    %v4309 = vand.u32 %v4308, 4294901760
    %v4310 = vsub.f32 %v4308, %v4309
    %v4311 = vand.u32 %v4310, 4294901760
    %4312 = vmatprep.subr.mxu0 %v4311
    %v4313 = vand.u32 %v3786, 4294901760
    %v4314 = vsub.f32 %v3786, %v4313
    %v4315 = vand.u32 %v4314, 4294901760
    %v4316 = vsub.f32 %v4314, %v4315
    %v4317 = vand.u32 %v4316, 4294901760
    %4318 = vmatpush2.msra.mxu0 %v4317
    %v4319 = vand.u32 %v3785, 4294901760
    %v4320 = vsub.f32 %v3785, %v4319
    %v4321 = vand.u32 %v4320, 4294901760
    %v4322 = vsub.f32 %v4320, %v4321
    %v4323 = vand.u32 %v4322, 4294901760
    %4324 = vmatprep.subr.mxu0 %v4323
    %v4325 = vand.u32 %v3784, 4294901760
    %v4326 = vsub.f32 %v3784, %v4325
    %v4327 = vand.u32 %v4326, 4294901760
    %v4328 = vsub.f32 %v4326, %v4327
    %v4329 = vand.u32 %v4328, 4294901760
    %4330 = vmatpush2.msra.mxu0 %v4329
    %v4331 = vand.u32 %v3783, 4294901760
    %v4332 = vsub.f32 %v3783, %v4331
    %v4333 = vand.u32 %v4332, 4294901760
    %v4334 = vsub.f32 %v4332, %v4333
    %v4335 = vand.u32 %v4334, 4294901760
    %4336 = vmatprep.subr.mxu0 %v4335
    %v4337 = vand.u32 %v3782, 4294901760
    %v4338 = vsub.f32 %v3782, %v4337
    %v4339 = vand.u32 %v4338, 4294901760
    %v4340 = vsub.f32 %v4338, %v4339
    %v4341 = vand.u32 %v4340, 4294901760
    %4342 = vmatpush2.msra.mxu0 %v4341
    %v4343 = vand.u32 %v3749, 4294901760
    %4344 = vmatprep.mubr.f32.mxu0 %v4343
    %v4345 = vand.u32 %v3748, 4294901760
    %4346 = vmatmul.mubr.f32.gmra.mxu0 %v4345
    %v4347 = vpop.f32.mrf.mxu0
    %v4348 = vadd.f32 %v3955, %v4347
    %v4349 = vpop.f32.mrf.mxu0
    %v4350 = vadd.f32 %v3957, %v4349
    %4351 = vdwg.mxu0
    %v4352 = vand.u32 %v3781, 4294901760
    %v4353 = vsub.f32 %v3781, %v4352
    %4354 = vmatprep.subr.mxu0 %v4353
    %v4355 = vand.u32 %v3780, 4294901760
    %v4356 = vsub.f32 %v3780, %v4355
    %4357 = vmatpush1.msra.mxu0 %v4356
    %v4358 = vand.u32 %v3779, 4294901760
    %v4359 = vsub.f32 %v3779, %v4358
    %4360 = vmatprep.subr.mxu0 %v4359
    %v4361 = vand.u32 %v3778, 4294901760
    %v4362 = vsub.f32 %v3778, %v4361
    %4363 = vmatpush1.msra.mxu0 %v4362
    %v4364 = vand.u32 %v3777, 4294901760
    %v4365 = vsub.f32 %v3777, %v4364
    %4366 = vmatprep.subr.mxu0 %v4365
    %v4367 = vand.u32 %v3776, 4294901760
    %v4368 = vsub.f32 %v3776, %v4367
    %4369 = vmatpush1.msra.mxu0 %v4368
    %v4370 = vand.u32 %v3775, 4294901760
    %v4371 = vsub.f32 %v3775, %v4370
    %4372 = vmatprep.subr.mxu0 %v4371
    %v4373 = vand.u32 %v3774, 4294901760
    %v4374 = vsub.f32 %v3774, %v4373
    %4375 = vmatpush1.msra.mxu0 %v4374
    %v4376 = vand.u32 %v3773, 4294901760
    %v4377 = vsub.f32 %v3773, %v4376
    %4378 = vmatprep.subr.mxu0 %v4377
    %v4379 = vand.u32 %v3772, 4294901760
    %v4380 = vsub.f32 %v3772, %v4379
    %4381 = vmatpush1.msra.mxu0 %v4380
    %v4382 = vand.u32 %v3771, 4294901760
    %v4383 = vsub.f32 %v3771, %v4382
    %4384 = vmatprep.subr.mxu0 %v4383
    %v4385 = vand.u32 %v3770, 4294901760
    %v4386 = vsub.f32 %v3770, %v4385
    %4387 = vmatpush1.msra.mxu0 %v4386
    %v4388 = vand.u32 %v3769, 4294901760
    %v4389 = vsub.f32 %v3769, %v4388
    %4390 = vmatprep.subr.mxu0 %v4389
    %v4391 = vand.u32 %v3768, 4294901760
    %v4392 = vsub.f32 %v3768, %v4391
    %4393 = vmatpush1.msra.mxu0 %v4392
    %v4394 = vand.u32 %v3767, 4294901760
    %v4395 = vsub.f32 %v3767, %v4394
    %4396 = vmatprep.subr.mxu0 %v4395
    %v4397 = vand.u32 %v3766, 4294901760
    %v4398 = vsub.f32 %v3766, %v4397
    %4399 = vmatpush1.msra.mxu0 %v4398
    %v4400 = vand.u32 %v3765, 4294901760
    %v4401 = vsub.f32 %v3765, %v4400
    %4402 = vmatprep.subr.mxu0 %v4401
    %v4403 = vand.u32 %v3764, 4294901760
    %v4404 = vsub.f32 %v3764, %v4403
    %4405 = vmatpush1.msra.mxu0 %v4404
    %v4406 = vand.u32 %v3763, 4294901760
    %v4407 = vsub.f32 %v3763, %v4406
    %4408 = vmatprep.subr.mxu0 %v4407
    %v4409 = vand.u32 %v3762, 4294901760
    %v4410 = vsub.f32 %v3762, %v4409
    %4411 = vmatpush1.msra.mxu0 %v4410
    %v4412 = vand.u32 %v3761, 4294901760
    %v4413 = vsub.f32 %v3761, %v4412
    %4414 = vmatprep.subr.mxu0 %v4413
    %v4415 = vand.u32 %v3760, 4294901760
    %v4416 = vsub.f32 %v3760, %v4415
    %4417 = vmatpush1.msra.mxu0 %v4416
    %v4418 = vand.u32 %v3759, 4294901760
    %v4419 = vsub.f32 %v3759, %v4418
    %4420 = vmatprep.subr.mxu0 %v4419
    %v4421 = vand.u32 %v3758, 4294901760
    %v4422 = vsub.f32 %v3758, %v4421
    %4423 = vmatpush1.msra.mxu0 %v4422
    %v4424 = vand.u32 %v3757, 4294901760
    %v4425 = vsub.f32 %v3757, %v4424
    %4426 = vmatprep.subr.mxu0 %v4425
    %v4427 = vand.u32 %v3756, 4294901760
    %v4428 = vsub.f32 %v3756, %v4427
    %4429 = vmatpush1.msra.mxu0 %v4428
    %v4430 = vand.u32 %v3755, 4294901760
    %v4431 = vsub.f32 %v3755, %v4430
    %4432 = vmatprep.subr.mxu0 %v4431
    %v4433 = vand.u32 %v3754, 4294901760
    %v4434 = vsub.f32 %v3754, %v4433
    %4435 = vmatpush1.msra.mxu0 %v4434
    %v4436 = vand.u32 %v3753, 4294901760
    %v4437 = vsub.f32 %v3753, %v4436
    %4438 = vmatprep.subr.mxu0 %v4437
    %v4439 = vand.u32 %v3752, 4294901760
    %v4440 = vsub.f32 %v3752, %v4439
    %4441 = vmatpush1.msra.mxu0 %v4440
    %v4442 = vand.u32 %v3751, 4294901760
    %v4443 = vsub.f32 %v3751, %v4442
    %4444 = vmatprep.subr.mxu0 %v4443
    %v4445 = vand.u32 %v3750, 4294901760
    %v4446 = vsub.f32 %v3750, %v4445
    %4447 = vmatpush1.msra.mxu0 %v4446
    %v4448 = vand.u32 %v3813, 4294901760
    %v4449 = vsub.f32 %v3813, %v4448
    %4450 = vmatprep.subr.mxu0 %v4449
    %v4451 = vand.u32 %v3812, 4294901760
    %v4452 = vsub.f32 %v3812, %v4451
    %4453 = vmatpush2.msra.mxu0 %v4452
    %v4454 = vand.u32 %v3811, 4294901760
    %v4455 = vsub.f32 %v3811, %v4454
    %4456 = vmatprep.subr.mxu0 %v4455
    %v4457 = vand.u32 %v3810, 4294901760
    %v4458 = vsub.f32 %v3810, %v4457
    %4459 = vmatpush2.msra.mxu0 %v4458
    %v4460 = vand.u32 %v3809, 4294901760
    %v4461 = vsub.f32 %v3809, %v4460
    %4462 = vmatprep.subr.mxu0 %v4461
    %v4463 = vand.u32 %v3808, 4294901760
    %v4464 = vsub.f32 %v3808, %v4463
    %4465 = vmatpush2.msra.mxu0 %v4464
    %v4466 = vand.u32 %v3807, 4294901760
    %v4467 = vsub.f32 %v3807, %v4466
    %4468 = vmatprep.subr.mxu0 %v4467
    %v4469 = vand.u32 %v3806, 4294901760
    %v4470 = vsub.f32 %v3806, %v4469
    %4471 = vmatpush2.msra.mxu0 %v4470
    %v4472 = vand.u32 %v3805, 4294901760
    %v4473 = vsub.f32 %v3805, %v4472
    %4474 = vmatprep.subr.mxu0 %v4473
    %v4475 = vand.u32 %v3804, 4294901760
    %v4476 = vsub.f32 %v3804, %v4475
    %4477 = vmatpush2.msra.mxu0 %v4476
    %v4478 = vand.u32 %v3803, 4294901760
    %v4479 = vsub.f32 %v3803, %v4478
    %4480 = vmatprep.subr.mxu0 %v4479
    %v4481 = vand.u32 %v3802, 4294901760
    %v4482 = vsub.f32 %v3802, %v4481
    %4483 = vmatpush2.msra.mxu0 %v4482
    %v4484 = vand.u32 %v3801, 4294901760
    %v4485 = vsub.f32 %v3801, %v4484
    %4486 = vmatprep.subr.mxu0 %v4485
    %v4487 = vand.u32 %v3800, 4294901760
    %v4488 = vsub.f32 %v3800, %v4487
    %4489 = vmatpush2.msra.mxu0 %v4488
    %v4490 = vand.u32 %v3799, 4294901760
    %v4491 = vsub.f32 %v3799, %v4490
    %4492 = vmatprep.subr.mxu0 %v4491
    %v4493 = vand.u32 %v3798, 4294901760
    %v4494 = vsub.f32 %v3798, %v4493
    %4495 = vmatpush2.msra.mxu0 %v4494
    %v4496 = vand.u32 %v3797, 4294901760
    %v4497 = vsub.f32 %v3797, %v4496
    %4498 = vmatprep.subr.mxu0 %v4497
    %v4499 = vand.u32 %v3796, 4294901760
    %v4500 = vsub.f32 %v3796, %v4499
    %4501 = vmatpush2.msra.mxu0 %v4500
    %v4502 = vand.u32 %v3795, 4294901760
    %v4503 = vsub.f32 %v3795, %v4502
    %4504 = vmatprep.subr.mxu0 %v4503
    %v4505 = vand.u32 %v3794, 4294901760
    %v4506 = vsub.f32 %v3794, %v4505
    %4507 = vmatpush2.msra.mxu0 %v4506
    %v4508 = vand.u32 %v3793, 4294901760
    %v4509 = vsub.f32 %v3793, %v4508
    %4510 = vmatprep.subr.mxu0 %v4509
    %v4511 = vand.u32 %v3792, 4294901760
    %v4512 = vsub.f32 %v3792, %v4511
    %4513 = vmatpush2.msra.mxu0 %v4512
    %v4514 = vand.u32 %v3791, 4294901760
    %v4515 = vsub.f32 %v3791, %v4514
    %4516 = vmatprep.subr.mxu0 %v4515
    %v4517 = vand.u32 %v3790, 4294901760
    %v4518 = vsub.f32 %v3790, %v4517
    %4519 = vmatpush2.msra.mxu0 %v4518
    %v4520 = vand.u32 %v3789, 4294901760
    %v4521 = vsub.f32 %v3789, %v4520
    %4522 = vmatprep.subr.mxu0 %v4521
    %v4523 = vand.u32 %v3788, 4294901760
    %v4524 = vsub.f32 %v3788, %v4523
    %4525 = vmatpush2.msra.mxu0 %v4524
    %v4526 = vand.u32 %v3787, 4294901760
    %v4527 = vsub.f32 %v3787, %v4526
    %4528 = vmatprep.subr.mxu0 %v4527
    %v4529 = vand.u32 %v3786, 4294901760
    %v4530 = vsub.f32 %v3786, %v4529
    %4531 = vmatpush2.msra.mxu0 %v4530
    %v4532 = vand.u32 %v3785, 4294901760
    %v4533 = vsub.f32 %v3785, %v4532
    %4534 = vmatprep.subr.mxu0 %v4533
    %v4535 = vand.u32 %v3784, 4294901760
    %v4536 = vsub.f32 %v3784, %v4535
    %4537 = vmatpush2.msra.mxu0 %v4536
    %v4538 = vand.u32 %v3783, 4294901760
    %v4539 = vsub.f32 %v3783, %v4538
    %4540 = vmatprep.subr.mxu0 %v4539
    %v4541 = vand.u32 %v3782, 4294901760
    %v4542 = vsub.f32 %v3782, %v4541
    %4543 = vmatpush2.msra.mxu0 %v4542
    %v4544 = vand.u32 %v3749, 4294901760
    %v4545 = vsub.f32 %v3749, %v4544
    %4546 = vmatprep.mubr.f32.mxu0 %v4545
    %v4547 = vand.u32 %v3748, 4294901760
    %v4548 = vsub.f32 %v3748, %v4547
    %4549 = vmatmul.mubr.f32.gmra.mxu0 %v4548
    %v4550 = vpop.f32.mrf.mxu0
    %v4551 = vadd.f32 %v4348, %v4550
    %v4552 = vpop.f32.mrf.mxu0
    %v4553 = vadd.f32 %v4350, %v4552
    %4554 = vdwg.mxu0
    %v4555 = vand.u32 %v3781, 4294901760
    %4556 = vmatprep.subr.mxu0 %v4555
    %v4557 = vand.u32 %v3780, 4294901760
    %4558 = vmatpush1.msra.mxu0 %v4557
    %v4559 = vand.u32 %v3779, 4294901760
    %4560 = vmatprep.subr.mxu0 %v4559
    %v4561 = vand.u32 %v3778, 4294901760
    %4562 = vmatpush1.msra.mxu0 %v4561
    %v4563 = vand.u32 %v3777, 4294901760
    %4564 = vmatprep.subr.mxu0 %v4563
    %v4565 = vand.u32 %v3776, 4294901760
    %4566 = vmatpush1.msra.mxu0 %v4565
    %v4567 = vand.u32 %v3775, 4294901760
    %4568 = vmatprep.subr.mxu0 %v4567
    %v4569 = vand.u32 %v3774, 4294901760
    %4570 = vmatpush1.msra.mxu0 %v4569
    %v4571 = vand.u32 %v3773, 4294901760
    %4572 = vmatprep.subr.mxu0 %v4571
    %v4573 = vand.u32 %v3772, 4294901760
    %4574 = vmatpush1.msra.mxu0 %v4573
    %v4575 = vand.u32 %v3771, 4294901760
    %4576 = vmatprep.subr.mxu0 %v4575
    %v4577 = vand.u32 %v3770, 4294901760
    %4578 = vmatpush1.msra.mxu0 %v4577
    %v4579 = vand.u32 %v3769, 4294901760
    %4580 = vmatprep.subr.mxu0 %v4579
    %v4581 = vand.u32 %v3768, 4294901760
    %4582 = vmatpush1.msra.mxu0 %v4581
    %v4583 = vand.u32 %v3767, 4294901760
    %4584 = vmatprep.subr.mxu0 %v4583
    %v4585 = vand.u32 %v3766, 4294901760
    %4586 = vmatpush1.msra.mxu0 %v4585
    %v4587 = vand.u32 %v3765, 4294901760
    %4588 = vmatprep.subr.mxu0 %v4587
    %v4589 = vand.u32 %v3764, 4294901760
    %4590 = vmatpush1.msra.mxu0 %v4589
    %v4591 = vand.u32 %v3763, 4294901760
    %4592 = vmatprep.subr.mxu0 %v4591
    %v4593 = vand.u32 %v3762, 4294901760
    %4594 = vmatpush1.msra.mxu0 %v4593
    %v4595 = vand.u32 %v3761, 4294901760
    %4596 = vmatprep.subr.mxu0 %v4595
    %v4597 = vand.u32 %v3760, 4294901760
    %4598 = vmatpush1.msra.mxu0 %v4597
    %v4599 = vand.u32 %v3759, 4294901760
    %4600 = vmatprep.subr.mxu0 %v4599
    %v4601 = vand.u32 %v3758, 4294901760
    %4602 = vmatpush1.msra.mxu0 %v4601
    %v4603 = vand.u32 %v3757, 4294901760
    %4604 = vmatprep.subr.mxu0 %v4603
    %v4605 = vand.u32 %v3756, 4294901760
    %4606 = vmatpush1.msra.mxu0 %v4605
    %v4607 = vand.u32 %v3755, 4294901760
    %4608 = vmatprep.subr.mxu0 %v4607
    %v4609 = vand.u32 %v3754, 4294901760
    %4610 = vmatpush1.msra.mxu0 %v4609
    %v4611 = vand.u32 %v3753, 4294901760
    %4612 = vmatprep.subr.mxu0 %v4611
    %v4613 = vand.u32 %v3752, 4294901760
    %4614 = vmatpush1.msra.mxu0 %v4613
    %v4615 = vand.u32 %v3751, 4294901760
    %4616 = vmatprep.subr.mxu0 %v4615
    %v4617 = vand.u32 %v3750, 4294901760
    %4618 = vmatpush1.msra.mxu0 %v4617
    %v4619 = vand.u32 %v3813, 4294901760
    %4620 = vmatprep.subr.mxu0 %v4619
    %v4621 = vand.u32 %v3812, 4294901760
    %4622 = vmatpush2.msra.mxu0 %v4621
    %v4623 = vand.u32 %v3811, 4294901760
    %4624 = vmatprep.subr.mxu0 %v4623
    %v4625 = vand.u32 %v3810, 4294901760
    %4626 = vmatpush2.msra.mxu0 %v4625
    %v4627 = vand.u32 %v3809, 4294901760
    %4628 = vmatprep.subr.mxu0 %v4627
    %v4629 = vand.u32 %v3808, 4294901760
    %4630 = vmatpush2.msra.mxu0 %v4629
    %v4631 = vand.u32 %v3807, 4294901760
    %4632 = vmatprep.subr.mxu0 %v4631
    %v4633 = vand.u32 %v3806, 4294901760
    %4634 = vmatpush2.msra.mxu0 %v4633
    %v4635 = vand.u32 %v3805, 4294901760
    %4636 = vmatprep.subr.mxu0 %v4635
    %v4637 = vand.u32 %v3804, 4294901760
    %4638 = vmatpush2.msra.mxu0 %v4637
    %v4639 = vand.u32 %v3803, 4294901760
    %4640 = vmatprep.subr.mxu0 %v4639
    %v4641 = vand.u32 %v3802, 4294901760
    %4642 = vmatpush2.msra.mxu0 %v4641
    %v4643 = vand.u32 %v3801, 4294901760
    %4644 = vmatprep.subr.mxu0 %v4643
    %v4645 = vand.u32 %v3800, 4294901760
    %4646 = vmatpush2.msra.mxu0 %v4645
    %v4647 = vand.u32 %v3799, 4294901760
    %4648 = vmatprep.subr.mxu0 %v4647
    %v4649 = vand.u32 %v3798, 4294901760
    %4650 = vmatpush2.msra.mxu0 %v4649
    %v4651 = vand.u32 %v3797, 4294901760
    %4652 = vmatprep.subr.mxu0 %v4651
    %v4653 = vand.u32 %v3796, 4294901760
    %4654 = vmatpush2.msra.mxu0 %v4653
    %v4655 = vand.u32 %v3795, 4294901760
    %4656 = vmatprep.subr.mxu0 %v4655
    %v4657 = vand.u32 %v3794, 4294901760
    %4658 = vmatpush2.msra.mxu0 %v4657
    %v4659 = vand.u32 %v3793, 4294901760
    %4660 = vmatprep.subr.mxu0 %v4659
    %v4661 = vand.u32 %v3792, 4294901760
    %4662 = vmatpush2.msra.mxu0 %v4661
    %v4663 = vand.u32 %v3791, 4294901760
    %4664 = vmatprep.subr.mxu0 %v4663
    %v4665 = vand.u32 %v3790, 4294901760
    %4666 = vmatpush2.msra.mxu0 %v4665
    %v4667 = vand.u32 %v3789, 4294901760
    %4668 = vmatprep.subr.mxu0 %v4667
    %v4669 = vand.u32 %v3788, 4294901760
    %4670 = vmatpush2.msra.mxu0 %v4669
    %v4671 = vand.u32 %v3787, 4294901760
    %4672 = vmatprep.subr.mxu0 %v4671
    %v4673 = vand.u32 %v3786, 4294901760
    %4674 = vmatpush2.msra.mxu0 %v4673
    %v4675 = vand.u32 %v3785, 4294901760
    %4676 = vmatprep.subr.mxu0 %v4675
    %v4677 = vand.u32 %v3784, 4294901760
    %4678 = vmatpush2.msra.mxu0 %v4677
    %v4679 = vand.u32 %v3783, 4294901760
    %4680 = vmatprep.subr.mxu0 %v4679
    %v4681 = vand.u32 %v3782, 4294901760
    %4682 = vmatpush2.msra.mxu0 %v4681
    %v4683 = vand.u32 %v3749, 4294901760
    %v4684 = vsub.f32 %v3749, %v4683
    %v4685 = vand.u32 %v4684, 4294901760
    %4686 = vmatprep.mubr.f32.mxu0 %v4685
    %v4687 = vand.u32 %v3748, 4294901760
    %v4688 = vsub.f32 %v3748, %v4687
    %v4689 = vand.u32 %v4688, 4294901760
    %4690 = vmatmul.mubr.f32.gmra.mxu0 %v4689
    %v4691 = vpop.f32.mrf.mxu0
    %v4692 = vadd.f32 %v4551, %v4691
    %v4693 = vpop.f32.mrf.mxu0
    %v4694 = vadd.f32 %v4553, %v4693
    %4695 = vdwg.mxu0
    %v4696 = vand.u32 %v3781, 4294901760
    %v4697 = vsub.f32 %v3781, %v4696
    %v4698 = vand.u32 %v4697, 4294901760
    %4699 = vmatprep.subr.mxu0 %v4698
    %v4700 = vand.u32 %v3780, 4294901760
    %v4701 = vsub.f32 %v3780, %v4700
    %v4702 = vand.u32 %v4701, 4294901760
    %4703 = vmatpush1.msra.mxu0 %v4702
    %v4704 = vand.u32 %v3779, 4294901760
    %v4705 = vsub.f32 %v3779, %v4704
    %v4706 = vand.u32 %v4705, 4294901760
    %4707 = vmatprep.subr.mxu0 %v4706
    %v4708 = vand.u32 %v3778, 4294901760
    %v4709 = vsub.f32 %v3778, %v4708
    %v4710 = vand.u32 %v4709, 4294901760
    %4711 = vmatpush1.msra.mxu0 %v4710
    %v4712 = vand.u32 %v3777, 4294901760
    %v4713 = vsub.f32 %v3777, %v4712
    %v4714 = vand.u32 %v4713, 4294901760
    %4715 = vmatprep.subr.mxu0 %v4714
    %v4716 = vand.u32 %v3776, 4294901760
    %v4717 = vsub.f32 %v3776, %v4716
    %v4718 = vand.u32 %v4717, 4294901760
    %4719 = vmatpush1.msra.mxu0 %v4718
    %v4720 = vand.u32 %v3775, 4294901760
    %v4721 = vsub.f32 %v3775, %v4720
    %v4722 = vand.u32 %v4721, 4294901760
    %4723 = vmatprep.subr.mxu0 %v4722
    %v4724 = vand.u32 %v3774, 4294901760
    %v4725 = vsub.f32 %v3774, %v4724
    %v4726 = vand.u32 %v4725, 4294901760
    %4727 = vmatpush1.msra.mxu0 %v4726
    %v4728 = vand.u32 %v3773, 4294901760
    %v4729 = vsub.f32 %v3773, %v4728
    %v4730 = vand.u32 %v4729, 4294901760
    %4731 = vmatprep.subr.mxu0 %v4730
    %v4732 = vand.u32 %v3772, 4294901760
    %v4733 = vsub.f32 %v3772, %v4732
    %v4734 = vand.u32 %v4733, 4294901760
    %4735 = vmatpush1.msra.mxu0 %v4734
    %v4736 = vand.u32 %v3771, 4294901760
    %v4737 = vsub.f32 %v3771, %v4736
    %v4738 = vand.u32 %v4737, 4294901760
    %4739 = vmatprep.subr.mxu0 %v4738
    %v4740 = vand.u32 %v3770, 4294901760
    %v4741 = vsub.f32 %v3770, %v4740
    %v4742 = vand.u32 %v4741, 4294901760
    %4743 = vmatpush1.msra.mxu0 %v4742
    %v4744 = vand.u32 %v3769, 4294901760
    %v4745 = vsub.f32 %v3769, %v4744
    %v4746 = vand.u32 %v4745, 4294901760
    %4747 = vmatprep.subr.mxu0 %v4746
    %v4748 = vand.u32 %v3768, 4294901760
    %v4749 = vsub.f32 %v3768, %v4748
    %v4750 = vand.u32 %v4749, 4294901760
    %4751 = vmatpush1.msra.mxu0 %v4750
    %v4752 = vand.u32 %v3767, 4294901760
    %v4753 = vsub.f32 %v3767, %v4752
    %v4754 = vand.u32 %v4753, 4294901760
    %4755 = vmatprep.subr.mxu0 %v4754
    %v4756 = vand.u32 %v3766, 4294901760
    %v4757 = vsub.f32 %v3766, %v4756
    %v4758 = vand.u32 %v4757, 4294901760
    %4759 = vmatpush1.msra.mxu0 %v4758
    %v4760 = vand.u32 %v3765, 4294901760
    %v4761 = vsub.f32 %v3765, %v4760
    %v4762 = vand.u32 %v4761, 4294901760
    %4763 = vmatprep.subr.mxu0 %v4762
    %v4764 = vand.u32 %v3764, 4294901760
    %v4765 = vsub.f32 %v3764, %v4764
    %v4766 = vand.u32 %v4765, 4294901760
    %4767 = vmatpush1.msra.mxu0 %v4766
    %v4768 = vand.u32 %v3763, 4294901760
    %v4769 = vsub.f32 %v3763, %v4768
    %v4770 = vand.u32 %v4769, 4294901760
    %4771 = vmatprep.subr.mxu0 %v4770
    %v4772 = vand.u32 %v3762, 4294901760
    %v4773 = vsub.f32 %v3762, %v4772
    %v4774 = vand.u32 %v4773, 4294901760
    %4775 = vmatpush1.msra.mxu0 %v4774
    %v4776 = vand.u32 %v3761, 4294901760
    %v4777 = vsub.f32 %v3761, %v4776
    %v4778 = vand.u32 %v4777, 4294901760
    %4779 = vmatprep.subr.mxu0 %v4778
    %v4780 = vand.u32 %v3760, 4294901760
    %v4781 = vsub.f32 %v3760, %v4780
    %v4782 = vand.u32 %v4781, 4294901760
    %4783 = vmatpush1.msra.mxu0 %v4782
    %v4784 = vand.u32 %v3759, 4294901760
    %v4785 = vsub.f32 %v3759, %v4784
    %v4786 = vand.u32 %v4785, 4294901760
    %4787 = vmatprep.subr.mxu0 %v4786
    %v4788 = vand.u32 %v3758, 4294901760
    %v4789 = vsub.f32 %v3758, %v4788
    %v4790 = vand.u32 %v4789, 4294901760
    %4791 = vmatpush1.msra.mxu0 %v4790
    %v4792 = vand.u32 %v3757, 4294901760
    %v4793 = vsub.f32 %v3757, %v4792
    %v4794 = vand.u32 %v4793, 4294901760
    %4795 = vmatprep.subr.mxu0 %v4794
    %v4796 = vand.u32 %v3756, 4294901760
    %v4797 = vsub.f32 %v3756, %v4796
    %v4798 = vand.u32 %v4797, 4294901760
    %4799 = vmatpush1.msra.mxu0 %v4798
    %v4800 = vand.u32 %v3755, 4294901760
    %v4801 = vsub.f32 %v3755, %v4800
    %v4802 = vand.u32 %v4801, 4294901760
    %4803 = vmatprep.subr.mxu0 %v4802
    %v4804 = vand.u32 %v3754, 4294901760
    %v4805 = vsub.f32 %v3754, %v4804
    %v4806 = vand.u32 %v4805, 4294901760
    %4807 = vmatpush1.msra.mxu0 %v4806
    %v4808 = vand.u32 %v3753, 4294901760
    %v4809 = vsub.f32 %v3753, %v4808
    %v4810 = vand.u32 %v4809, 4294901760
    %4811 = vmatprep.subr.mxu0 %v4810
    %v4812 = vand.u32 %v3752, 4294901760
    %v4813 = vsub.f32 %v3752, %v4812
    %v4814 = vand.u32 %v4813, 4294901760
    %4815 = vmatpush1.msra.mxu0 %v4814
    %v4816 = vand.u32 %v3751, 4294901760
    %v4817 = vsub.f32 %v3751, %v4816
    %v4818 = vand.u32 %v4817, 4294901760
    %4819 = vmatprep.subr.mxu0 %v4818
    %v4820 = vand.u32 %v3750, 4294901760
    %v4821 = vsub.f32 %v3750, %v4820
    %v4822 = vand.u32 %v4821, 4294901760
    %4823 = vmatpush1.msra.mxu0 %v4822
    %v4824 = vand.u32 %v3813, 4294901760
    %v4825 = vsub.f32 %v3813, %v4824
    %v4826 = vand.u32 %v4825, 4294901760
    %4827 = vmatprep.subr.mxu0 %v4826
    %v4828 = vand.u32 %v3812, 4294901760
    %v4829 = vsub.f32 %v3812, %v4828
    %v4830 = vand.u32 %v4829, 4294901760
    %4831 = vmatpush2.msra.mxu0 %v4830
    %v4832 = vand.u32 %v3811, 4294901760
    %v4833 = vsub.f32 %v3811, %v4832
    %v4834 = vand.u32 %v4833, 4294901760
    %4835 = vmatprep.subr.mxu0 %v4834
    %v4836 = vand.u32 %v3810, 4294901760
    %v4837 = vsub.f32 %v3810, %v4836
    %v4838 = vand.u32 %v4837, 4294901760
    %4839 = vmatpush2.msra.mxu0 %v4838
    %v4840 = vand.u32 %v3809, 4294901760
    %v4841 = vsub.f32 %v3809, %v4840
    %v4842 = vand.u32 %v4841, 4294901760
    %4843 = vmatprep.subr.mxu0 %v4842
    %v4844 = vand.u32 %v3808, 4294901760
    %v4845 = vsub.f32 %v3808, %v4844
    %v4846 = vand.u32 %v4845, 4294901760
    %4847 = vmatpush2.msra.mxu0 %v4846
    %v4848 = vand.u32 %v3807, 4294901760
    %v4849 = vsub.f32 %v3807, %v4848
    %v4850 = vand.u32 %v4849, 4294901760
    %4851 = vmatprep.subr.mxu0 %v4850
    %v4852 = vand.u32 %v3806, 4294901760
    %v4853 = vsub.f32 %v3806, %v4852
    %v4854 = vand.u32 %v4853, 4294901760
    %4855 = vmatpush2.msra.mxu0 %v4854
    %v4856 = vand.u32 %v3805, 4294901760
    %v4857 = vsub.f32 %v3805, %v4856
    %v4858 = vand.u32 %v4857, 4294901760
    %4859 = vmatprep.subr.mxu0 %v4858
    %v4860 = vand.u32 %v3804, 4294901760
    %v4861 = vsub.f32 %v3804, %v4860
    %v4862 = vand.u32 %v4861, 4294901760
    %4863 = vmatpush2.msra.mxu0 %v4862
    %v4864 = vand.u32 %v3803, 4294901760
    %v4865 = vsub.f32 %v3803, %v4864
    %v4866 = vand.u32 %v4865, 4294901760
    %4867 = vmatprep.subr.mxu0 %v4866
    %v4868 = vand.u32 %v3802, 4294901760
    %v4869 = vsub.f32 %v3802, %v4868
    %v4870 = vand.u32 %v4869, 4294901760
    %4871 = vmatpush2.msra.mxu0 %v4870
    %v4872 = vand.u32 %v3801, 4294901760
    %v4873 = vsub.f32 %v3801, %v4872
    %v4874 = vand.u32 %v4873, 4294901760
    %4875 = vmatprep.subr.mxu0 %v4874
    %v4876 = vand.u32 %v3800, 4294901760
    %v4877 = vsub.f32 %v3800, %v4876
    %v4878 = vand.u32 %v4877, 4294901760
    %4879 = vmatpush2.msra.mxu0 %v4878
    %v4880 = vand.u32 %v3799, 4294901760
    %v4881 = vsub.f32 %v3799, %v4880
    %v4882 = vand.u32 %v4881, 4294901760
    %4883 = vmatprep.subr.mxu0 %v4882
    %v4884 = vand.u32 %v3798, 4294901760
    %v4885 = vsub.f32 %v3798, %v4884
    %v4886 = vand.u32 %v4885, 4294901760
    %4887 = vmatpush2.msra.mxu0 %v4886
    %v4888 = vand.u32 %v3797, 4294901760
    %v4889 = vsub.f32 %v3797, %v4888
    %v4890 = vand.u32 %v4889, 4294901760
    %4891 = vmatprep.subr.mxu0 %v4890
    %v4892 = vand.u32 %v3796, 4294901760
    %v4893 = vsub.f32 %v3796, %v4892
    %v4894 = vand.u32 %v4893, 4294901760
    %4895 = vmatpush2.msra.mxu0 %v4894
    %v4896 = vand.u32 %v3795, 4294901760
    %v4897 = vsub.f32 %v3795, %v4896
    %v4898 = vand.u32 %v4897, 4294901760
    %4899 = vmatprep.subr.mxu0 %v4898
    %v4900 = vand.u32 %v3794, 4294901760
    %v4901 = vsub.f32 %v3794, %v4900
    %v4902 = vand.u32 %v4901, 4294901760
    %4903 = vmatpush2.msra.mxu0 %v4902
    %v4904 = vand.u32 %v3793, 4294901760
    %v4905 = vsub.f32 %v3793, %v4904
    %v4906 = vand.u32 %v4905, 4294901760
    %4907 = vmatprep.subr.mxu0 %v4906
    %v4908 = vand.u32 %v3792, 4294901760
    %v4909 = vsub.f32 %v3792, %v4908
    %v4910 = vand.u32 %v4909, 4294901760
    %4911 = vmatpush2.msra.mxu0 %v4910
    %v4912 = vand.u32 %v3791, 4294901760
    %v4913 = vsub.f32 %v3791, %v4912
    %v4914 = vand.u32 %v4913, 4294901760
    %4915 = vmatprep.subr.mxu0 %v4914
    %v4916 = vand.u32 %v3790, 4294901760
    %v4917 = vsub.f32 %v3790, %v4916
    %v4918 = vand.u32 %v4917, 4294901760
    %4919 = vmatpush2.msra.mxu0 %v4918
    %v4920 = vand.u32 %v3789, 4294901760
    %v4921 = vsub.f32 %v3789, %v4920
    %v4922 = vand.u32 %v4921, 4294901760
    %4923 = vmatprep.subr.mxu0 %v4922
    %v4924 = vand.u32 %v3788, 4294901760
    %v4925 = vsub.f32 %v3788, %v4924
    %v4926 = vand.u32 %v4925, 4294901760
    %4927 = vmatpush2.msra.mxu0 %v4926
    %v4928 = vand.u32 %v3787, 4294901760
    %v4929 = vsub.f32 %v3787, %v4928
    %v4930 = vand.u32 %v4929, 4294901760
    %4931 = vmatprep.subr.mxu0 %v4930
    %v4932 = vand.u32 %v3786, 4294901760
    %v4933 = vsub.f32 %v3786, %v4932
    %v4934 = vand.u32 %v4933, 4294901760
    %4935 = vmatpush2.msra.mxu0 %v4934
    %v4936 = vand.u32 %v3785, 4294901760
    %v4937 = vsub.f32 %v3785, %v4936
    %v4938 = vand.u32 %v4937, 4294901760
    %4939 = vmatprep.subr.mxu0 %v4938
    %v4940 = vand.u32 %v3784, 4294901760
    %v4941 = vsub.f32 %v3784, %v4940
    %v4942 = vand.u32 %v4941, 4294901760
    %4943 = vmatpush2.msra.mxu0 %v4942
    %v4944 = vand.u32 %v3783, 4294901760
    %v4945 = vsub.f32 %v3783, %v4944
    %v4946 = vand.u32 %v4945, 4294901760
    %4947 = vmatprep.subr.mxu0 %v4946
    %v4948 = vand.u32 %v3782, 4294901760
    %v4949 = vsub.f32 %v3782, %v4948
    %v4950 = vand.u32 %v4949, 4294901760
    %4951 = vmatpush2.msra.mxu0 %v4950
    %v4952 = vand.u32 %v3749, 4294901760
    %4953 = vmatprep.mubr.f32.mxu0 %v4952
    %v4954 = vand.u32 %v3748, 4294901760
    %4955 = vmatmul.mubr.f32.gmra.mxu0 %v4954
    %v4956 = vpop.f32.mrf.mxu0
    %v4957 = vadd.f32 %v4692, %v4956
    %v4958 = vpop.f32.mrf.mxu0
    %v4959 = vadd.f32 %v4694, %v4958
    %4960 = vdwg.mxu0
    %v4961 = vand.u32 %v3781, 4294901760
    %4962 = vmatprep.subr.mxu0 %v4961
    %v4963 = vand.u32 %v3780, 4294901760
    %4964 = vmatpush1.msra.mxu0 %v4963
    %v4965 = vand.u32 %v3779, 4294901760
    %4966 = vmatprep.subr.mxu0 %v4965
    %v4967 = vand.u32 %v3778, 4294901760
    %4968 = vmatpush1.msra.mxu0 %v4967
    %v4969 = vand.u32 %v3777, 4294901760
    %4970 = vmatprep.subr.mxu0 %v4969
    %v4971 = vand.u32 %v3776, 4294901760
    %4972 = vmatpush1.msra.mxu0 %v4971
    %v4973 = vand.u32 %v3775, 4294901760
    %4974 = vmatprep.subr.mxu0 %v4973
    %v4975 = vand.u32 %v3774, 4294901760
    %4976 = vmatpush1.msra.mxu0 %v4975
    %v4977 = vand.u32 %v3773, 4294901760
    %4978 = vmatprep.subr.mxu0 %v4977
    %v4979 = vand.u32 %v3772, 4294901760
    %4980 = vmatpush1.msra.mxu0 %v4979
    %v4981 = vand.u32 %v3771, 4294901760
    %4982 = vmatprep.subr.mxu0 %v4981
    %v4983 = vand.u32 %v3770, 4294901760
    %4984 = vmatpush1.msra.mxu0 %v4983
    %v4985 = vand.u32 %v3769, 4294901760
    %4986 = vmatprep.subr.mxu0 %v4985
    %v4987 = vand.u32 %v3768, 4294901760
    %4988 = vmatpush1.msra.mxu0 %v4987
    %v4989 = vand.u32 %v3767, 4294901760
    %4990 = vmatprep.subr.mxu0 %v4989
    %v4991 = vand.u32 %v3766, 4294901760
    %4992 = vmatpush1.msra.mxu0 %v4991
    %v4993 = vand.u32 %v3765, 4294901760
    %4994 = vmatprep.subr.mxu0 %v4993
    %v4995 = vand.u32 %v3764, 4294901760
    %4996 = vmatpush1.msra.mxu0 %v4995
    %v4997 = vand.u32 %v3763, 4294901760
    %4998 = vmatprep.subr.mxu0 %v4997
    %v4999 = vand.u32 %v3762, 4294901760
    %5000 = vmatpush1.msra.mxu0 %v4999
    %v5001 = vand.u32 %v3761, 4294901760
    %5002 = vmatprep.subr.mxu0 %v5001
    %v5003 = vand.u32 %v3760, 4294901760
    %5004 = vmatpush1.msra.mxu0 %v5003
    %v5005 = vand.u32 %v3759, 4294901760
    %5006 = vmatprep.subr.mxu0 %v5005
    %v5007 = vand.u32 %v3758, 4294901760
    %5008 = vmatpush1.msra.mxu0 %v5007
    %v5009 = vand.u32 %v3757, 4294901760
    %5010 = vmatprep.subr.mxu0 %v5009
    %v5011 = vand.u32 %v3756, 4294901760
    %5012 = vmatpush1.msra.mxu0 %v5011
    %v5013 = vand.u32 %v3755, 4294901760
    %5014 = vmatprep.subr.mxu0 %v5013
    %v5015 = vand.u32 %v3754, 4294901760
    %5016 = vmatpush1.msra.mxu0 %v5015
    %v5017 = vand.u32 %v3753, 4294901760
    %5018 = vmatprep.subr.mxu0 %v5017
    %v5019 = vand.u32 %v3752, 4294901760
    %5020 = vmatpush1.msra.mxu0 %v5019
    %v5021 = vand.u32 %v3751, 4294901760
    %5022 = vmatprep.subr.mxu0 %v5021
    %v5023 = vand.u32 %v3750, 4294901760
    %5024 = vmatpush1.msra.mxu0 %v5023
    %v5025 = vand.u32 %v3813, 4294901760
    %5026 = vmatprep.subr.mxu0 %v5025
    %v5027 = vand.u32 %v3812, 4294901760
    %5028 = vmatpush2.msra.mxu0 %v5027
    %v5029 = vand.u32 %v3811, 4294901760
    %5030 = vmatprep.subr.mxu0 %v5029
    %v5031 = vand.u32 %v3810, 4294901760
    %5032 = vmatpush2.msra.mxu0 %v5031
    %v5033 = vand.u32 %v3809, 4294901760
    %5034 = vmatprep.subr.mxu0 %v5033
    %v5035 = vand.u32 %v3808, 4294901760
    %5036 = vmatpush2.msra.mxu0 %v5035
    %v5037 = vand.u32 %v3807, 4294901760
    %5038 = vmatprep.subr.mxu0 %v5037
    %v5039 = vand.u32 %v3806, 4294901760
    %5040 = vmatpush2.msra.mxu0 %v5039
    %v5041 = vand.u32 %v3805, 4294901760
    %5042 = vmatprep.subr.mxu0 %v5041
    %v5043 = vand.u32 %v3804, 4294901760
    %5044 = vmatpush2.msra.mxu0 %v5043
    %v5045 = vand.u32 %v3803, 4294901760
    %5046 = vmatprep.subr.mxu0 %v5045
    %v5047 = vand.u32 %v3802, 4294901760
    %5048 = vmatpush2.msra.mxu0 %v5047
    %v5049 = vand.u32 %v3801, 4294901760
    %5050 = vmatprep.subr.mxu0 %v5049
    %v5051 = vand.u32 %v3800, 4294901760
    %5052 = vmatpush2.msra.mxu0 %v5051
    %v5053 = vand.u32 %v3799, 4294901760
    %5054 = vmatprep.subr.mxu0 %v5053
    %v5055 = vand.u32 %v3798, 4294901760
    %5056 = vmatpush2.msra.mxu0 %v5055
    %v5057 = vand.u32 %v3797, 4294901760
    %5058 = vmatprep.subr.mxu0 %v5057
    %v5059 = vand.u32 %v3796, 4294901760
    %5060 = vmatpush2.msra.mxu0 %v5059
    %v5061 = vand.u32 %v3795, 4294901760
    %5062 = vmatprep.subr.mxu0 %v5061
    %v5063 = vand.u32 %v3794, 4294901760
    %5064 = vmatpush2.msra.mxu0 %v5063
    %v5065 = vand.u32 %v3793, 4294901760
    %5066 = vmatprep.subr.mxu0 %v5065
    %v5067 = vand.u32 %v3792, 4294901760
    %5068 = vmatpush2.msra.mxu0 %v5067
    %v5069 = vand.u32 %v3791, 4294901760
    %5070 = vmatprep.subr.mxu0 %v5069
    %v5071 = vand.u32 %v3790, 4294901760
    %5072 = vmatpush2.msra.mxu0 %v5071
    %v5073 = vand.u32 %v3789, 4294901760
    %5074 = vmatprep.subr.mxu0 %v5073
    %v5075 = vand.u32 %v3788, 4294901760
    %5076 = vmatpush2.msra.mxu0 %v5075
    %v5077 = vand.u32 %v3787, 4294901760
    %5078 = vmatprep.subr.mxu0 %v5077
    %v5079 = vand.u32 %v3786, 4294901760
    %5080 = vmatpush2.msra.mxu0 %v5079
    %v5081 = vand.u32 %v3785, 4294901760
    %5082 = vmatprep.subr.mxu0 %v5081
    %v5083 = vand.u32 %v3784, 4294901760
    %5084 = vmatpush2.msra.mxu0 %v5083
    %v5085 = vand.u32 %v3783, 4294901760
    %5086 = vmatprep.subr.mxu0 %v5085
    %v5087 = vand.u32 %v3782, 4294901760
    %5088 = vmatpush2.msra.mxu0 %v5087
    %v5089 = vand.u32 %v3749, 4294901760
    %5090 = vmatprep.mubr.f32.mxu0 %v5089
    %v5091 = vand.u32 %v3748, 4294901760
    %5092 = vmatmul.mubr.f32.gmra.mxu0 %v5091
    %v5093 = vpop.f32.mrf.mxu0
    %v5094 = vadd.f32 %v4957, %v5093
    %v5095 = vpop.f32.mrf.mxu0
    %v5096 = vadd.f32 %v4959, %v5095
    %5097 = vdwg.mxu0
    %v5098 = vld [vmem:[%s4] sm:$0x3]
    %v5099 = vld [vmem:[%s5] sm:$0x3]
    %v5100 = vmul.f32 %v5094, 0.0009765625
    %v5101 = vmul.f32 %v5096, 0.0009765625
    %v5102 = vmul.f32 %v5100, %v5100
    %v5103 = vmul.f32 %v5101, %v5101
    %v5106 = vrot.slane %v5102, 7
    %v5107 = vrot.slane %v5103, 7
    %v5110 = vsub.f32 %v5100, %v5106
    %v5111 = vsub.f32 %v5101, %v5107
    %v5112 = vadd.f32 %v5110, 1e-05
    %v5113 = vadd.f32 %v5111, 1e-05
    %v5114 = vrsqrt.pop %v5112
    %v5115 = vrsqrt.pop %v5113
    %v5118 = vcombine.low %v5114, %v5115
    %v5120 = vunpack.c.l.s4 1966171168
    %v5121 = vunpack.c.0.s8 %v5120
    %v5122 = vlaneseq
    %v5123 = vshrl.u32 %v5122, 7
    %v5124 = vsub.s32 %v5121, %v5123
    %v5125 = vrot.slane %v5118, %v5124
    %v5126 = vcombine.high %v5125, %v5125
    %v5128 = vunpack.c.l.s4 1966171168
    %v5129 = vunpack.c.0.s8 %v5128
    %v5130 = vlaneseq
    %v5131 = vshrl.u32 %v5130, 7
    %v5132 = vsub.s32 %v5129, %v5131
    %v5133 = vrot.slane %v5126, %v5132
    %v5135 = vmul.f32 %v5098, %v5133
    %v5137 = vlaneseq
    %v5138 = vshrl.u32 %v5137, 7
    %v5139 = vsub.s32 0, %v5138
    %v5140 = vrot.slane %v5135, %v5139
    %v5141 = vlaneseq
    %v5142 = vshrl.u32 %v5141, 7
    %v5143 = vsub.s32 1, %v5142
    %v5144 = vrot.slane %v5135, %v5143
    %v5147 = vmul.f32 %v5100, %v5140
    %v5148 = vmul.f32 %v5101, %v5144
    %v5151 = vcombine.low %v5147, %v5148
    %v5153 = vunpack.c.l.s4 1966171168
    %v5154 = vunpack.c.0.s8 %v5153
    %v5155 = vlaneseq
    %v5156 = vshrl.u32 %v5155, 7
    %v5157 = vsub.s32 %v5154, %v5156
    %v5158 = vrot.slane %v5151, %v5157
    %v5160 = vunpack.c.l.s4 1966171168
    %v5161 = vunpack.c.0.s8 %v5160
    %v5162 = vlaneseq
    %v5163 = vshrl.u32 %v5162, 7
    %v5164 = vsub.s32 %v5161, %v5163
    %v5165 = vrot.slane %v5158, %v5164
    %v5167 = vsub.f32 %v5099, %v5165
    %v5168 = vmul.f32 %v3600, %v5140
    %v5169 = vmul.f32 %v3602, %v5144
    %v5170 = vmul.f32 %v3607, %v5140
    %v5171 = vmul.f32 %v3609, %v5144
    %v5172 = vmul.f32 %v3614, %v5140
    %v5173 = vmul.f32 %v3616, %v5144
    %v5174 = vmul.f32 %v3621, %v5140
    %v5175 = vmul.f32 %v3623, %v5144
    %v5177 = vlaneseq
    %v5178 = vshrl.u32 %v5177, 7
    %v5179 = vsub.s32 0, %v5178
    %v5180 = vrot.slane %v5167, %v5179
    %v5181 = vlaneseq
    %v5182 = vshrl.u32 %v5181, 7
    %v5183 = vsub.s32 1, %v5182
    %v5184 = vrot.slane %v5167, %v5183
    %v5187 = vadd.f32 %v5168, %v5180
    %v5188 = vadd.f32 %v5169, %v5184
    %v5189 = vadd.f32 %v5170, %v5180
    %v5190 = vadd.f32 %v5171, %v5184
    %v5191 = vadd.f32 %v5172, %v5180
    %v5192 = vadd.f32 %v5173, %v5184
    %v5193 = vadd.f32 %v5174, %v5180
    %v5194 = vadd.f32 %v5175, %v5184
    %vm5195 = vcmp.gt.f32.partialorder %v5187, 0.0
    %vm5196 = vcmp.gt.f32.partialorder %v5188, 0.0
    %vm5197 = vcmp.gt.f32.partialorder %v5189, 0.0
    %vm5198 = vcmp.gt.f32.partialorder %v5190, 0.0
    %vm5199 = vcmp.gt.f32.partialorder %v5191, 0.0
    %vm5200 = vcmp.gt.f32.partialorder %v5192, 0.0
    %vm5201 = vcmp.gt.f32.partialorder %v5193, 0.0
    %vm5202 = vcmp.gt.f32.partialorder %v5194, 0.0
    %v5203 = vmul.f32 %v5187, 0.2
    %v5204 = vmul.f32 %v5188, 0.2
    %v5205 = vmul.f32 %v5189, 0.2
    %v5206 = vmul.f32 %v5190, 0.2
    %v5207 = vmul.f32 %v5191, 0.2
    %v5208 = vmul.f32 %v5192, 0.2
    %v5209 = vmul.f32 %v5193, 0.2
    %v5210 = vmul.f32 %v5194, 0.2
    %v5211 = vsel %vm5195, %v5187, %v5203
    %v5212 = vsel %vm5196, %v5188, %v5204
    %v5213 = vsel %vm5197, %v5189, %v5205
    %v5214 = vsel %vm5198, %v5190, %v5206
    %v5215 = vsel %vm5199, %v5191, %v5207
    %v5216 = vsel %vm5200, %v5192, %v5208
    %v5217 = vsel %vm5201, %v5193, %v5209
    %v5218 = vsel %vm5202, %v5194, %v5210
    %5219 = vst [vmem:[#allocation10] sm:$0xff] %v5211
    %5220 = vst [vmem:[#allocation10 + $0x8] sm:$0xff] %v5212
    %5221 = vst [vmem:[#allocation10 + $0x10] sm:$0xff] %v5213
    %5222 = vst [vmem:[#allocation10 + $0x18] sm:$0xff] %v5214
    %5223 = vst [vmem:[#allocation10 + $0x20] sm:$0xff] %v5215
    %5224 = vst [vmem:[#allocation10 + $0x28] sm:$0xff] %v5216
    %5225 = vst [vmem:[#allocation10 + $0x30] sm:$0xff] %v5217
    %5226 = vst [vmem:[#allocation10 + $0x38] sm:$0xff] %v5218
    %v5227 = vcombine.high %v5133, %v5133
    %v5229 = vmul.f32 %v5098, %v5227
    %v5231 = vlaneseq
    %v5232 = vshrl.u32 %v5231, 7
    %v5233 = vsub.s32 0, %v5232
    %v5234 = vrot.slane %v5229, %v5233
    %v5235 = vlaneseq
    %v5236 = vshrl.u32 %v5235, 7
    %v5237 = vsub.s32 1, %v5236
    %v5238 = vrot.slane %v5229, %v5237
    %v5241 = vmul.f32 %v5100, %v5234
    %v5242 = vmul.f32 %v5101, %v5238
    %v5245 = vcombine.low %v5241, %v5242
    %v5247 = vunpack.c.l.s4 1966171168
    %v5248 = vunpack.c.0.s8 %v5247
    %v5249 = vlaneseq
    %v5250 = vshrl.u32 %v5249, 7
    %v5251 = vsub.s32 %v5248, %v5250
    %v5252 = vrot.slane %v5245, %v5251
    %v5254 = vunpack.c.l.s4 1966171168
    %v5255 = vunpack.c.0.s8 %v5254
    %v5256 = vlaneseq
    %v5257 = vshrl.u32 %v5256, 7
    %v5258 = vsub.s32 %v5255, %v5257
    %v5259 = vrot.slane %v5252, %v5258
    %v5260 = vcombine.high %v5259, %v5259
    %v5262 = vsub.f32 %v5099, %v5260
    %v5263 = vmul.f32 %v3628, %v5234
    %v5264 = vmul.f32 %v3630, %v5238
    %v5265 = vmul.f32 %v3635, %v5234
    %v5266 = vmul.f32 %v3637, %v5238
    %v5267 = vmul.f32 %v3642, %v5234
    %v5268 = vmul.f32 %v3644, %v5238
    %v5269 = vmul.f32 %v3649, %v5234
    %v5270 = vmul.f32 %v3651, %v5238
    %v5272 = vlaneseq
    %v5273 = vshrl.u32 %v5272, 7
    %v5274 = vsub.s32 0, %v5273
    %v5275 = vrot.slane %v5262, %v5274
    %v5276 = vlaneseq
    %v5277 = vshrl.u32 %v5276, 7
    %v5278 = vsub.s32 1, %v5277
    %v5279 = vrot.slane %v5262, %v5278
    %v5282 = vadd.f32 %v5263, %v5275
    %v5283 = vadd.f32 %v5264, %v5279
    %v5284 = vadd.f32 %v5265, %v5275
    %v5285 = vadd.f32 %v5266, %v5279
    %v5286 = vadd.f32 %v5267, %v5275
    %v5287 = vadd.f32 %v5268, %v5279
    %v5288 = vadd.f32 %v5269, %v5275
    %v5289 = vadd.f32 %v5270, %v5279
    %vm5290 = vcmp.gt.f32.partialorder %v5282, 0.0
    %vm5291 = vcmp.gt.f32.partialorder %v5283, 0.0
    %vm5292 = vcmp.gt.f32.partialorder %v5284, 0.0
    %vm5293 = vcmp.gt.f32.partialorder %v5285, 0.0
    %vm5294 = vcmp.gt.f32.partialorder %v5286, 0.0
    %vm5295 = vcmp.gt.f32.partialorder %v5287, 0.0
    %vm5296 = vcmp.gt.f32.partialorder %v5288, 0.0
    %vm5297 = vcmp.gt.f32.partialorder %v5289, 0.0
    %v5298 = vmul.f32 %v5282, 0.2
    %v5299 = vmul.f32 %v5283, 0.2
    %v5300 = vmul.f32 %v5284, 0.2
    %v5301 = vmul.f32 %v5285, 0.2
    %v5302 = vmul.f32 %v5286, 0.2
    %v5303 = vmul.f32 %v5287, 0.2
    %v5304 = vmul.f32 %v5288, 0.2
    %v5305 = vmul.f32 %v5289, 0.2
    %v5306 = vsel %vm5290, %v5282, %v5298
    %v5307 = vsel %vm5291, %v5283, %v5299
    %v5308 = vsel %vm5292, %v5284, %v5300
    %v5309 = vsel %vm5293, %v5285, %v5301
    %v5310 = vsel %vm5294, %v5286, %v5302
    %v5311 = vsel %vm5295, %v5287, %v5303
    %v5312 = vsel %vm5296, %v5288, %v5304
    %v5313 = vsel %vm5297, %v5289, %v5305
    %s5314 = scalar_lea.vmem [#allocation10], 64
    %5315 = vst [vmem:[%s5314] sm:$0xff] %v5306
    %5316 = vst [vmem:[%s5314 + $0x8] sm:$0xff] %v5307
    %5317 = vst [vmem:[%s5314 + $0x10] sm:$0xff] %v5308
    %5318 = vst [vmem:[%s5314 + $0x18] sm:$0xff] %v5309
    %5319 = vst [vmem:[%s5314 + $0x20] sm:$0xff] %v5310
    %5320 = vst [vmem:[%s5314 + $0x28] sm:$0xff] %v5311
    %5321 = vst [vmem:[%s5314 + $0x30] sm:$0xff] %v5312
    %5322 = vst [vmem:[%s5314 + $0x38] sm:$0xff] %v5313
    // Predicated region
    $region42: #{tpu_custom_call.1} parent=1 // pred_check
      _
    $region43: #{tpu_custom_call.1} parent=1 // pred_check_branch
      %5324 = sbr.rel (0) target = $region45
    $region44: #{tpu_custom_call.1} parent=1 // pred_region
      %s5326 = ssub.s32 2048, 2048
      %5327 = vsyncadd [#allocation4], %s5326
      %s5328 = sshll.u32 [#allocation10], 4
      %s5329 = int_to_ptr.vmem [resolvable:$true] %s5328
      %5334 = dma.vmem_to_hbm [thread:$0]  %s5329, 2048, %s6, [#allocation4], 256, 256, 16
    $region45: #{tpu_custom_call.1} parent=1 // pred_fallthru
      _
    // Predicated region
    $region46: #{tpu_custom_call.1} parent=1 // pred_check
      _
    $region47: #{tpu_custom_call.1} parent=1 // pred_check_branch
      %5336 = sbr.rel (0) target = $region49
    $region48: #{tpu_custom_call.1} parent=1 // pred_region
      %5337 = dma.done [#allocation4], 2048
    $region49: #{tpu_custom_call.1} parent=1 // pred_fallthru
      _
    %5338 = vsyncpa [#allocation3], 1
    %5339 = vsyncpa [#allocation6], 1
    %5340 = vsyncpa [#allocation9], 1
    %5341 = vsyncpa [#allocation4], 1

</llo_original>
